<compile_context>
chip_gen: v7x
topology: tpu7x:2x2x1
jax: 0.10.0
libtpu: 0.0.40
codegen_flags: <defaults>
</compile_context>

<pallas_src>
import jax
import jax.numpy as jnp
from jax.experimental import pallas as pl
from jax.experimental.pallas import tpu as pltpu

EPS = 1e-5


def _se_conv_bn_add_kernel(x340_ref, w1_ref, b1_ref, x337_ref, w2_ref,
                           gamma_ref, beta_ref, x331_ref, out_ref, x343_ref):
    """Grid axis 0 tiles the conv2d109 output channels (columns of w2).

    Kernel-side layouts (lane-dense on channels):
      x340_ref : [1, C_se]   bf16  resident
      w1_ref   : [C_se, C]   bf16  resident
      b1_ref   : [1, C]      f32   resident
      x337_ref : [HW, C]     bf16  resident
      w2_ref   : [C, TN]     bf16  column tile j (pipelined)
      gamma/beta: [1, TN]    f32   column tile j
      x331_ref : [HW, TN]    f32   column tile j
      out_ref  : [HW, TN]    f32   column tile j
      x343_ref : [HW, C]     bf16  VMEM scratch (SE-gated activation)
    """
    # SE gate: compute once.  Grid axis is "arbitrary" => sequential traversal
    # on one core, so the scratch written at step 0 is visible to later steps.
    @pl.when(pl.program_id(0) == 0)
    def _():
        logit = jnp.dot(x340_ref[...], w1_ref[...],
                        preferred_element_type=jnp.float32) + b1_ref[...]
        gate = jax.nn.sigmoid(logit)                              # [1, C] f32
        x343_ref[...] = (gate * x337_ref[...].astype(jnp.float32)
                         ).astype(jnp.bfloat16)                   # [HW, C]

    # conv2d109 column tile: [HW, C] @ [C, TN] on the MXU, f32 accumulation.
    y = jnp.dot(x343_ref[...], w2_ref[...],
                preferred_element_type=jnp.float32)               # [HW, TN]

    # BatchNorm2d (training): batch statistics over (N=1, H, W) per channel.
    # Column tiling is exact because the stats are per output channel.
    mean = jnp.mean(y, axis=0, keepdims=True)                     # [1, TN]
    diff = y - mean
    var = jnp.mean(diff * diff, axis=0, keepdims=True)            # biased var
    bn = diff * jax.lax.rsqrt(var + EPS) * gamma_ref[...] + beta_ref[...]

    # residual add
    out_ref[...] = x331_ref[...] + bn


def _round_up(x, m):
    return (x + m - 1) // m * m


def _pick_tile(c_pad):
    for tn in (512, 384, 256, 128):
        if c_pad % tn == 0:
            return tn
    return c_pad


def prepare_params(w1, b1, w2, gamma, beta):
    """One-time weight-layout prep: transpose w2 to [cin, cout], pad the
    output-channel axis to a multiple of 128, cast matmul operands to bf16."""
    c, c_se = w1.shape[0], w1.shape[1]
    c_pad = _round_up(c, 128)
    pad = c_pad - c
    w1_t = w1.reshape(c, c_se).T.astype(jnp.bfloat16)                # [C_se, C]
    b1_r = b1.reshape(1, c).astype(jnp.float32)                      # [1, C]
    w2_t = jnp.pad(w2.reshape(c, c).T,
                   ((0, 0), (0, pad))).astype(jnp.bfloat16)          # [C, C_pad]
    gamma_r = jnp.pad(gamma.reshape(1, c).astype(jnp.float32),
                      ((0, 0), (0, pad)), constant_values=1.0)       # [1, C_pad]
    beta_r = jnp.pad(beta.reshape(1, c).astype(jnp.float32),
                     ((0, 0), (0, pad)))                             # [1, C_pad]
    return w1_t, b1_r, w2_t, gamma_r, beta_r


@jax.jit
def se_conv_bn_add(x340, x337, x331, w1_t, b1_r, w2_t, gamma_r, beta_r):
    """Activations in PyTorch NCHW layout; weights pre-laid-out by prepare_params."""
    n, c, h, w = x337.shape
    assert n == 1
    c_se = x340.shape[1]
    hw = h * w
    c_pad = w2_t.shape[1]
    tn = _pick_tile(c_pad)
    num_tiles = c_pad // tn

    # Layout glue: lane-dense [HW, C] inside the kernel (channels on lanes).
    x340_v = x340.reshape(1, c_se).astype(jnp.bfloat16)
    x337_t = x337.reshape(c, hw).T.astype(jnp.bfloat16)               # [HW, C]
    x331_t = jnp.pad(x331.reshape(c, hw).T.astype(jnp.float32),
                     ((0, 0), (0, c_pad - c)))                        # [HW, C_pad]

    resident = lambda j: (0, 0)
    col = lambda j: (0, j)

    out = pl.pallas_call(
        _se_conv_bn_add_kernel,
        out_shape=jax.ShapeDtypeStruct((hw, c_pad), jnp.float32),
        grid_spec=pltpu.PrefetchScalarGridSpec(
            num_scalar_prefetch=0,
            grid=(num_tiles,),
            in_specs=[
                pl.BlockSpec((1, c_se), resident),    # x340 (pooled vector)
                pl.BlockSpec((c_se, c), resident),    # w1
                pl.BlockSpec((1, c), resident),       # b1
                pl.BlockSpec((hw, c), resident),      # x337
                pl.BlockSpec((c, tn), col),           # w2 column tile (pipelined)
                pl.BlockSpec((1, tn), col),           # gamma
                pl.BlockSpec((1, tn), col),           # beta
                pl.BlockSpec((hw, tn), col),          # x331 residual
            ],
            out_specs=pl.BlockSpec((hw, tn), col),
            scratch_shapes=[pltpu.VMEM((hw, c), jnp.bfloat16)],       # x343
        ),
        compiler_params=pltpu.CompilerParams(
            # "arbitrary": sequential traversal so the step-0 SE-gate scratch
            # is valid for all later column tiles (required for correctness).
            dimension_semantics=("arbitrary",),
            vmem_limit_bytes=32 * 1024 * 1024,
        ),
    )(x340_v, w1_t, b1_r, x337_t, w2_t, gamma_r, beta_r, x331_t)

    # drop channel padding, back to NCHW
    return out[:, :c].T.reshape(1, c, h, w)


def reference(x340, x337, x331, w1, b1, w2, gamma, beta):
    """Pure-JAX f32 reference of the PyTorch forward (training-mode BN)."""
    c_out = w1.shape[0]
    c_in = w1.shape[1]
    x341 = (w1.reshape(c_out, c_in) @ x340.reshape(c_in, 1)
            ).reshape(1, c_out, 1, 1) + b1.reshape(1, c_out, 1, 1)
    x342 = jax.nn.sigmoid(x341)
    x343 = x342 * x337
    x344 = jnp.einsum('oc,nchw->nohw', w2.reshape(c_out, c_out), x343)
    mean = jnp.mean(x344, axis=(0, 2, 3), keepdims=True)
    var = jnp.mean((x344 - mean) ** 2, axis=(0, 2, 3), keepdims=True)
    x345 = (x344 - mean) / jnp.sqrt(var + EPS)
    x345 = x345 * gamma.reshape(1, c_out, 1, 1) + beta.reshape(1, c_out, 1, 1)
    return x331 + x345


if __name__ == "__main__":
    C_SE, C, H, W = 144, 1512, 7, 7   # shapes implied by the module

    key = jax.random.PRNGKey(0)
    k = jax.random.split(key, 8)

    # deterministic synthetic inputs
    x331 = jax.random.normal(k[0], (1, C, H, W), jnp.float32)
    x337 = jax.random.normal(k[1], (1, C, H, W), jnp.float32)
    x340 = jax.random.normal(k[2], (1, C_SE, 1, 1), jnp.float32)

    # deterministic synthetic parameters
    w1 = jax.random.normal(k[3], (C, C_SE, 1, 1), jnp.float32) * 0.05
    b1 = jax.random.normal(k[4], (C,), jnp.float32) * 0.05
    w2 = jax.random.normal(k[5], (C, C, 1, 1), jnp.float32) * 0.02
    gamma = 1.0 + 0.1 * jax.random.normal(k[6], (C,), jnp.float32)
    beta = 0.1 * jax.random.normal(k[7], (C,), jnp.float32)

    params = prepare_params(w1, b1, w2, gamma, beta)   # one-time weight prep
    out = se_conv_bn_add(x340, x337, x331, *params)
    out = jax.block_until_ready(out)

    ref = reference(x340, x337, x331, w1, b1, w2, gamma, beta)
    assert out.shape == (1, C, H, W)
    max_err = float(jnp.max(jnp.abs(out - ref)))
    # bf16 MXU operands (K=1512) followed by BN normalization -> ~1e-2-level
    # absolute error vs the f32 reference is expected.
    assert jnp.allclose(out, ref, atol=3e-2, rtol=3e-2), max_err

    print("KERNEL_OK")
</pallas_src>

<mosaic_0001>
module attributes {stable_mosaic.version = 11 : i64} {
  func.func @_se_conv_bn_add_kernel(%arg0: i32, %arg1: memref<1x144xbf16, #tpu.memory_space<vmem>>, %arg2: memref<144x1512xbf16, #tpu.memory_space<vmem>>, %arg3: memref<1x1512xf32, #tpu.memory_space<vmem>>, %arg4: memref<49x1512xbf16, #tpu.memory_space<vmem>>, %arg5: memref<1512x512xbf16, #tpu.memory_space<vmem>>, %arg6: memref<1x512xf32, #tpu.memory_space<vmem>>, %arg7: memref<1x512xf32, #tpu.memory_space<vmem>>, %arg8: memref<49x512xf32, #tpu.memory_space<vmem>>, %arg9: memref<49x512xf32, #tpu.memory_space<vmem>>, %arg10: memref<49x1512xbf16, #tpu.memory_space<vmem>>) attributes {dimension_semantics = [#tpu.dimension_semantics<arbitrary>], iteration_bounds = array<i64: 3>, scalar_prefetch = 0 : i64, scratch_operands = 1 : i64, tpu.core_type = #tpu.core_type<tc>, window_params = [{pipeline_mode = #tpu.pipeline_mode<synchronous>, transform_indices = @transform_0, window_bounds = array<i64: 1, 144>}, {pipeline_mode = #tpu.pipeline_mode<synchronous>, transform_indices = @transform_1, window_bounds = array<i64: 144, 1512>}, {pipeline_mode = #tpu.pipeline_mode<synchronous>, transform_indices = @transform_2, window_bounds = array<i64: 1, 1512>}, {pipeline_mode = #tpu.pipeline_mode<synchronous>, transform_indices = @transform_3, window_bounds = array<i64: 49, 1512>}, {transform_indices = @transform_4, window_bounds = array<i64: 1512, 512>}, {transform_indices = @transform_5, window_bounds = array<i64: 1, 512>}, {transform_indices = @transform_6, window_bounds = array<i64: 1, 512>}, {transform_indices = @transform_7, window_bounds = array<i64: 49, 512>}, {transform_indices = @transform_8, window_bounds = array<i64: 49, 512>}]} {
    %c0_i32 = arith.constant 0 : i32
    %0 = arith.cmpi eq, %arg0, %c0_i32 : i32
    %1 = arith.extui %0 : i1 to i32
    %c0_i32_0 = arith.constant 0 : i32
    %2 = arith.cmpi ne, %1, %c0_i32_0 : i32
    scf.if %2 {
      %c0_17 = arith.constant 0 : index
      %c0_18 = arith.constant 0 : index
      %31 = vector.load %arg1[%c0_17, %c0_18] : memref<1x144xbf16, #tpu.memory_space<vmem>>, vector<1x144xbf16>
      %c0_19 = arith.constant 0 : index
      %c0_20 = arith.constant 0 : index
      %32 = vector.load %arg2[%c0_19, %c0_20] : memref<144x1512xbf16, #tpu.memory_space<vmem>>, vector<144x1512xbf16>
      %cst_21 = arith.constant dense<0.000000e+00> : vector<1x1512xf32>
      %33 = tpu.matmul %31, %32, %cst_21 {dimension_numbers = #tpu.dot_dimension_numbers<[1], [0], [0], [1], [0, 0, 1, 1], [], []>} : vector<1x144xbf16>, vector<144x1512xbf16>, vector<1x1512xf32> -> vector<1x1512xf32>
      %c0_22 = arith.constant 0 : index
      %c0_23 = arith.constant 0 : index
      %34 = vector.load %arg3[%c0_22, %c0_23] : memref<1x1512xf32, #tpu.memory_space<vmem>>, vector<1x1512xf32>
      %35 = arith.addf %33, %34 : vector<1x1512xf32>
      %36 = arith.negf %35 : vector<1x1512xf32>
      %37 = math.exp %36 : vector<1x1512xf32>
      %cst_24 = arith.constant 1.000000e+00 : f32
      %38 = vector.broadcast %cst_24 : f32 to vector<1x1512xf32>
      %39 = arith.addf %38, %37 : vector<1x1512xf32>
      %40 = arith.divf %38, %39 : vector<1x1512xf32>
      %c0_25 = arith.constant 0 : index
      %c0_26 = arith.constant 0 : index
      %41 = vector.load %arg4[%c0_25, %c0_26] : memref<49x1512xbf16, #tpu.memory_space<vmem>>, vector<49x1512xbf16>
      %42 = arith.extf %41 : vector<49x1512xbf16> to vector<49x1512xf32>
      %43 = vector.broadcast %40 : vector<1x1512xf32> to vector<49x1512xf32>
      %44 = arith.mulf %43, %42 : vector<49x1512xf32>
      %45 = arith.truncf %44 : vector<49x1512xf32> to vector<49x1512xbf16>
      %c0_27 = arith.constant 0 : index
      %c0_28 = arith.constant 0 : index
      %46 = vector.load %arg10[%c0_27, %c0_28] : memref<49x1512xbf16, #tpu.memory_space<vmem>>, vector<49x1512xbf16>
      tpu.vector_store %arg10[%c0_27, %c0_28], %45 {strides = array<i32>} : memref<49x1512xbf16, #tpu.memory_space<vmem>>, vector<49x1512xbf16>,
    } else {
    }
    %c0 = arith.constant 0 : index
    %c0_1 = arith.constant 0 : index
    %3 = vector.load %arg10[%c0, %c0_1] : memref<49x1512xbf16, #tpu.memory_space<vmem>>, vector<49x1512xbf16>
    %c0_2 = arith.constant 0 : index
    %c0_3 = arith.constant 0 : index
    %4 = vector.load %arg5[%c0_2, %c0_3] : memref<1512x512xbf16, #tpu.memory_space<vmem>>, vector<1512x512xbf16>
    %cst = arith.constant dense<0.000000e+00> : vector<49x512xf32>
    %5 = tpu.matmul %3, %4, %cst {dimension_numbers = #tpu.dot_dimension_numbers<[1], [0], [0], [1], [0, 0, 1, 1], [], []>} : vector<49x1512xbf16>, vector<1512x512xbf16>, vector<49x512xf32> -> vector<49x512xf32>
    %cst_4 = arith.constant dense<0.000000e+00> : vector<512xf32>
    %6 = vector.multi_reduction <add>, %5, %cst_4 [0] : vector<49x512xf32> to vector<512xf32>
    %7 = vector.shape_cast %6 : vector<512xf32> to vector<1x512xf32>
    %cst_5 = arith.constant 4.900000e+01 : f32
    %8 = vector.broadcast %cst_5 : f32 to vector<1x512xf32>
    %9 = arith.divf %7, %8 : vector<1x512xf32>
    %10 = vector.broadcast %9 : vector<1x512xf32> to vector<49x512xf32>
    %11 = arith.subf %5, %10 : vector<49x512xf32>
    %12 = arith.mulf %11, %11 : vector<49x512xf32>
    %cst_6 = arith.constant dense<0.000000e+00> : vector<512xf32>
    %13 = vector.multi_reduction <add>, %12, %cst_6 [0] : vector<49x512xf32> to vector<512xf32>
    %14 = vector.shape_cast %13 : vector<512xf32> to vector<1x512xf32>
    %cst_7 = arith.constant 4.900000e+01 : f32
    %15 = vector.broadcast %cst_7 : f32 to vector<1x512xf32>
    %16 = arith.divf %14, %15 : vector<1x512xf32>
    %cst_8 = arith.constant 9.99999974E-6 : f32
    %17 = vector.broadcast %cst_8 : f32 to vector<1x512xf32>
    %18 = arith.addf %16, %17 : vector<1x512xf32>
    %19 = math.rsqrt %18 : vector<1x512xf32>
    %20 = vector.broadcast %19 : vector<1x512xf32> to vector<49x512xf32>
    %21 = arith.mulf %11, %20 : vector<49x512xf32>
    %c0_9 = arith.constant 0 : index
    %c0_10 = arith.constant 0 : index
    %22 = vector.load %arg6[%c0_9, %c0_10] : memref<1x512xf32, #tpu.memory_space<vmem>>, vector<1x512xf32>
    %23 = vector.broadcast %22 : vector<1x512xf32> to vector<49x512xf32>
    %24 = arith.mulf %21, %23 : vector<49x512xf32>
    %c0_11 = arith.constant 0 : index
    %c0_12 = arith.constant 0 : index
    %25 = vector.load %arg7[%c0_11, %c0_12] : memref<1x512xf32, #tpu.memory_space<vmem>>, vector<1x512xf32>
    %26 = vector.broadcast %25 : vector<1x512xf32> to vector<49x512xf32>
    %27 = arith.addf %24, %26 : vector<49x512xf32>
    %c0_13 = arith.constant 0 : index
    %c0_14 = arith.constant 0 : index
    %28 = vector.load %arg8[%c0_13, %c0_14] : memref<49x512xf32, #tpu.memory_space<vmem>>, vector<49x512xf32>
    %29 = arith.addf %28, %27 : vector<49x512xf32>
    %c0_15 = arith.constant 0 : index
    %c0_16 = arith.constant 0 : index
    %30 = vector.load %arg9[%c0_15, %c0_16] : memref<49x512xf32, #tpu.memory_space<vmem>>, vector<49x512xf32>
    tpu.vector_store %arg9[%c0_15, %c0_16], %29 {strides = array<i32>} : memref<49x512xf32, #tpu.memory_space<vmem>>, vector<49x512xf32>,
    return
  }
  func.func @transform_0(%arg0: i32) -> (i32, i32) {
    %c0_i32 = arith.constant 0 : i32
    %c0_i32_0 = arith.constant 0 : i32
    %c0_i32_1 = arith.constant 0 : i32
    return %c0_i32, %c0_i32_0 : i32, i32
  }
  func.func @transform_1(%arg0: i32) -> (i32, i32) {
    %c0_i32 = arith.constant 0 : i32
    %c0_i32_0 = arith.constant 0 : i32
    %c0_i32_1 = arith.constant 0 : i32
    return %c0_i32, %c0_i32_0 : i32, i32
  }
  func.func @transform_2(%arg0: i32) -> (i32, i32) {
    %c0_i32 = arith.constant 0 : i32
    %c0_i32_0 = arith.constant 0 : i32
    %c0_i32_1 = arith.constant 0 : i32
    return %c0_i32, %c0_i32_0 : i32, i32
  }
  func.func @transform_3(%arg0: i32) -> (i32, i32) {
    %c0_i32 = arith.constant 0 : i32
    %c0_i32_0 = arith.constant 0 : i32
    %c0_i32_1 = arith.constant 0 : i32
    return %c0_i32, %c0_i32_0 : i32, i32
  }
  func.func @transform_4(%arg0: i32) -> (i32, i32) {
    %c0_i32 = arith.constant 0 : i32
    %c0_i32_0 = arith.constant 0 : i32
    return %c0_i32, %arg0 : i32, i32
  }
  func.func @transform_5(%arg0: i32) -> (i32, i32) {
    %c0_i32 = arith.constant 0 : i32
    %c0_i32_0 = arith.constant 0 : i32
    return %c0_i32, %arg0 : i32, i32
  }
  func.func @transform_6(%arg0: i32) -> (i32, i32) {
    %c0_i32 = arith.constant 0 : i32
    %c0_i32_0 = arith.constant 0 : i32
    return %c0_i32, %arg0 : i32, i32
  }
  func.func @transform_7(%arg0: i32) -> (i32, i32) {
    %c0_i32 = arith.constant 0 : i32
    %c0_i32_0 = arith.constant 0 : i32
    return %c0_i32, %arg0 : i32, i32
  }
  func.func @transform_8(%arg0: i32) -> (i32, i32) {
    %c0_i32 = arith.constant 0 : i32
    %c0_i32_0 = arith.constant 0 : i32
    return %c0_i32, %arg0 : i32, i32
  }
}

</mosaic_0001>

<llo_original>
// kernel: se_conv_bn_add.1
$region0: #{se_conv_bn_add.1}
  #allocation0 [shape = 'u32[]', space=smem, size = 0x4, offset = 0x4, fixed_abs, tag = 'smem constant byte address 0x4 - core index']
  #allocation1 [shape = 'u32[144,128]{1,0:T(1,128)}', space=vmem, size = 0x12000, scoped, tag = 'internal scratch']
  #allocation2 [shape = 'bf16[49,1512]{1,0:T(8,128)(2,1)}', space=vmem, size = 0x2a000, scoped, tag = 'scratch operand']
  %s0 = inlined_call_operand.vmem [shape: bf16[1,144], index: 0, kind: input, shape index: {}]
  %s1 = inlined_call_operand.hbm [shape: bf16[144,1512], index: 1, kind: input, shape index: {}]
  %s2 = inlined_call_operand.hbm [shape: f32[1,1512], index: 2, kind: input, shape index: {}]
  %s3 = inlined_call_operand.vmem [shape: bf16[49,1512], index: 3, kind: input, shape index: {}]
  %s4 = inlined_call_operand.hbm [shape: bf16[1512,1536], index: 4, kind: input, shape index: {}]
  %s5 = inlined_call_operand.hbm [shape: f32[1,1536], index: 5, kind: input, shape index: {}]
  %s6 = inlined_call_operand.hbm [shape: f32[1,1536], index: 6, kind: input, shape index: {}]
  %s7 = inlined_call_operand.vmem [shape: f32[49,1536], index: 7, kind: input, shape index: {}]
  %s8 = inlined_call_operand.vmem [shape: f32[49,1536], index: 8, kind: output, shape index: {}]
  %s9 = sld [smem:[#allocation0]]
  $region131: #{se_conv_bn_add.1} parent=0
    _
  %s11 = ssub.s32 1, %s9
  %s12 = scalar_select 0, %s11, %s9
  $region1: #{se_conv_bn_add.1} parent=0
    #allocation3 [shape = 'u8[442368]{0}', space=vmem, size = 0x6c000, scoped, tag = 'input window, operand 1, single buffered']
    #allocation4 [shape = 's32[2]{0}', space=sflag, size = 0x8, scoped, tag = 'scoped memory for se_conv_bn_add.1']
    #allocation5 [shape = 'u8[6144]{0}', space=vmem, size = 0x1800, scoped, tag = 'input window, operand 2, single buffered']
    #allocation6 [shape = 's32[1]{0}', space=sflag, size = 0x4, scoped, tag = 'scoped memory for se_conv_bn_add.1']
    #allocation7 [shape = 'u8[3096576]{0}', space=vmem, size = 0x2f4000, scoped, tag = 'input window, operand 4']
    #allocation8 [shape = 'u8[4096]{0}', space=vmem, size = 0x1000, scoped, tag = 'input window, operand 5']
    #allocation9 [shape = 'u8[4096]{0}', space=vmem, size = 0x1000, scoped, tag = 'input window, operand 6']
    #allocation10 [shape = 'u8[229376]{0}', space=vmem, size = 0x38000, scoped, tag = 'input window, operand 7']
    #allocation11 [shape = 'u8[229376]{0}', space=vmem, size = 0x38000, scoped, tag = 'output window, operand 0']
    %13 = vsyncpa [#allocation4], 0
    %14 = vsyncpa [#allocation6], 0
    loop: start=0, step=1, limit=5
    $region2: #{se_conv_bn_add.1} parent=1 // loop_pre_header
      _
    $region3: #{se_conv_bn_add.1} parent=1 // loop_header
      %s16 = sphi 0, %s20
      %p17 = scmp.ge.s32.totalorder %s16, 5
      %s24 = sphi 0, %s24
      %s26 = sphi 0, %s24
      %s27 = sphi 0, %s26
      %s41 = sphi 0, %s27
      %s45 = sphi 0, %s45
      %s47 = sphi 0, %s45
      %s48 = sphi 0, %s47
      %s62 = sphi 0, %s48
      %s66 = sphi 0, %s66
      %s68 = sphi 0, %s66
      %s69 = sphi 0, %s68
      %s83 = sphi 0, %s69
      %s87 = sphi 0, %s87
      %s89 = sphi 0, %s87
      %s90 = sphi 0, %s89
      %s104 = sphi 0, %s90
      %s110 = sphi 0, %s112
      %s113 = sphi 0, %s110
      %s114 = sphi 0, %s113
      %s130 = sphi 0, %s114
      %s136 = sphi 0, %s138
      %s139 = sphi 0, %s136
      %s140 = sphi 0, %s139
      %s156 = sphi 0, %s140
      %s162 = sphi 0, %s164
      %s165 = sphi 0, %s162
      %s166 = sphi 0, %s165
      %s182 = sphi 0, %s166
      %s188 = sphi 0, %s190
      %s191 = sphi 0, %s188
      %s192 = sphi 0, %s191
      %s208 = sphi 0, %s192
      %s214 = sphi 0, %s216
      %s217 = sphi 0, %s214
      %s218 = sphi 0, %s217
      %s234 = sphi 0, %s218
    $region4: #{se_conv_bn_add.1} parent=1 // loop_header_branch
      %19 = sbr.rel (%p17) target = $region8
    $region5: #{se_conv_bn_add.1} parent=1 // loop_body
      %s21 = ssub.s32 %s16, 1
      %s22 = ssub.s32 %s16, 2
      %s23 = sadd.s32 %s16, 1
      %s25 = sadd.s32 %s24, 1
      %p28 = scmp.eq.s32.totalorder %s16, 2
      %p29 = scmp.ne.s32.totalorder %s24, %s26
      %p30 = scmp.eq.s32.totalorder %s16, 0
      %p31 = por %p29, %p30
      %p32 = scmp.ne.s32.totalorder %s24, %s26
      %p33 = scmp.eq.s32.totalorder %s21, 2
      %p34 = por %p32, %p33
      %p35 = scmp.ne.s32.totalorder %s26, %s27
      %p36 = scmp.eq.s32.totalorder %s21, 0
      %p37 = por %p35, %p36
      %p38 = scmp.ne.s32.totalorder %s26, %s27
      %p39 = scmp.eq.s32.totalorder %s22, 2
      %p40 = por %p38, %p39
      %p42 = scmp.ne.s32.totalorder %s27, %s41
      %p43 = scmp.eq.s32.totalorder %s22, 0
      %p44 = por %p42, %p43
      %s46 = sadd.s32 %s45, 1
      %p49 = scmp.eq.s32.totalorder %s16, 2
      %p50 = scmp.ne.s32.totalorder %s45, %s47
      %p51 = scmp.eq.s32.totalorder %s16, 0
      %p52 = por %p50, %p51
      %p53 = scmp.ne.s32.totalorder %s45, %s47
      %p54 = scmp.eq.s32.totalorder %s21, 2
      %p55 = por %p53, %p54
      %p56 = scmp.ne.s32.totalorder %s47, %s48
      %p57 = scmp.eq.s32.totalorder %s21, 0
      %p58 = por %p56, %p57
      %p59 = scmp.ne.s32.totalorder %s47, %s48
      %p60 = scmp.eq.s32.totalorder %s22, 2
      %p61 = por %p59, %p60
      %p63 = scmp.ne.s32.totalorder %s48, %s62
      %p64 = scmp.eq.s32.totalorder %s22, 0
      %p65 = por %p63, %p64
      %s67 = sadd.s32 %s66, 1
      %p70 = scmp.eq.s32.totalorder %s16, 2
      %p71 = scmp.ne.s32.totalorder %s66, %s68
      %p72 = scmp.eq.s32.totalorder %s16, 0
      %p73 = por %p71, %p72
      %p74 = scmp.ne.s32.totalorder %s66, %s68
      %p75 = scmp.eq.s32.totalorder %s21, 2
      %p76 = por %p74, %p75
      %p77 = scmp.ne.s32.totalorder %s68, %s69
      %p78 = scmp.eq.s32.totalorder %s21, 0
      %p79 = por %p77, %p78
      %p80 = scmp.ne.s32.totalorder %s68, %s69
      %p81 = scmp.eq.s32.totalorder %s22, 2
      %p82 = por %p80, %p81
      %p84 = scmp.ne.s32.totalorder %s69, %s83
      %p85 = scmp.eq.s32.totalorder %s22, 0
      %p86 = por %p84, %p85
      %s88 = sadd.s32 %s87, 1
      %p91 = scmp.eq.s32.totalorder %s16, 2
      %p92 = scmp.ne.s32.totalorder %s87, %s89
      %p93 = scmp.eq.s32.totalorder %s16, 0
      %p94 = por %p92, %p93
      %p95 = scmp.ne.s32.totalorder %s87, %s89
      %p96 = scmp.eq.s32.totalorder %s21, 2
      %p97 = por %p95, %p96
      %p98 = scmp.ne.s32.totalorder %s89, %s90
      %p99 = scmp.eq.s32.totalorder %s21, 0
      %p100 = por %p98, %p99
      %p101 = scmp.ne.s32.totalorder %s89, %s90
      %p102 = scmp.eq.s32.totalorder %s22, 2
      %p103 = por %p101, %p102
      %p105 = scmp.ne.s32.totalorder %s90, %s104
      %p106 = scmp.eq.s32.totalorder %s22, 0
      %p107 = por %p105, %p106
      %s108 = ssub.s32 %s16, %s23
      %p109 = scmp.eq.s32.totalorder %s108, 0
      %s111 = sadd.s32 %s110, 1
      %s112 = scalar_select %p109, %s110, %s111
      %p115 = pneg %p109
      %p116 = scmp.eq.s32.totalorder %s16, 2
      %p117 = por %p115, %p116
      %p118 = scmp.ne.s32.totalorder %s110, %s113
      %p119 = scmp.eq.s32.totalorder %s16, 0
      %p120 = por %p118, %p119
      %p121 = scmp.ne.s32.totalorder %s110, %s113
      %p122 = scmp.eq.s32.totalorder %s21, 2
      %p123 = por %p121, %p122
      %p124 = scmp.ne.s32.totalorder %s113, %s114
      %p125 = scmp.eq.s32.totalorder %s21, 0
      %p126 = por %p124, %p125
      %p127 = scmp.ne.s32.totalorder %s113, %s114
      %p128 = scmp.eq.s32.totalorder %s22, 2
      %p129 = por %p127, %p128
      %p131 = scmp.ne.s32.totalorder %s114, %s130
      %p132 = scmp.eq.s32.totalorder %s22, 0
      %p133 = por %p131, %p132
      %s134 = ssub.s32 %s16, %s23
      %p135 = scmp.eq.s32.totalorder %s134, 0
      %s137 = sadd.s32 %s136, 1
      %s138 = scalar_select %p135, %s136, %s137
      %p141 = pneg %p135
      %p142 = scmp.eq.s32.totalorder %s16, 2
      %p143 = por %p141, %p142
      %p144 = scmp.ne.s32.totalorder %s136, %s139
      %p145 = scmp.eq.s32.totalorder %s16, 0
      %p146 = por %p144, %p145
      %p147 = scmp.ne.s32.totalorder %s136, %s139
      %p148 = scmp.eq.s32.totalorder %s21, 2
      %p149 = por %p147, %p148
      %p150 = scmp.ne.s32.totalorder %s139, %s140
      %p151 = scmp.eq.s32.totalorder %s21, 0
      %p152 = por %p150, %p151
      %p153 = scmp.ne.s32.totalorder %s139, %s140
      %p154 = scmp.eq.s32.totalorder %s22, 2
      %p155 = por %p153, %p154
      %p157 = scmp.ne.s32.totalorder %s140, %s156
      %p158 = scmp.eq.s32.totalorder %s22, 0
      %p159 = por %p157, %p158
      %s160 = ssub.s32 %s16, %s23
      %p161 = scmp.eq.s32.totalorder %s160, 0
      %s163 = sadd.s32 %s162, 1
      %s164 = scalar_select %p161, %s162, %s163
      %p167 = pneg %p161
      %p168 = scmp.eq.s32.totalorder %s16, 2
      %p169 = por %p167, %p168
      %p170 = scmp.ne.s32.totalorder %s162, %s165
      %p171 = scmp.eq.s32.totalorder %s16, 0
      %p172 = por %p170, %p171
      %p173 = scmp.ne.s32.totalorder %s162, %s165
      %p174 = scmp.eq.s32.totalorder %s21, 2
      %p175 = por %p173, %p174
      %p176 = scmp.ne.s32.totalorder %s165, %s166
      %p177 = scmp.eq.s32.totalorder %s21, 0
      %p178 = por %p176, %p177
      %p179 = scmp.ne.s32.totalorder %s165, %s166
      %p180 = scmp.eq.s32.totalorder %s22, 2
      %p181 = por %p179, %p180
      %p183 = scmp.ne.s32.totalorder %s166, %s182
      %p184 = scmp.eq.s32.totalorder %s22, 0
      %p185 = por %p183, %p184
      %s186 = ssub.s32 %s16, %s23
      %p187 = scmp.eq.s32.totalorder %s186, 0
      %s189 = sadd.s32 %s188, 1
      %s190 = scalar_select %p187, %s188, %s189
      %p193 = pneg %p187
      %p194 = scmp.eq.s32.totalorder %s16, 2
      %p195 = por %p193, %p194
      %p196 = scmp.ne.s32.totalorder %s188, %s191
      %p197 = scmp.eq.s32.totalorder %s16, 0
      %p198 = por %p196, %p197
      %p199 = scmp.ne.s32.totalorder %s188, %s191
      %p200 = scmp.eq.s32.totalorder %s21, 2
      %p201 = por %p199, %p200
      %p202 = scmp.ne.s32.totalorder %s191, %s192
      %p203 = scmp.eq.s32.totalorder %s21, 0
      %p204 = por %p202, %p203
      %p205 = scmp.ne.s32.totalorder %s191, %s192
      %p206 = scmp.eq.s32.totalorder %s22, 2
      %p207 = por %p205, %p206
      %p209 = scmp.ne.s32.totalorder %s192, %s208
      %p210 = scmp.eq.s32.totalorder %s22, 0
      %p211 = por %p209, %p210
      %s212 = ssub.s32 %s16, %s23
      %p213 = scmp.eq.s32.totalorder %s212, 0
      %s215 = sadd.s32 %s214, 1
      %s216 = scalar_select %p213, %s214, %s215
      %p219 = pneg %p213
      %p220 = scmp.eq.s32.totalorder %s16, 2
      %p221 = por %p219, %p220
      %p222 = scmp.ne.s32.totalorder %s214, %s217
      %p223 = scmp.eq.s32.totalorder %s16, 0
      %p224 = por %p222, %p223
      %p225 = scmp.ne.s32.totalorder %s214, %s217
      %p226 = scmp.eq.s32.totalorder %s21, 2
      %p227 = por %p225, %p226
      %p228 = scmp.ne.s32.totalorder %s217, %s218
      %p229 = scmp.eq.s32.totalorder %s21, 0
      %p230 = por %p228, %p229
      %p231 = scmp.ne.s32.totalorder %s217, %s218
      %p232 = scmp.eq.s32.totalorder %s22, 2
      %p233 = por %p231, %p232
      %p235 = scmp.ne.s32.totalorder %s218, %s234
      %p236 = scmp.eq.s32.totalorder %s22, 0
      %p237 = por %p235, %p236
      %p238 = scmp.le.s32.totalorder 1, %s16
      %p239 = scmp.lt.s32.totalorder %s16, 4
      %p240 = pnand %p238, %p239
      %p241 = pneg %p240
      // Predicated region
      $region9: #{se_conv_bn_add.1} parent=5 // pred_check
        _
      $region10: #{se_conv_bn_add.1} parent=5 // pred_check_branch
        %243 = sbr.rel (%p240) target = $region12
      $region11: #{se_conv_bn_add.1} parent=5 // pred_region
        %s244 = ssub.s32 %s16, 1
        // Predicated region
        $region13: #{se_conv_bn_add.1} parent=11 // pred_check
          %p245 = pneg %p37
        $region14: #{se_conv_bn_add.1} parent=11 // pred_check_branch
          %247 = sbr.rel (%p245) target = $region16
        $region15: #{se_conv_bn_add.1} parent=11 // pred_region
          _
        $region16: #{se_conv_bn_add.1} parent=11 // pred_fallthru
          _
        // Predicated region
        $region17: #{se_conv_bn_add.1} parent=11 // pred_check
          %p248 = pneg %p58
        $region18: #{se_conv_bn_add.1} parent=11 // pred_check_branch
          %250 = sbr.rel (%p248) target = $region20
        $region19: #{se_conv_bn_add.1} parent=11 // pred_region
          %s252 = ssub.s32 13824, 13824
          %253 = vsyncadd [#allocation4], %s252
          %s254 = sshll.u32 [#allocation3], 4
          %s255 = int_to_ptr.vmem [resolvable:$true] %s254
          %260 = dma.hbm_to_vmem [thread:$0]  %s1, 13824, %s255, [#allocation4], 768, 768, 48
        $region20: #{se_conv_bn_add.1} parent=11 // pred_fallthru
          _
        // Predicated region
        $region21: #{se_conv_bn_add.1} parent=11 // pred_check
          %p261 = pneg %p79
        $region22: #{se_conv_bn_add.1} parent=11 // pred_check_branch
          %263 = sbr.rel (%p261) target = $region24
        $region23: #{se_conv_bn_add.1} parent=11 // pred_region
          %s265 = ssub.s32 192, 192
          %266 = vsyncadd [#allocation6], %s265
          %s268 = sshll.u32 [#allocation5], 4
          %s269 = int_to_ptr.vmem [resolvable:$true] %s268
          %271 = dma.hbm_to_vmem [thread:$0]  %s2, 192, %s269, [#allocation6]
        $region24: #{se_conv_bn_add.1} parent=11 // pred_fallthru
          _
        // Predicated region
        $region25: #{se_conv_bn_add.1} parent=11 // pred_check
          %p272 = pneg %p100
        $region26: #{se_conv_bn_add.1} parent=11 // pred_check_branch
          %274 = sbr.rel (%p272) target = $region28
        $region27: #{se_conv_bn_add.1} parent=11 // pred_region
          _
        $region28: #{se_conv_bn_add.1} parent=11 // pred_fallthru
          _
      $region12: #{se_conv_bn_add.1} parent=5 // pred_fallthru
        _
      %p275 = scmp.lt.s32.totalorder %s16, 3
      // Predicated region
      $region29: #{se_conv_bn_add.1} parent=5 // pred_check
        %p276 = pneg %p275
      $region30: #{se_conv_bn_add.1} parent=5 // pred_check_branch
        %278 = sbr.rel (%p276) target = $region32
      $region31: #{se_conv_bn_add.1} parent=5 // pred_region
        // Predicated region
        $region33: #{se_conv_bn_add.1} parent=31 // pred_check
          %p279 = pneg %p120
        $region34: #{se_conv_bn_add.1} parent=31 // pred_check_branch
          %281 = sbr.rel (%p279) target = $region36
        $region35: #{se_conv_bn_add.1} parent=31 // pred_region
          %s282 = sand.u32 %s16, 1
          %s283 = scalar_lea.sflag [#allocation4], %s282
          %s284 = sand.u32 %s110, 1
          %s285 = smul.addr %s284, 3024
          %s286 = scalar_lea.vmem [#allocation7], %s285
          %s287 = smul.u32 4, %s16
          %s289 = ssub.s32 48384, 48384
          %290 = vsyncadd %s283, %s289
          %s291 = smul.addr %s287, 64
          %s292 = scalar_lea.hbm %s4, %s291
          %s293 = sshll.u32 %s286, 4
          %s294 = int_to_ptr.vmem [resolvable:$true] %s293
          %299 = dma.hbm_to_vmem [thread:$0]  %s292, 48384, %s294, %s283, 768, 256, 16
        $region36: #{se_conv_bn_add.1} parent=31 // pred_fallthru
          _
        // Predicated region
        $region37: #{se_conv_bn_add.1} parent=31 // pred_check
          %p300 = pneg %p146
        $region38: #{se_conv_bn_add.1} parent=31 // pred_check_branch
          %302 = sbr.rel (%p300) target = $region40
        $region39: #{se_conv_bn_add.1} parent=31 // pred_region
          %s303 = sand.u32 %s16, 1
          %s304 = scalar_lea.sflag [#allocation4], %s303
          %s305 = sand.u32 %s136, 1
          %s306 = smul.addr %s305, 4
          %s307 = scalar_lea.vmem [#allocation8], %s306
          %s308 = smul.u32 4, %s16
          %s310 = ssub.s32 64, 64
          %311 = vsyncadd %s304, %s310
          %s312 = smul.addr %s308, 16
          %s313 = scalar_lea.hbm %s5, %s312
          %s315 = sshll.u32 %s307, 4
          %s316 = int_to_ptr.vmem [resolvable:$true] %s315
          %318 = dma.hbm_to_vmem [thread:$0]  %s313, 64, %s316, %s304
        $region40: #{se_conv_bn_add.1} parent=31 // pred_fallthru
          _
        // Predicated region
        $region41: #{se_conv_bn_add.1} parent=31 // pred_check
          %p319 = pneg %p172
        $region42: #{se_conv_bn_add.1} parent=31 // pred_check_branch
          %321 = sbr.rel (%p319) target = $region44
        $region43: #{se_conv_bn_add.1} parent=31 // pred_region
          %s322 = sand.u32 %s16, 1
          %s323 = scalar_lea.sflag [#allocation4], %s322
          %s324 = sand.u32 %s162, 1
          %s325 = smul.addr %s324, 4
          %s326 = scalar_lea.vmem [#allocation9], %s325
          %s327 = smul.u32 4, %s16
          %s329 = ssub.s32 64, 64
          %330 = vsyncadd %s323, %s329
          %s331 = smul.addr %s327, 16
          %s332 = scalar_lea.hbm %s6, %s331
          %s334 = sshll.u32 %s326, 4
          %s335 = int_to_ptr.vmem [resolvable:$true] %s334
          %337 = dma.hbm_to_vmem [thread:$0]  %s332, 64, %s335, %s323
        $region44: #{se_conv_bn_add.1} parent=31 // pred_fallthru
          _
        // Predicated region
        $region45: #{se_conv_bn_add.1} parent=31 // pred_check
          %p338 = pneg %p198
        $region46: #{se_conv_bn_add.1} parent=31 // pred_check_branch
          %340 = sbr.rel (%p338) target = $region48
        $region47: #{se_conv_bn_add.1} parent=31 // pred_region
          %s341 = sand.u32 %s188, 1
          %s342 = sand.u32 %s188, 1
          %s343 = smul.addr %s342, 224
          %s344 = scalar_lea.vmem [#allocation10], %s343
          %s345 = smul.u32 4, %s16
          %s346 = smul.addr %s345, 8
          %s347 = scalar_lea.vmem %s7, %s346
          // Predicated region
          $region49: #{se_conv_bn_add.1} parent=47 // pred_check
            _
          $region50: #{se_conv_bn_add.1} parent=47 // pred_check_branch
            %349 = sbr.rel (0) target = $region52
          $region51: #{se_conv_bn_add.1} parent=47 // pred_region
            // Predicated region
            $region53: #{se_conv_bn_add.1} parent=51 // pred_check
              _
            $region54: #{se_conv_bn_add.1} parent=51 // pred_check_branch
              %351 = sbr.rel (0) target = $region56
            $region55: #{se_conv_bn_add.1} parent=51 // pred_region
              loop: start=0, step=1, limit=1
              $region57: #{se_conv_bn_add.1} parent=55 // loop_pre_header
                _
              $region58: #{se_conv_bn_add.1} parent=55 // loop_header
                %s353 = sphi 0, %s357
                %p354 = scmp.ge.s32.totalorder %s353, 1
                %s358 = sphi %s347, %s347
                %s359 = sphi %s344, %s344
              $region59: #{se_conv_bn_add.1} parent=55 // loop_header_branch
                %356 = sbr.rel (%p354) target = $region63
              $region60: #{se_conv_bn_add.1} parent=55 // loop_body
                %v360 = vld [vmem:[%s358] sm:$0xff]
                %361 = vst [vmem:[%s359] sm:$0xff] %v360
                %v362 = vld [vmem:[%s358 + $0x8] sm:$0xff]
                %363 = vst [vmem:[%s359 + $0x8] sm:$0xff] %v362
                %v364 = vld [vmem:[%s358 + $0x10] sm:$0xff]
                %365 = vst [vmem:[%s359 + $0x10] sm:$0xff] %v364
                %v366 = vld [vmem:[%s358 + $0x18] sm:$0xff]
                %367 = vst [vmem:[%s359 + $0x18] sm:$0xff] %v366
                %v368 = vld [vmem:[%s358 + $0x60] sm:$0xff]
                %369 = vst [vmem:[%s359 + $0x20] sm:$0xff] %v368
                %v370 = vld [vmem:[%s358 + $0x68] sm:$0xff]
                %371 = vst [vmem:[%s359 + $0x28] sm:$0xff] %v370
                %v372 = vld [vmem:[%s358 + $0x70] sm:$0xff]
                %373 = vst [vmem:[%s359 + $0x30] sm:$0xff] %v372
                %v374 = vld [vmem:[%s358 + $0x78] sm:$0xff]
                %375 = vst [vmem:[%s359 + $0x38] sm:$0xff] %v374
                %v376 = vld [vmem:[%s358 + $0xc0] sm:$0xff]
                %377 = vst [vmem:[%s359 + $0x40] sm:$0xff] %v376
                %v378 = vld [vmem:[%s358 + $0xc8] sm:$0xff]
                %379 = vst [vmem:[%s359 + $0x48] sm:$0xff] %v378
                %v380 = vld [vmem:[%s358 + $0xd0] sm:$0xff]
                %381 = vst [vmem:[%s359 + $0x50] sm:$0xff] %v380
                %v382 = vld [vmem:[%s358 + $0xd8] sm:$0xff]
                %383 = vst [vmem:[%s359 + $0x58] sm:$0xff] %v382
                %v384 = vld [vmem:[%s358 + $0x120] sm:$0xff]
                %385 = vst [vmem:[%s359 + $0x60] sm:$0xff] %v384
                %v386 = vld [vmem:[%s358 + $0x128] sm:$0xff]
                %387 = vst [vmem:[%s359 + $0x68] sm:$0xff] %v386
                %v388 = vld [vmem:[%s358 + $0x130] sm:$0xff]
                %389 = vst [vmem:[%s359 + $0x70] sm:$0xff] %v388
                %v390 = vld [vmem:[%s358 + $0x138] sm:$0xff]
                %391 = vst [vmem:[%s359 + $0x78] sm:$0xff] %v390
                %v392 = vld [vmem:[%s358 + $0x180] sm:$0xff]
                %393 = vst [vmem:[%s359 + $0x80] sm:$0xff] %v392
                %v394 = vld [vmem:[%s358 + $0x188] sm:$0xff]
                %395 = vst [vmem:[%s359 + $0x88] sm:$0xff] %v394
                %v396 = vld [vmem:[%s358 + $0x190] sm:$0xff]
                %397 = vst [vmem:[%s359 + $0x90] sm:$0xff] %v396
                %v398 = vld [vmem:[%s358 + $0x198] sm:$0xff]
                %399 = vst [vmem:[%s359 + $0x98] sm:$0xff] %v398
                %v400 = vld [vmem:[%s358 + $0x1e0] sm:$0xff]
                %401 = vst [vmem:[%s359 + $0xa0] sm:$0xff] %v400
                %v402 = vld [vmem:[%s358 + $0x1e8] sm:$0xff]
                %403 = vst [vmem:[%s359 + $0xa8] sm:$0xff] %v402
                %v404 = vld [vmem:[%s358 + $0x1f0] sm:$0xff]
                %405 = vst [vmem:[%s359 + $0xb0] sm:$0xff] %v404
                %v406 = vld [vmem:[%s358 + $0x1f8] sm:$0xff]
                %407 = vst [vmem:[%s359 + $0xb8] sm:$0xff] %v406
                %v408 = vld [vmem:[%s358 + $0x240] sm:$0xff]
                %409 = vst [vmem:[%s359 + $0xc0] sm:$0xff] %v408
                %v410 = vld [vmem:[%s358 + $0x248] sm:$0xff]
                %411 = vst [vmem:[%s359 + $0xc8] sm:$0xff] %v410
                %v412 = vld [vmem:[%s358 + $0x250] sm:$0xff]
                %413 = vst [vmem:[%s359 + $0xd0] sm:$0xff] %v412
                %v414 = vld [vmem:[%s358 + $0x258] sm:$0xff]
                %415 = vst [vmem:[%s359 + $0xd8] sm:$0xff] %v414
              $region61: #{se_conv_bn_add.1} parent=55 // loop_footer
                %s357 = sadd.s32 1, %s353
              $region62: #{se_conv_bn_add.1} parent=55 // loop_footer_branch
                %352 = sbr.rel target = $region58
              $region63: #{se_conv_bn_add.1} parent=55 // loop_exit
                _
            $region56: #{se_conv_bn_add.1} parent=51 // pred_fallthru
              _
            // Predicated region
            $region64: #{se_conv_bn_add.1} parent=51 // pred_check
              _
            $region65: #{se_conv_bn_add.1} parent=51 // pred_check_branch
              %417 = sbr.rel target = $region67
            $region66: #{se_conv_bn_add.1} parent=51 // pred_region
              _
            $region67: #{se_conv_bn_add.1} parent=51 // pred_fallthru
              _
          $region52: #{se_conv_bn_add.1} parent=47 // pred_fallthru
            _
          %418 = vnop
        $region48: #{se_conv_bn_add.1} parent=31 // pred_fallthru
          _
      $region32: #{se_conv_bn_add.1} parent=5 // pred_fallthru
        _
      %p419 = scmp.le.s32.totalorder 1, %s16
      %p420 = scmp.lt.s32.totalorder %s16, 4
      %p421 = pnand %p419, %p420
      %p422 = pneg %p421
      // Predicated region
      $region68: #{se_conv_bn_add.1} parent=5 // pred_check
        _
      $region69: #{se_conv_bn_add.1} parent=5 // pred_check_branch
        %424 = sbr.rel (%p421) target = $region71
      $region70: #{se_conv_bn_add.1} parent=5 // pred_region
        %s425 = ssub.s32 %s16, 1
        // Predicated region
        $region72: #{se_conv_bn_add.1} parent=70 // pred_check
          %p426 = pneg %p58
        $region73: #{se_conv_bn_add.1} parent=70 // pred_check_branch
          %428 = sbr.rel (%p426) target = $region75
        $region74: #{se_conv_bn_add.1} parent=70 // pred_region
          %429 = dma.done [#allocation4], 13824
        $region75: #{se_conv_bn_add.1} parent=70 // pred_fallthru
          _
        // Predicated region
        $region76: #{se_conv_bn_add.1} parent=70 // pred_check
          %p430 = pneg %p79
        $region77: #{se_conv_bn_add.1} parent=70 // pred_check_branch
          %432 = sbr.rel (%p430) target = $region79
        $region78: #{se_conv_bn_add.1} parent=70 // pred_region
          %433 = dma.done [#allocation6], 192
        $region79: #{se_conv_bn_add.1} parent=70 // pred_fallthru
          _
        %s434 = sand.u32 %s21, 1
        %s435 = scalar_lea.sflag [#allocation4], %s434
        %s436 = sand.u32 %s113, 1
        %s437 = smul.addr %s436, 3024
        %s438 = scalar_lea.vmem [#allocation7], %s437
        // Predicated region
        $region80: #{se_conv_bn_add.1} parent=70 // pred_check
          %p439 = pneg %p126
        $region81: #{se_conv_bn_add.1} parent=70 // pred_check_branch
          %441 = sbr.rel (%p439) target = $region83
        $region82: #{se_conv_bn_add.1} parent=70 // pred_region
          %442 = dma.done %s435, 48384
        $region83: #{se_conv_bn_add.1} parent=70 // pred_fallthru
          _
        %s443 = sand.u32 %s21, 1
        %s444 = scalar_lea.sflag [#allocation4], %s443
        %s445 = sand.u32 %s139, 1
        %s446 = smul.addr %s445, 4
        %s447 = scalar_lea.vmem [#allocation8], %s446
        // Predicated region
        $region84: #{se_conv_bn_add.1} parent=70 // pred_check
          %p448 = pneg %p152
        $region85: #{se_conv_bn_add.1} parent=70 // pred_check_branch
          %450 = sbr.rel (%p448) target = $region87
        $region86: #{se_conv_bn_add.1} parent=70 // pred_region
          %451 = dma.done %s444, 64
        $region87: #{se_conv_bn_add.1} parent=70 // pred_fallthru
          _
        %s452 = sand.u32 %s21, 1
        %s453 = scalar_lea.sflag [#allocation4], %s452
        %s454 = sand.u32 %s165, 1
        %s455 = smul.addr %s454, 4
        %s456 = scalar_lea.vmem [#allocation9], %s455
        // Predicated region
        $region88: #{se_conv_bn_add.1} parent=70 // pred_check
          %p457 = pneg %p178
        $region89: #{se_conv_bn_add.1} parent=70 // pred_check_branch
          %459 = sbr.rel (%p457) target = $region91
        $region90: #{se_conv_bn_add.1} parent=70 // pred_region
          %460 = dma.done %s453, 64
        $region91: #{se_conv_bn_add.1} parent=70 // pred_fallthru
          _
        %s461 = sand.u32 %s191, 1
        %s462 = sand.u32 %s191, 1
        %s463 = smul.addr %s462, 224
        %s464 = scalar_lea.vmem [#allocation10], %s463
        // Predicated region
        $region92: #{se_conv_bn_add.1} parent=70 // pred_check
          %p465 = pneg %p204
        $region93: #{se_conv_bn_add.1} parent=70 // pred_check_branch
          %467 = sbr.rel (%p465) target = $region95
        $region94: #{se_conv_bn_add.1} parent=70 // pred_region
          _
        $region95: #{se_conv_bn_add.1} parent=70 // pred_fallthru
          _
        %p468 = pneg %p37
        %p469 = pneg %p34
        %p470 = pneg %p58
        %p471 = pneg %p55
        %p472 = pneg %p79
        %p473 = pneg %p76
        %p474 = pneg %p100
        %p475 = pneg %p97
        %s476 = sand.u32 %s21, 1
        %s477 = scalar_lea.sflag [#allocation4], %s476
        %s478 = sand.u32 %s113, 1
        %s479 = smul.addr %s478, 3024
        %s480 = scalar_lea.vmem [#allocation7], %s479
        %p481 = pneg %p126
        %p482 = pneg %p123
        %s483 = sand.u32 %s21, 1
        %s484 = scalar_lea.sflag [#allocation4], %s483
        %s485 = sand.u32 %s139, 1
        %s486 = smul.addr %s485, 4
        %s487 = scalar_lea.vmem [#allocation8], %s486
        %p488 = pneg %p152
        %p489 = pneg %p149
        %s490 = sand.u32 %s21, 1
        %s491 = scalar_lea.sflag [#allocation4], %s490
        %s492 = sand.u32 %s165, 1
        %s493 = smul.addr %s492, 4
        %s494 = scalar_lea.vmem [#allocation9], %s493
        %p495 = pneg %p178
        %p496 = pneg %p175
        %s497 = sand.u32 %s191, 1
        %s498 = sand.u32 %s191, 1
        %s499 = smul.addr %s498, 224
        %s500 = scalar_lea.vmem [#allocation10], %s499
        %p501 = pneg %p204
        %p502 = pneg %p201
        %p503 = pneg %p230
        %p504 = pneg %p227
        %s505 = sand.u32 %s217, 1
        %s506 = sand.u32 %s217, 1
        %s507 = smul.addr %s506, 224
        %s508 = scalar_lea.vmem [#allocation11], %s507
        %s509 = smul.u32 4, %s21
        %s510 = smul.u32 4, %s21
        %s511 = smul.u32 4, %s21
        %s512 = smul.u32 4, %s21
        %s513 = smul.u32 4, %s21
        %p515 = scmp.eq.s32.totalorder %s21, 0
        // Predicated region
        $region96: #{se_conv_bn_add.1} parent=70 // pred_check
          %p516 = pneg %p515
        $region97: #{se_conv_bn_add.1} parent=70 // pred_check_branch
          %518 = sbr.rel (%p516) target = $region99
        $region98: #{se_conv_bn_add.1} parent=70 // pred_region
          %v519 = vld [vmem:[%s0] sm:$0x3]
          %v520 = vld [vmem:[#allocation3] sm:$0xff]
          %v521 = vld [vmem:[#allocation3 + $0x8] sm:$0xff]
          %v522 = vld [vmem:[#allocation3 + $0x10] sm:$0xff]
          %v523 = vld [vmem:[#allocation3 + $0x18] sm:$0xff]
          %v524 = vld [vmem:[#allocation3 + $0x20] sm:$0xff]
          %v525 = vld [vmem:[#allocation3 + $0x28] sm:$0xff]
          %v526 = vld [vmem:[#allocation3 + $0x30] sm:$0xff]
          %v527 = vld [vmem:[#allocation3 + $0x38] sm:$0xff]
          %v528 = vld [vmem:[#allocation3 + $0x40] sm:$0xff]
          %v529 = vld [vmem:[#allocation3 + $0x48] sm:$0xff]
          %v530 = vld [vmem:[#allocation3 + $0x50] sm:$0xff]
          %v531 = vld [vmem:[#allocation3 + $0x58] sm:$0xff]
          %v532 = vld [vmem:[#allocation3 + $0x60] sm:$0xff]
          %v533 = vld [vmem:[#allocation3 + $0x68] sm:$0xff]
          %v534 = vld [vmem:[#allocation3 + $0x70] sm:$0xff]
          %v535 = vld [vmem:[#allocation3 + $0x78] sm:$0xff]
          %v536 = vld [vmem:[#allocation3 + $0x80] sm:$0xff]
          %v537 = vld [vmem:[#allocation3 + $0x88] sm:$0xff]
          %v538 = vld [vmem:[#allocation3 + $0x90] sm:$0xff]
          %v539 = vld [vmem:[#allocation3 + $0x98] sm:$0xff]
          %v540 = vld [vmem:[#allocation3 + $0xa0] sm:$0xff]
          %v541 = vld [vmem:[#allocation3 + $0xa8] sm:$0xff]
          %v542 = vld [vmem:[#allocation3 + $0xb0] sm:$0xff]
          %v543 = vld [vmem:[#allocation3 + $0xb8] sm:$0xff]
          %v544 = vld [vmem:[#allocation3 + $0xc0] sm:$0xff]
          %v545 = vld [vmem:[#allocation3 + $0xc8] sm:$0xff]
          %v546 = vld [vmem:[#allocation3 + $0xd0] sm:$0xff]
          %v547 = vld [vmem:[#allocation3 + $0xd8] sm:$0xff]
          %v548 = vld [vmem:[#allocation3 + $0xe0] sm:$0xff]
          %v549 = vld [vmem:[#allocation3 + $0xe8] sm:$0xff]
          %v550 = vld [vmem:[#allocation3 + $0xf0] sm:$0xff]
          %v551 = vld [vmem:[#allocation3 + $0xf8] sm:$0xff]
          %v552 = vld [vmem:[#allocation3 + $0x100] sm:$0xff]
          %v553 = vld [vmem:[#allocation3 + $0x108] sm:$0xff]
          %v554 = vld [vmem:[#allocation3 + $0x110] sm:$0xff]
          %v555 = vld [vmem:[#allocation3 + $0x118] sm:$0xff]
          %v556 = vld [vmem:[#allocation3 + $0x120] sm:$0xff]
          %v557 = vld [vmem:[#allocation3 + $0x128] sm:$0xff]
          %v558 = vld [vmem:[#allocation3 + $0x130] sm:$0xff]
          %v559 = vld [vmem:[#allocation3 + $0x138] sm:$0xff]
          %v560 = vld [vmem:[#allocation3 + $0x140] sm:$0xff]
          %v561 = vld [vmem:[#allocation3 + $0x148] sm:$0xff]
          %v562 = vld [vmem:[#allocation3 + $0x150] sm:$0xff]
          %v563 = vld [vmem:[#allocation3 + $0x158] sm:$0xff]
          %v564 = vld [vmem:[#allocation3 + $0x160] sm:$0xff]
          %v565 = vld [vmem:[#allocation3 + $0x168] sm:$0xff]
          %v566 = vld [vmem:[#allocation3 + $0x170] sm:$0xff]
          %v567 = vld [vmem:[#allocation3 + $0x178] sm:$0xff]
          %v568 = vld [vmem:[#allocation3 + $0x180] sm:$0xff]
          %v569 = vld [vmem:[#allocation3 + $0x188] sm:$0xff]
          %v570 = vld [vmem:[#allocation3 + $0x190] sm:$0xff]
          %v571 = vld [vmem:[#allocation3 + $0x198] sm:$0xff]
          %v572 = vld [vmem:[#allocation3 + $0x1a0] sm:$0xff]
          %v573 = vld [vmem:[#allocation3 + $0x1a8] sm:$0xff]
          %v574 = vld [vmem:[#allocation3 + $0x1b0] sm:$0xff]
          %v575 = vld [vmem:[#allocation3 + $0x1b8] sm:$0xff]
          %v576 = vld [vmem:[#allocation3 + $0x1c0] sm:$0xff]
          %v577 = vld [vmem:[#allocation3 + $0x1c8] sm:$0xff]
          %v578 = vld [vmem:[#allocation3 + $0x1d0] sm:$0xff]
          %v579 = vld [vmem:[#allocation3 + $0x1d8] sm:$0xff]
          %v580 = vld [vmem:[#allocation3 + $0x1e0] sm:$0xff]
          %v581 = vld [vmem:[#allocation3 + $0x1e8] sm:$0xff]
          %v582 = vld [vmem:[#allocation3 + $0x1f0] sm:$0xff]
          %v583 = vld [vmem:[#allocation3 + $0x1f8] sm:$0xff]
          %v584 = vld [vmem:[#allocation3 + $0x200] sm:$0xff]
          %v585 = vld [vmem:[#allocation3 + $0x208] sm:$0xff]
          %v586 = vld [vmem:[#allocation3 + $0x210] sm:$0xff]
          %v587 = vld [vmem:[#allocation3 + $0x218] sm:$0xff]
          %v588 = vld [vmem:[#allocation3 + $0x220] sm:$0xff]
          %v589 = vld [vmem:[#allocation3 + $0x228] sm:$0xff]
          %v590 = vld [vmem:[#allocation3 + $0x230] sm:$0xff]
          %v591 = vld [vmem:[#allocation3 + $0x238] sm:$0xff]
          %v592 = vld [vmem:[#allocation3 + $0x240] sm:$0xff]
          %v593 = vld [vmem:[#allocation3 + $0x248] sm:$0xff]
          %v594 = vld [vmem:[#allocation3 + $0x250] sm:$0xff]
          %v595 = vld [vmem:[#allocation3 + $0x258] sm:$0xff]
          %v596 = vld [vmem:[#allocation3 + $0x260] sm:$0xff]
          %v597 = vld [vmem:[#allocation3 + $0x268] sm:$0xff]
          %v598 = vld [vmem:[#allocation3 + $0x270] sm:$0xff]
          %v599 = vld [vmem:[#allocation3 + $0x278] sm:$0xff]
          %v600 = vld [vmem:[#allocation3 + $0x280] sm:$0xff]
          %v601 = vld [vmem:[#allocation3 + $0x288] sm:$0xff]
          %v602 = vld [vmem:[#allocation3 + $0x290] sm:$0xff]
          %v603 = vld [vmem:[#allocation3 + $0x298] sm:$0xff]
          %v604 = vld [vmem:[#allocation3 + $0x2a0] sm:$0xff]
          %v605 = vld [vmem:[#allocation3 + $0x2a8] sm:$0xff]
          %v606 = vld [vmem:[#allocation3 + $0x2b0] sm:$0xff]
          %v607 = vld [vmem:[#allocation3 + $0x2b8] sm:$0xff]
          %v608 = vld [vmem:[#allocation3 + $0x2c0] sm:$0xff]
          %v609 = vld [vmem:[#allocation3 + $0x2c8] sm:$0xff]
          %v610 = vld [vmem:[#allocation3 + $0x2d0] sm:$0xff]
          %v611 = vld [vmem:[#allocation3 + $0x2d8] sm:$0xff]
          %v612 = vld [vmem:[#allocation3 + $0x2e0] sm:$0xff]
          %v613 = vld [vmem:[#allocation3 + $0x2e8] sm:$0xff]
          %v614 = vld [vmem:[#allocation3 + $0x2f0] sm:$0xff]
          %v615 = vld [vmem:[#allocation3 + $0x2f8] sm:$0xff]
          %v616 = vld [vmem:[#allocation3 + $0x300] sm:$0xff]
          %v617 = vld [vmem:[#allocation3 + $0x308] sm:$0xff]
          %v618 = vld [vmem:[#allocation3 + $0x310] sm:$0xff]
          %v619 = vld [vmem:[#allocation3 + $0x318] sm:$0xff]
          %v620 = vld [vmem:[#allocation3 + $0x320] sm:$0xff]
          %v621 = vld [vmem:[#allocation3 + $0x328] sm:$0xff]
          %v622 = vld [vmem:[#allocation3 + $0x330] sm:$0xff]
          %v623 = vld [vmem:[#allocation3 + $0x338] sm:$0xff]
          %v624 = vld [vmem:[#allocation3 + $0x340] sm:$0xff]
          %v625 = vld [vmem:[#allocation3 + $0x348] sm:$0xff]
          %v626 = vld [vmem:[#allocation3 + $0x350] sm:$0xff]
          %v627 = vld [vmem:[#allocation3 + $0x358] sm:$0xff]
          %v628 = vld [vmem:[#allocation5] sm:$0xff]
          %v629 = vld [vmem:[#allocation5 + $0x8] sm:$0xf]
          %v632 = vunpack.c.l.s4 1966171168
          %v633 = vunpack.c.0.s8 %v632
          %v634 = vlaneseq
          %v635 = vshrl.u32 %v634, 7
          %v636 = vsub.s32 %v633, %v635
          %v637 = vrot.slane %v519, %v636
          %v638 = vcombine.high %v637, %v637
          %v640 = vunpack.c.l.s4 1966171168
          %v641 = vunpack.c.0.s8 %v640
          %v642 = vlaneseq
          %v643 = vshrl.u32 %v642, 7
          %v644 = vsub.s32 %v641, %v643
          %v645 = vrot.slane %v637, %v644
          %v647 = vunpack.c.l.s4 1966171168
          %v648 = vunpack.c.0.s8 %v647
          %v649 = vlaneseq
          %v650 = vshrl.u32 %v649, 7
          %v651 = vsub.s32 %v648, %v650
          %v652 = vrot.slane %v638, %v651
          %v762 = vunpack.c.l.b16 %v520
          %v763 = vunpack.c.h.b16 %v520
          %v764 = vunpack.c.l.b16 %v521
          %v765 = vunpack.c.h.b16 %v521
          %v766 = vunpack.c.l.b16 %v522
          %v767 = vunpack.c.h.b16 %v522
          %v768 = vunpack.c.l.b16 %v523
          %v769 = vunpack.c.h.b16 %v523
          %v770 = vunpack.c.l.b16 %v524
          %v771 = vunpack.c.h.b16 %v524
          %v772 = vunpack.c.l.b16 %v525
          %v773 = vunpack.c.h.b16 %v525
          %v774 = vunpack.c.l.b16 %v526
          %v775 = vunpack.c.h.b16 %v526
          %v776 = vunpack.c.l.b16 %v527
          %v777 = vunpack.c.h.b16 %v527
          %v778 = vunpack.c.l.b16 %v528
          %v779 = vunpack.c.h.b16 %v528
          %v780 = vunpack.c.l.b16 %v529
          %v781 = vunpack.c.h.b16 %v529
          %v782 = vunpack.c.l.b16 %v530
          %v783 = vunpack.c.h.b16 %v530
          %v784 = vunpack.c.l.b16 %v531
          %v785 = vunpack.c.h.b16 %v531
          %v786 = vunpack.c.l.b16 %v532
          %v787 = vunpack.c.h.b16 %v532
          %v788 = vunpack.c.l.b16 %v533
          %v789 = vunpack.c.h.b16 %v533
          %v790 = vunpack.c.l.b16 %v534
          %v791 = vunpack.c.h.b16 %v534
          %v792 = vunpack.c.l.b16 %v535
          %v793 = vunpack.c.h.b16 %v535
          %v794 = vunpack.c.l.b16 %v536
          %v795 = vunpack.c.h.b16 %v536
          %v796 = vunpack.c.l.b16 %v537
          %v797 = vunpack.c.h.b16 %v537
          %v798 = vunpack.c.l.b16 %v538
          %v799 = vunpack.c.h.b16 %v538
          %v800 = vunpack.c.l.b16 %v539
          %v801 = vunpack.c.h.b16 %v539
          %v802 = vunpack.c.l.b16 %v540
          %v803 = vunpack.c.h.b16 %v540
          %v804 = vunpack.c.l.b16 %v541
          %v805 = vunpack.c.h.b16 %v541
          %v806 = vunpack.c.l.b16 %v542
          %v807 = vunpack.c.h.b16 %v542
          %v808 = vunpack.c.l.b16 %v543
          %v809 = vunpack.c.h.b16 %v543
          %v810 = vunpack.c.l.b16 %v544
          %v811 = vunpack.c.h.b16 %v544
          %v812 = vunpack.c.l.b16 %v545
          %v813 = vunpack.c.h.b16 %v545
          %v814 = vunpack.c.l.b16 %v546
          %v815 = vunpack.c.h.b16 %v546
          %v816 = vunpack.c.l.b16 %v547
          %v817 = vunpack.c.h.b16 %v547
          %v818 = vunpack.c.l.b16 %v548
          %v819 = vunpack.c.h.b16 %v548
          %v820 = vunpack.c.l.b16 %v549
          %v821 = vunpack.c.h.b16 %v549
          %v822 = vunpack.c.l.b16 %v550
          %v823 = vunpack.c.h.b16 %v550
          %v824 = vunpack.c.l.b16 %v551
          %v825 = vunpack.c.h.b16 %v551
          %v826 = vunpack.c.l.b16 %v552
          %v827 = vunpack.c.h.b16 %v552
          %v828 = vunpack.c.l.b16 %v553
          %v829 = vunpack.c.h.b16 %v553
          %v830 = vunpack.c.l.b16 %v554
          %v831 = vunpack.c.h.b16 %v554
          %v832 = vunpack.c.l.b16 %v555
          %v833 = vunpack.c.h.b16 %v555
          %v834 = vunpack.c.l.b16 %v556
          %v835 = vunpack.c.h.b16 %v556
          %v836 = vunpack.c.l.b16 %v557
          %v837 = vunpack.c.h.b16 %v557
          %v838 = vunpack.c.l.b16 %v558
          %v839 = vunpack.c.h.b16 %v558
          %v840 = vunpack.c.l.b16 %v559
          %v841 = vunpack.c.h.b16 %v559
          %v842 = vunpack.c.l.b16 %v560
          %v843 = vunpack.c.h.b16 %v560
          %v844 = vunpack.c.l.b16 %v561
          %v845 = vunpack.c.h.b16 %v561
          %v846 = vunpack.c.l.b16 %v562
          %v847 = vunpack.c.h.b16 %v562
          %v848 = vunpack.c.l.b16 %v563
          %v849 = vunpack.c.h.b16 %v563
          %v850 = vunpack.c.l.b16 %v564
          %v851 = vunpack.c.h.b16 %v564
          %v852 = vunpack.c.l.b16 %v565
          %v853 = vunpack.c.h.b16 %v565
          %v854 = vunpack.c.l.b16 %v566
          %v855 = vunpack.c.h.b16 %v566
          %v856 = vunpack.c.l.b16 %v567
          %v857 = vunpack.c.h.b16 %v567
          %v858 = vunpack.c.l.b16 %v568
          %v859 = vunpack.c.h.b16 %v568
          %v860 = vunpack.c.l.b16 %v569
          %v861 = vunpack.c.h.b16 %v569
          %v862 = vunpack.c.l.b16 %v570
          %v863 = vunpack.c.h.b16 %v570
          %v864 = vunpack.c.l.b16 %v571
          %v865 = vunpack.c.h.b16 %v571
          %v866 = vunpack.c.l.b16 %v572
          %v867 = vunpack.c.h.b16 %v572
          %v868 = vunpack.c.l.b16 %v573
          %v869 = vunpack.c.h.b16 %v573
          %v870 = vunpack.c.l.b16 %v574
          %v871 = vunpack.c.h.b16 %v574
          %v872 = vunpack.c.l.b16 %v575
          %v873 = vunpack.c.h.b16 %v575
          %v874 = vunpack.c.l.b16 %v576
          %v875 = vunpack.c.h.b16 %v576
          %v876 = vunpack.c.l.b16 %v577
          %v877 = vunpack.c.h.b16 %v577
          %v878 = vunpack.c.l.b16 %v578
          %v879 = vunpack.c.h.b16 %v578
          %v880 = vunpack.c.l.b16 %v579
          %v881 = vunpack.c.h.b16 %v579
          %v882 = vunpack.c.l.b16 %v580
          %v883 = vunpack.c.h.b16 %v580
          %v884 = vunpack.c.l.b16 %v581
          %v885 = vunpack.c.h.b16 %v581
          %v886 = vunpack.c.l.b16 %v582
          %v887 = vunpack.c.h.b16 %v582
          %v888 = vunpack.c.l.b16 %v583
          %v889 = vunpack.c.h.b16 %v583
          %v890 = vunpack.c.l.b16 %v584
          %v891 = vunpack.c.h.b16 %v584
          %v892 = vunpack.c.l.b16 %v585
          %v893 = vunpack.c.h.b16 %v585
          %v894 = vunpack.c.l.b16 %v586
          %v895 = vunpack.c.h.b16 %v586
          %v896 = vunpack.c.l.b16 %v587
          %v897 = vunpack.c.h.b16 %v587
          %v898 = vunpack.c.l.b16 %v588
          %v899 = vunpack.c.h.b16 %v588
          %v900 = vunpack.c.l.b16 %v589
          %v901 = vunpack.c.h.b16 %v589
          %v902 = vunpack.c.l.b16 %v590
          %v903 = vunpack.c.h.b16 %v590
          %v904 = vunpack.c.l.b16 %v591
          %v905 = vunpack.c.h.b16 %v591
          %v906 = vunpack.c.l.b16 %v592
          %v907 = vunpack.c.h.b16 %v592
          %v908 = vunpack.c.l.b16 %v593
          %v909 = vunpack.c.h.b16 %v593
          %v910 = vunpack.c.l.b16 %v594
          %v911 = vunpack.c.h.b16 %v594
          %v912 = vunpack.c.l.b16 %v595
          %v913 = vunpack.c.h.b16 %v595
          %v914 = vunpack.c.l.b16 %v596
          %v915 = vunpack.c.h.b16 %v596
          %v916 = vunpack.c.l.b16 %v597
          %v917 = vunpack.c.h.b16 %v597
          %v918 = vunpack.c.l.b16 %v598
          %v919 = vunpack.c.h.b16 %v598
          %v920 = vunpack.c.l.b16 %v599
          %v921 = vunpack.c.h.b16 %v599
          %v922 = vunpack.c.l.b16 %v600
          %v923 = vunpack.c.h.b16 %v600
          %v924 = vunpack.c.l.b16 %v601
          %v925 = vunpack.c.h.b16 %v601
          %v926 = vunpack.c.l.b16 %v602
          %v927 = vunpack.c.h.b16 %v602
          %v928 = vunpack.c.l.b16 %v603
          %v929 = vunpack.c.h.b16 %v603
          %v930 = vunpack.c.l.b16 %v604
          %v931 = vunpack.c.h.b16 %v604
          %v932 = vunpack.c.l.b16 %v605
          %v933 = vunpack.c.h.b16 %v605
          %v934 = vunpack.c.l.b16 %v606
          %v935 = vunpack.c.h.b16 %v606
          %v936 = vunpack.c.l.b16 %v607
          %v937 = vunpack.c.h.b16 %v607
          %v938 = vunpack.c.l.b16 %v608
          %v939 = vunpack.c.h.b16 %v608
          %v940 = vunpack.c.l.b16 %v609
          %v941 = vunpack.c.h.b16 %v609
          %v942 = vunpack.c.l.b16 %v610
          %v943 = vunpack.c.h.b16 %v610
          %v944 = vunpack.c.l.b16 %v611
          %v945 = vunpack.c.h.b16 %v611
          %v946 = vunpack.c.l.b16 %v612
          %v947 = vunpack.c.h.b16 %v612
          %v948 = vunpack.c.l.b16 %v613
          %v949 = vunpack.c.h.b16 %v613
          %v950 = vunpack.c.l.b16 %v614
          %v951 = vunpack.c.h.b16 %v614
          %v952 = vunpack.c.l.b16 %v615
          %v953 = vunpack.c.h.b16 %v615
          %v954 = vunpack.c.l.b16 %v616
          %v955 = vunpack.c.h.b16 %v616
          %v956 = vunpack.c.l.b16 %v617
          %v957 = vunpack.c.h.b16 %v617
          %v958 = vunpack.c.l.b16 %v618
          %v959 = vunpack.c.h.b16 %v618
          %v960 = vunpack.c.l.b16 %v619
          %v961 = vunpack.c.h.b16 %v619
          %v962 = vunpack.c.l.b16 %v620
          %v963 = vunpack.c.h.b16 %v620
          %v964 = vunpack.c.l.b16 %v621
          %v965 = vunpack.c.h.b16 %v621
          %v966 = vunpack.c.l.b16 %v622
          %v967 = vunpack.c.h.b16 %v622
          %v968 = vunpack.c.l.b16 %v623
          %v969 = vunpack.c.h.b16 %v623
          %v970 = vunpack.c.l.b16 %v624
          %v971 = vunpack.c.h.b16 %v624
          %v972 = vunpack.c.l.b16 %v625
          %v973 = vunpack.c.h.b16 %v625
          %v974 = vunpack.c.l.b16 %v626
          %v975 = vunpack.c.h.b16 %v626
          %v976 = vunpack.c.l.b16 %v627
          %v977 = vunpack.c.h.b16 %v627
          %v978 = vpack.c.b16 %v774, %v762
          %v979 = vpack.c.b16 %v775, %v763
          %v980 = vpack.c.b16 %v776, %v764
          %v981 = vpack.c.b16 %v777, %v765
          %v982 = vpack.c.b16 %v778, %v766
          %v983 = vpack.c.b16 %v779, %v767
          %v984 = vpack.c.b16 %v780, %v768
          %v985 = vpack.c.b16 %v781, %v769
          %v986 = vpack.c.b16 %v782, %v770
          %v987 = vpack.c.b16 %v783, %v771
          %v988 = vpack.c.b16 %v784, %v772
          %v989 = vpack.c.b16 %v785, %v773
          %v990 = vpack.c.b16 %v798, %v786
          %v991 = vpack.c.b16 %v799, %v787
          %v992 = vpack.c.b16 %v800, %v788
          %v993 = vpack.c.b16 %v801, %v789
          %v994 = vpack.c.b16 %v802, %v790
          %v995 = vpack.c.b16 %v803, %v791
          %v996 = vpack.c.b16 %v804, %v792
          %v997 = vpack.c.b16 %v805, %v793
          %v998 = vpack.c.b16 %v806, %v794
          %v999 = vpack.c.b16 %v807, %v795
          %v1000 = vpack.c.b16 %v808, %v796
          %v1001 = vpack.c.b16 %v809, %v797
          %v1002 = vpack.c.b16 %v822, %v810
          %v1003 = vpack.c.b16 %v823, %v811
          %v1004 = vpack.c.b16 %v824, %v812
          %v1005 = vpack.c.b16 %v825, %v813
          %v1006 = vpack.c.b16 %v826, %v814
          %v1007 = vpack.c.b16 %v827, %v815
          %v1008 = vpack.c.b16 %v828, %v816
          %v1009 = vpack.c.b16 %v829, %v817
          %v1010 = vpack.c.b16 %v830, %v818
          %v1011 = vpack.c.b16 %v831, %v819
          %v1012 = vpack.c.b16 %v832, %v820
          %v1013 = vpack.c.b16 %v833, %v821
          %v1014 = vpack.c.b16 %v846, %v834
          %v1015 = vpack.c.b16 %v847, %v835
          %v1016 = vpack.c.b16 %v848, %v836
          %v1017 = vpack.c.b16 %v849, %v837
          %v1018 = vpack.c.b16 %v850, %v838
          %v1019 = vpack.c.b16 %v851, %v839
          %v1020 = vpack.c.b16 %v852, %v840
          %v1021 = vpack.c.b16 %v853, %v841
          %v1022 = vpack.c.b16 %v854, %v842
          %v1023 = vpack.c.b16 %v855, %v843
          %v1024 = vpack.c.b16 %v856, %v844
          %v1025 = vpack.c.b16 %v857, %v845
          %v1026 = vpack.c.b16 %v870, %v858
          %v1027 = vpack.c.b16 %v871, %v859
          %v1028 = vpack.c.b16 %v872, %v860
          %v1029 = vpack.c.b16 %v873, %v861
          %v1030 = vpack.c.b16 %v874, %v862
          %v1031 = vpack.c.b16 %v875, %v863
          %v1032 = vpack.c.b16 %v876, %v864
          %v1033 = vpack.c.b16 %v877, %v865
          %v1034 = vpack.c.b16 %v878, %v866
          %v1035 = vpack.c.b16 %v879, %v867
          %v1036 = vpack.c.b16 %v880, %v868
          %v1037 = vpack.c.b16 %v881, %v869
          %v1038 = vpack.c.b16 %v894, %v882
          %v1039 = vpack.c.b16 %v895, %v883
          %v1040 = vpack.c.b16 %v896, %v884
          %v1041 = vpack.c.b16 %v897, %v885
          %v1042 = vpack.c.b16 %v898, %v886
          %v1043 = vpack.c.b16 %v899, %v887
          %v1044 = vpack.c.b16 %v900, %v888
          %v1045 = vpack.c.b16 %v901, %v889
          %v1046 = vpack.c.b16 %v902, %v890
          %v1047 = vpack.c.b16 %v903, %v891
          %v1048 = vpack.c.b16 %v904, %v892
          %v1049 = vpack.c.b16 %v905, %v893
          %v1050 = vpack.c.b16 %v918, %v906
          %v1051 = vpack.c.b16 %v919, %v907
          %v1052 = vpack.c.b16 %v920, %v908
          %v1053 = vpack.c.b16 %v921, %v909
          %v1054 = vpack.c.b16 %v922, %v910
          %v1055 = vpack.c.b16 %v923, %v911
          %v1056 = vpack.c.b16 %v924, %v912
          %v1057 = vpack.c.b16 %v925, %v913
          %v1058 = vpack.c.b16 %v926, %v914
          %v1059 = vpack.c.b16 %v927, %v915
          %v1060 = vpack.c.b16 %v928, %v916
          %v1061 = vpack.c.b16 %v929, %v917
          %v1062 = vpack.c.b16 %v942, %v930
          %v1063 = vpack.c.b16 %v943, %v931
          %v1064 = vpack.c.b16 %v944, %v932
          %v1065 = vpack.c.b16 %v945, %v933
          %v1066 = vpack.c.b16 %v946, %v934
          %v1067 = vpack.c.b16 %v947, %v935
          %v1068 = vpack.c.b16 %v948, %v936
          %v1069 = vpack.c.b16 %v949, %v937
          %v1070 = vpack.c.b16 %v950, %v938
          %v1071 = vpack.c.b16 %v951, %v939
          %v1072 = vpack.c.b16 %v952, %v940
          %v1073 = vpack.c.b16 %v953, %v941
          %v1074 = vpack.c.b16 %v966, %v954
          %v1075 = vpack.c.b16 %v967, %v955
          %v1076 = vpack.c.b16 %v968, %v956
          %v1077 = vpack.c.b16 %v969, %v957
          %v1078 = vpack.c.b16 %v970, %v958
          %v1079 = vpack.c.b16 %v971, %v959
          %v1080 = vpack.c.b16 %v972, %v960
          %v1081 = vpack.c.b16 %v973, %v961
          %v1082 = vpack.c.b16 %v974, %v962
          %v1083 = vpack.c.b16 %v975, %v963
          %v1084 = vpack.c.b16 %v976, %v964
          %v1085 = vpack.c.b16 %v977, %v965
          %v1196 = vlaneseq
          %v1197 = vshrl.u32 %v1196, 7
          %v1198 = vsub.s32 0, %v1197
          %v1199 = vrot.slane %v628, %v1198
          %v1200 = vlaneseq
          %v1201 = vshrl.u32 %v1200, 7
          %v1202 = vsub.s32 1, %v1201
          %v1203 = vrot.slane %v628, %v1202
          %v1204 = vlaneseq
          %v1205 = vshrl.u32 %v1204, 7
          %v1206 = vsub.s32 2, %v1205
          %v1207 = vrot.slane %v628, %v1206
          %v1208 = vlaneseq
          %v1209 = vshrl.u32 %v1208, 7
          %v1210 = vsub.s32 3, %v1209
          %v1211 = vrot.slane %v628, %v1210
          %v1212 = vlaneseq
          %v1213 = vshrl.u32 %v1212, 7
          %v1214 = vsub.s32 4, %v1213
          %v1215 = vrot.slane %v628, %v1214
          %v1216 = vlaneseq
          %v1217 = vshrl.u32 %v1216, 7
          %v1218 = vsub.s32 5, %v1217
          %v1219 = vrot.slane %v628, %v1218
          %v1220 = vlaneseq
          %v1221 = vshrl.u32 %v1220, 7
          %v1222 = vsub.s32 6, %v1221
          %v1223 = vrot.slane %v628, %v1222
          %v1224 = vlaneseq
          %v1225 = vshrl.u32 %v1224, 7
          %v1226 = vsub.s32 7, %v1225
          %v1227 = vrot.slane %v628, %v1226
          %v1228 = vlaneseq
          %v1229 = vshrl.u32 %v1228, 7
          %v1230 = vsub.s32 0, %v1229
          %v1231 = vrot.slane %v629, %v1230
          %v1232 = vlaneseq
          %v1233 = vshrl.u32 %v1232, 7
          %v1234 = vsub.s32 1, %v1233
          %v1235 = vrot.slane %v629, %v1234
          %v1236 = vlaneseq
          %v1237 = vshrl.u32 %v1236, 7
          %v1238 = vsub.s32 2, %v1237
          %v1239 = vrot.slane %v629, %v1238
          %v1240 = vlaneseq
          %v1241 = vshrl.u32 %v1240, 7
          %v1242 = vsub.s32 3, %v1241
          %v1243 = vrot.slane %v629, %v1242
          %vm1256 = vcmask 130048
          %v1258 = vsel %vm1256, %v652, 0
          %1260 = vmatprep.subr.bf16.mxu0 %v979
          %1261 = vmatpush1.bf16.msra.mxu0 %v978
          %1262 = vmatprep.subr.bf16.mxu0 %v991
          %1263 = vmatpush1.bf16.msra.mxu0 %v990
          %1264 = vmatprep.subr.bf16.mxu0 %v1003
          %1265 = vmatpush1.bf16.msra.mxu0 %v1002
          %1266 = vmatprep.subr.bf16.mxu0 %v1015
          %1267 = vmatpush1.bf16.msra.mxu0 %v1014
          %1268 = vmatprep.subr.bf16.mxu0 %v1027
          %1269 = vmatpush1.bf16.msra.mxu0 %v1026
          %1270 = vmatprep.subr.bf16.mxu0 %v1039
          %1271 = vmatpush1.bf16.msra.mxu0 %v1038
          %1272 = vmatprep.subr.bf16.mxu0 %v1051
          %1273 = vmatpush1.bf16.msra.mxu0 %v1050
          %1274 = vmatprep.subr.bf16.mxu0 %v1063
          %1275 = vmatpush1.bf16.msra.mxu0 %v1062
          %1276 = vmatprep.subr.bf16.mxu0 %v1075
          %1277 = vmatpush1.bf16.msra.mxu0 %v1074
          %1278 = vmatprep.subr.bf16.mxu0 0
          %1279 = vmatpush1.bf16.msra.mxu0 0
          %1280 = vmatprep.subr.bf16.mxu0 0
          %1281 = vmatpush1.bf16.msra.mxu0 0
          %1282 = vmatprep.subr.bf16.mxu0 0
          %1283 = vmatpush1.bf16.msra.mxu0 0
          %1284 = vmatprep.subr.bf16.mxu0 0
          %1285 = vmatpush1.bf16.msra.mxu0 0
          %1286 = vmatprep.subr.bf16.mxu0 0
          %1287 = vmatpush1.bf16.msra.mxu0 0
          %1288 = vmatprep.subr.bf16.mxu0 0
          %1289 = vmatpush1.bf16.msra.mxu0 0
          %1290 = vmatprep.subr.bf16.mxu0 0
          %1291 = vmatpush1.bf16.msra.mxu0 0
          %1292 = vmatprep.mubr.bf16.mxu0 %v1258
          %1293 = vmatmul.mubr.bf16.gmra.mrb[0].mxu0 %v645
          %v1294 = vpop.f32.mrb[0].mxu0
          %v1295 = vadd.f32 %v1199, %v1294
          %v1296 = vpop.f32.mrb[0].mxu0
          %v1297 = vadd.f32 %v1203, %v1296
          %v1298 = vpop.f32.mrb[0].mxu0
          %v1299 = vpop.f32.mrb[0].mxu0
          %1300 = vdwg.mxu0
          %1301 = vmatprep.subr.bf16.mxu0 %v981
          %1302 = vmatpush1.bf16.msra.mxu0 %v980
          %1303 = vmatprep.subr.bf16.mxu0 %v993
          %1304 = vmatpush1.bf16.msra.mxu0 %v992
          %1305 = vmatprep.subr.bf16.mxu0 %v1005
          %1306 = vmatpush1.bf16.msra.mxu0 %v1004
          %1307 = vmatprep.subr.bf16.mxu0 %v1017
          %1308 = vmatpush1.bf16.msra.mxu0 %v1016
          %1309 = vmatprep.subr.bf16.mxu0 %v1029
          %1310 = vmatpush1.bf16.msra.mxu0 %v1028
          %1311 = vmatprep.subr.bf16.mxu0 %v1041
          %1312 = vmatpush1.bf16.msra.mxu0 %v1040
          %1313 = vmatprep.subr.bf16.mxu0 %v1053
          %1314 = vmatpush1.bf16.msra.mxu0 %v1052
          %1315 = vmatprep.subr.bf16.mxu0 %v1065
          %1316 = vmatpush1.bf16.msra.mxu0 %v1064
          %1317 = vmatprep.subr.bf16.mxu0 %v1077
          %1318 = vmatpush1.bf16.msra.mxu0 %v1076
          %1319 = vmatprep.subr.bf16.mxu0 0
          %1320 = vmatpush1.bf16.msra.mxu0 0
          %1321 = vmatprep.subr.bf16.mxu0 0
          %1322 = vmatpush1.bf16.msra.mxu0 0
          %1323 = vmatprep.subr.bf16.mxu0 0
          %1324 = vmatpush1.bf16.msra.mxu0 0
          %1325 = vmatprep.subr.bf16.mxu0 0
          %1326 = vmatpush1.bf16.msra.mxu0 0
          %1327 = vmatprep.subr.bf16.mxu0 0
          %1328 = vmatpush1.bf16.msra.mxu0 0
          %1329 = vmatprep.subr.bf16.mxu0 0
          %1330 = vmatpush1.bf16.msra.mxu0 0
          %1331 = vmatprep.subr.bf16.mxu0 0
          %1332 = vmatpush1.bf16.msra.mxu0 0
          %1333 = vmatprep.mubr.bf16.mxu0 %v1258
          %1334 = vmatmul.mubr.bf16.gmra.mrb[0].mxu0 %v645
          %v1335 = vpop.f32.mrb[0].mxu0
          %v1336 = vadd.f32 %v1207, %v1335
          %v1337 = vpop.f32.mrb[0].mxu0
          %v1338 = vadd.f32 %v1211, %v1337
          %v1339 = vpop.f32.mrb[0].mxu0
          %v1340 = vpop.f32.mrb[0].mxu0
          %1341 = vdwg.mxu0
          %1342 = vmatprep.subr.bf16.mxu0 %v983
          %1343 = vmatpush1.bf16.msra.mxu0 %v982
          %1344 = vmatprep.subr.bf16.mxu0 %v995
          %1345 = vmatpush1.bf16.msra.mxu0 %v994
          %1346 = vmatprep.subr.bf16.mxu0 %v1007
          %1347 = vmatpush1.bf16.msra.mxu0 %v1006
          %1348 = vmatprep.subr.bf16.mxu0 %v1019
          %1349 = vmatpush1.bf16.msra.mxu0 %v1018
          %1350 = vmatprep.subr.bf16.mxu0 %v1031
          %1351 = vmatpush1.bf16.msra.mxu0 %v1030
          %1352 = vmatprep.subr.bf16.mxu0 %v1043
          %1353 = vmatpush1.bf16.msra.mxu0 %v1042
          %1354 = vmatprep.subr.bf16.mxu0 %v1055
          %1355 = vmatpush1.bf16.msra.mxu0 %v1054
          %1356 = vmatprep.subr.bf16.mxu0 %v1067
          %1357 = vmatpush1.bf16.msra.mxu0 %v1066
          %1358 = vmatprep.subr.bf16.mxu0 %v1079
          %1359 = vmatpush1.bf16.msra.mxu0 %v1078
          %1360 = vmatprep.subr.bf16.mxu0 0
          %1361 = vmatpush1.bf16.msra.mxu0 0
          %1362 = vmatprep.subr.bf16.mxu0 0
          %1363 = vmatpush1.bf16.msra.mxu0 0
          %1364 = vmatprep.subr.bf16.mxu0 0
          %1365 = vmatpush1.bf16.msra.mxu0 0
          %1366 = vmatprep.subr.bf16.mxu0 0
          %1367 = vmatpush1.bf16.msra.mxu0 0
          %1368 = vmatprep.subr.bf16.mxu0 0
          %1369 = vmatpush1.bf16.msra.mxu0 0
          %1370 = vmatprep.subr.bf16.mxu0 0
          %1371 = vmatpush1.bf16.msra.mxu0 0
          %1372 = vmatprep.subr.bf16.mxu0 0
          %1373 = vmatpush1.bf16.msra.mxu0 0
          %1374 = vmatprep.mubr.bf16.mxu0 %v1258
          %1375 = vmatmul.mubr.bf16.gmra.mrb[0].mxu0 %v645
          %v1376 = vpop.f32.mrb[0].mxu0
          %v1377 = vadd.f32 %v1215, %v1376
          %v1378 = vpop.f32.mrb[0].mxu0
          %v1379 = vadd.f32 %v1219, %v1378
          %v1380 = vpop.f32.mrb[0].mxu0
          %v1381 = vpop.f32.mrb[0].mxu0
          %1382 = vdwg.mxu0
          %1383 = vmatprep.subr.bf16.mxu0 %v985
          %1384 = vmatpush1.bf16.msra.mxu0 %v984
          %1385 = vmatprep.subr.bf16.mxu0 %v997
          %1386 = vmatpush1.bf16.msra.mxu0 %v996
          %1387 = vmatprep.subr.bf16.mxu0 %v1009
          %1388 = vmatpush1.bf16.msra.mxu0 %v1008
          %1389 = vmatprep.subr.bf16.mxu0 %v1021
          %1390 = vmatpush1.bf16.msra.mxu0 %v1020
          %1391 = vmatprep.subr.bf16.mxu0 %v1033
          %1392 = vmatpush1.bf16.msra.mxu0 %v1032
          %1393 = vmatprep.subr.bf16.mxu0 %v1045
          %1394 = vmatpush1.bf16.msra.mxu0 %v1044
          %1395 = vmatprep.subr.bf16.mxu0 %v1057
          %1396 = vmatpush1.bf16.msra.mxu0 %v1056
          %1397 = vmatprep.subr.bf16.mxu0 %v1069
          %1398 = vmatpush1.bf16.msra.mxu0 %v1068
          %1399 = vmatprep.subr.bf16.mxu0 %v1081
          %1400 = vmatpush1.bf16.msra.mxu0 %v1080
          %1401 = vmatprep.subr.bf16.mxu0 0
          %1402 = vmatpush1.bf16.msra.mxu0 0
          %1403 = vmatprep.subr.bf16.mxu0 0
          %1404 = vmatpush1.bf16.msra.mxu0 0
          %1405 = vmatprep.subr.bf16.mxu0 0
          %1406 = vmatpush1.bf16.msra.mxu0 0
          %1407 = vmatprep.subr.bf16.mxu0 0
          %1408 = vmatpush1.bf16.msra.mxu0 0
          %1409 = vmatprep.subr.bf16.mxu0 0
          %1410 = vmatpush1.bf16.msra.mxu0 0
          %1411 = vmatprep.subr.bf16.mxu0 0
          %1412 = vmatpush1.bf16.msra.mxu0 0
          %1413 = vmatprep.subr.bf16.mxu0 0
          %1414 = vmatpush1.bf16.msra.mxu0 0
          %1415 = vmatprep.mubr.bf16.mxu0 %v1258
          %1416 = vmatmul.mubr.bf16.gmra.mrb[0].mxu0 %v645
          %v1417 = vpop.f32.mrb[0].mxu0
          %v1418 = vadd.f32 %v1223, %v1417
          %v1419 = vpop.f32.mrb[0].mxu0
          %v1420 = vadd.f32 %v1227, %v1419
          %v1421 = vpop.f32.mrb[0].mxu0
          %v1422 = vpop.f32.mrb[0].mxu0
          %1423 = vdwg.mxu0
          %1424 = vmatprep.subr.bf16.mxu0 %v987
          %1425 = vmatpush1.bf16.msra.mxu0 %v986
          %1426 = vmatprep.subr.bf16.mxu0 %v999
          %1427 = vmatpush1.bf16.msra.mxu0 %v998
          %1428 = vmatprep.subr.bf16.mxu0 %v1011
          %1429 = vmatpush1.bf16.msra.mxu0 %v1010
          %1430 = vmatprep.subr.bf16.mxu0 %v1023
          %1431 = vmatpush1.bf16.msra.mxu0 %v1022
          %1432 = vmatprep.subr.bf16.mxu0 %v1035
          %1433 = vmatpush1.bf16.msra.mxu0 %v1034
          %1434 = vmatprep.subr.bf16.mxu0 %v1047
          %1435 = vmatpush1.bf16.msra.mxu0 %v1046
          %1436 = vmatprep.subr.bf16.mxu0 %v1059
          %1437 = vmatpush1.bf16.msra.mxu0 %v1058
          %1438 = vmatprep.subr.bf16.mxu0 %v1071
          %1439 = vmatpush1.bf16.msra.mxu0 %v1070
          %1440 = vmatprep.subr.bf16.mxu0 %v1083
          %1441 = vmatpush1.bf16.msra.mxu0 %v1082
          %1442 = vmatprep.subr.bf16.mxu0 0
          %1443 = vmatpush1.bf16.msra.mxu0 0
          %1444 = vmatprep.subr.bf16.mxu0 0
          %1445 = vmatpush1.bf16.msra.mxu0 0
          %1446 = vmatprep.subr.bf16.mxu0 0
          %1447 = vmatpush1.bf16.msra.mxu0 0
          %1448 = vmatprep.subr.bf16.mxu0 0
          %1449 = vmatpush1.bf16.msra.mxu0 0
          %1450 = vmatprep.subr.bf16.mxu0 0
          %1451 = vmatpush1.bf16.msra.mxu0 0
          %1452 = vmatprep.subr.bf16.mxu0 0
          %1453 = vmatpush1.bf16.msra.mxu0 0
          %1454 = vmatprep.subr.bf16.mxu0 0
          %1455 = vmatpush1.bf16.msra.mxu0 0
          %1456 = vmatprep.mubr.bf16.mxu0 %v1258
          %1457 = vmatmul.mubr.bf16.gmra.mrb[0].mxu0 %v645
          %v1458 = vpop.f32.mrb[0].mxu0
          %v1459 = vadd.f32 %v1231, %v1458
          %v1460 = vpop.f32.mrb[0].mxu0
          %v1461 = vadd.f32 %v1235, %v1460
          %v1462 = vpop.f32.mrb[0].mxu0
          %v1463 = vpop.f32.mrb[0].mxu0
          %1464 = vdwg.mxu0
          %1465 = vmatprep.subr.bf16.mxu0 %v989
          %1466 = vmatpush1.bf16.msra.mxu0 %v988
          %1467 = vmatprep.subr.bf16.mxu0 %v1001
          %1468 = vmatpush1.bf16.msra.mxu0 %v1000
          %1469 = vmatprep.subr.bf16.mxu0 %v1013
          %1470 = vmatpush1.bf16.msra.mxu0 %v1012
          %1471 = vmatprep.subr.bf16.mxu0 %v1025
          %1472 = vmatpush1.bf16.msra.mxu0 %v1024
          %1473 = vmatprep.subr.bf16.mxu0 %v1037
          %1474 = vmatpush1.bf16.msra.mxu0 %v1036
          %1475 = vmatprep.subr.bf16.mxu0 %v1049
          %1476 = vmatpush1.bf16.msra.mxu0 %v1048
          %1477 = vmatprep.subr.bf16.mxu0 %v1061
          %1478 = vmatpush1.bf16.msra.mxu0 %v1060
          %1479 = vmatprep.subr.bf16.mxu0 %v1073
          %1480 = vmatpush1.bf16.msra.mxu0 %v1072
          %1481 = vmatprep.subr.bf16.mxu0 %v1085
          %1482 = vmatpush1.bf16.msra.mxu0 %v1084
          %1483 = vmatprep.subr.bf16.mxu0 0
          %1484 = vmatpush1.bf16.msra.mxu0 0
          %1485 = vmatprep.subr.bf16.mxu0 0
          %1486 = vmatpush1.bf16.msra.mxu0 0
          %1487 = vmatprep.subr.bf16.mxu0 0
          %1488 = vmatpush1.bf16.msra.mxu0 0
          %1489 = vmatprep.subr.bf16.mxu0 0
          %1490 = vmatpush1.bf16.msra.mxu0 0
          %1491 = vmatprep.subr.bf16.mxu0 0
          %1492 = vmatpush1.bf16.msra.mxu0 0
          %1493 = vmatprep.subr.bf16.mxu0 0
          %1494 = vmatpush1.bf16.msra.mxu0 0
          %1495 = vmatprep.subr.bf16.mxu0 0
          %1496 = vmatpush1.bf16.msra.mxu0 0
          %1497 = vmatprep.mubr.bf16.mxu0 %v1258
          %1498 = vmatmul.mubr.bf16.gmra.mrb[0].mxu0 %v645
          %v1499 = vpop.f32.mrb[0].mxu0
          %v1500 = vadd.f32 %v1239, %v1499
          %v1501 = vpop.f32.mrb[0].mxu0
          %v1502 = vadd.f32 %v1243, %v1501
          %v1503 = vpop.f32.mrb[0].mxu0
          %v1504 = vpop.f32.mrb[0].mxu0
          %1505 = vdwg.mxu0
          %v1506 = vxor.u32 %v1295, 2147483648
          %v1507 = vxor.u32 %v1297, 2147483648
          %v1508 = vxor.u32 %v1336, 2147483648
          %v1509 = vxor.u32 %v1338, 2147483648
          %v1510 = vxor.u32 %v1377, 2147483648
          %v1511 = vxor.u32 %v1379, 2147483648
          %v1512 = vxor.u32 %v1418, 2147483648
          %v1513 = vxor.u32 %v1420, 2147483648
          %v1514 = vxor.u32 %v1459, 2147483648
          %v1515 = vxor.u32 %v1461, 2147483648
          %v1516 = vxor.u32 %v1500, 2147483648
          %v1517 = vxor.u32 %v1502, 2147483648
          %v1518 = vmul.f32 %v1506, 1.442695
          %v1519 = vpow.pop %v1518
          %v1520 = vmul.f32 %v1507, 1.442695
          %v1521 = vpow.pop %v1520
          %v1522 = vmul.f32 %v1508, 1.442695
          %v1523 = vpow.pop %v1522
          %v1524 = vmul.f32 %v1509, 1.442695
          %v1525 = vpow.pop %v1524
          %v1526 = vmul.f32 %v1510, 1.442695
          %v1527 = vpow.pop %v1526
          %v1528 = vmul.f32 %v1511, 1.442695
          %v1529 = vpow.pop %v1528
          %v1530 = vmul.f32 %v1512, 1.442695
          %v1531 = vpow.pop %v1530
          %v1532 = vmul.f32 %v1513, 1.442695
          %v1533 = vpow.pop %v1532
          %v1534 = vmul.f32 %v1514, 1.442695
          %v1535 = vpow.pop %v1534
          %v1536 = vmul.f32 %v1515, 1.442695
          %v1537 = vpow.pop %v1536
          %v1538 = vmul.f32 %v1516, 1.442695
          %v1539 = vpow.pop %v1538
          %v1540 = vmul.f32 %v1517, 1.442695
          %v1541 = vpow.pop %v1540
          %v1542 = vadd.f32 %v1519, 1.0
          %v1543 = vadd.f32 %v1521, 1.0
          %v1544 = vadd.f32 %v1523, 1.0
          %v1545 = vadd.f32 %v1525, 1.0
          %v1546 = vadd.f32 %v1527, 1.0
          %v1547 = vadd.f32 %v1529, 1.0
          %v1548 = vadd.f32 %v1531, 1.0
          %v1549 = vadd.f32 %v1533, 1.0
          %v1550 = vadd.f32 %v1535, 1.0
          %v1551 = vadd.f32 %v1537, 1.0
          %v1552 = vadd.f32 %v1539, 1.0
          %v1553 = vadd.f32 %v1541, 1.0
          %v1554 = vrcp.pop %v1542
          %v1555 = vmul.f32 1.0, %v1554
          %v1556 = vrcp.pop %v1543
          %v1557 = vmul.f32 1.0, %v1556
          %v1558 = vrcp.pop %v1544
          %v1559 = vmul.f32 1.0, %v1558
          %v1560 = vrcp.pop %v1545
          %v1561 = vmul.f32 1.0, %v1560
          %v1562 = vrcp.pop %v1546
          %v1563 = vmul.f32 1.0, %v1562
          %v1564 = vrcp.pop %v1547
          %v1565 = vmul.f32 1.0, %v1564
          %v1566 = vrcp.pop %v1548
          %v1567 = vmul.f32 1.0, %v1566
          %v1568 = vrcp.pop %v1549
          %v1569 = vmul.f32 1.0, %v1568
          %v1570 = vrcp.pop %v1550
          %v1571 = vmul.f32 1.0, %v1570
          %v1572 = vrcp.pop %v1551
          %v1573 = vmul.f32 1.0, %v1572
          %v1574 = vrcp.pop %v1552
          %v1575 = vmul.f32 1.0, %v1574
          %v1576 = vrcp.pop %v1553
          %v1577 = vmul.f32 1.0, %v1576
          %v1578 = vld [vmem:[%s3] sm:$0xff]
          %v1579 = vld [vmem:[%s3 + $0x8] sm:$0xff]
          %v1580 = vld [vmem:[%s3 + $0x10] sm:$0xff]
          %v1581 = vld [vmem:[%s3 + $0x18] sm:$0xff]
          %v1582 = vld [vmem:[%s3 + $0x20] sm:$0xff]
          %v1583 = vld [vmem:[%s3 + $0x28] sm:$0xff]
          %v1584 = vld [vmem:[%s3 + $0x30] sm:$0xff]
          %v1585 = vld [vmem:[%s3 + $0x38] sm:$0xff]
          %v1586 = vld [vmem:[%s3 + $0x40] sm:$0xff]
          %v1587 = vld [vmem:[%s3 + $0x48] sm:$0xff]
          %v1588 = vld [vmem:[%s3 + $0x50] sm:$0xff]
          %v1589 = vld [vmem:[%s3 + $0x58] sm:$0xff]
          %v1590 = vld [vmem:[%s3 + $0x60] sm:$0xff]
          %v1591 = vld [vmem:[%s3 + $0x68] sm:$0xff]
          %v1592 = vld [vmem:[%s3 + $0x70] sm:$0xff]
          %v1593 = vld [vmem:[%s3 + $0x78] sm:$0xff]
          %v1594 = vld [vmem:[%s3 + $0x80] sm:$0xff]
          %v1595 = vld [vmem:[%s3 + $0x88] sm:$0xff]
          %v1596 = vld [vmem:[%s3 + $0x90] sm:$0xff]
          %v1597 = vld [vmem:[%s3 + $0x98] sm:$0xff]
          %v1598 = vld [vmem:[%s3 + $0xa0] sm:$0xff]
          %v1599 = vld [vmem:[%s3 + $0xa8] sm:$0xff]
          %v1600 = vld [vmem:[%s3 + $0xb0] sm:$0xff]
          %v1601 = vld [vmem:[%s3 + $0xb8] sm:$0xff]
          %v1602 = vld [vmem:[%s3 + $0xc0] sm:$0xff]
          %v1603 = vld [vmem:[%s3 + $0xc8] sm:$0xff]
          %v1604 = vld [vmem:[%s3 + $0xd0] sm:$0xff]
          %v1605 = vld [vmem:[%s3 + $0xd8] sm:$0xff]
          %v1606 = vld [vmem:[%s3 + $0xe0] sm:$0xff]
          %v1607 = vld [vmem:[%s3 + $0xe8] sm:$0xff]
          %v1608 = vld [vmem:[%s3 + $0xf0] sm:$0xff]
          %v1609 = vld [vmem:[%s3 + $0xf8] sm:$0xff]
          %v1610 = vld [vmem:[%s3 + $0x100] sm:$0xff]
          %v1611 = vld [vmem:[%s3 + $0x108] sm:$0xff]
          %v1612 = vld [vmem:[%s3 + $0x110] sm:$0xff]
          %v1613 = vld [vmem:[%s3 + $0x118] sm:$0xff]
          %v1614 = vld [vmem:[%s3 + $0x120] sm:$0x11]
          %v1615 = vld [vmem:[%s3 + $0x128] sm:$0x11]
          %v1616 = vld [vmem:[%s3 + $0x130] sm:$0x11]
          %v1617 = vld [vmem:[%s3 + $0x138] sm:$0x11]
          %v1618 = vld [vmem:[%s3 + $0x140] sm:$0x11]
          %v1619 = vld [vmem:[%s3 + $0x148] sm:$0x11]
          %v1620 = vunpack.c.l.bf16 %v1578
          %v1621 = vunpack.c.h.bf16 %v1578
          %v1622 = vunpack.c.l.bf16 %v1579
          %v1623 = vunpack.c.h.bf16 %v1579
          %v1624 = vunpack.c.l.bf16 %v1580
          %v1625 = vunpack.c.h.bf16 %v1580
          %v1626 = vunpack.c.l.bf16 %v1581
          %v1627 = vunpack.c.h.bf16 %v1581
          %v1628 = vunpack.c.l.bf16 %v1582
          %v1629 = vunpack.c.h.bf16 %v1582
          %v1630 = vunpack.c.l.bf16 %v1583
          %v1631 = vunpack.c.h.bf16 %v1583
          %v1632 = vunpack.c.l.bf16 %v1584
          %v1633 = vunpack.c.h.bf16 %v1584
          %v1634 = vunpack.c.l.bf16 %v1585
          %v1635 = vunpack.c.h.bf16 %v1585
          %v1636 = vunpack.c.l.bf16 %v1586
          %v1637 = vunpack.c.h.bf16 %v1586
          %v1638 = vunpack.c.l.bf16 %v1587
          %v1639 = vunpack.c.h.bf16 %v1587
          %v1640 = vunpack.c.l.bf16 %v1588
          %v1641 = vunpack.c.h.bf16 %v1588
          %v1642 = vunpack.c.l.bf16 %v1589
          %v1643 = vunpack.c.h.bf16 %v1589
          %v1644 = vunpack.c.l.bf16 %v1590
          %v1645 = vunpack.c.h.bf16 %v1590
          %v1646 = vunpack.c.l.bf16 %v1591
          %v1647 = vunpack.c.h.bf16 %v1591
          %v1648 = vunpack.c.l.bf16 %v1592
          %v1649 = vunpack.c.h.bf16 %v1592
          %v1650 = vunpack.c.l.bf16 %v1593
          %v1651 = vunpack.c.h.bf16 %v1593
          %v1652 = vunpack.c.l.bf16 %v1594
          %v1653 = vunpack.c.h.bf16 %v1594
          %v1654 = vunpack.c.l.bf16 %v1595
          %v1655 = vunpack.c.h.bf16 %v1595
          %v1656 = vunpack.c.l.bf16 %v1596
          %v1657 = vunpack.c.h.bf16 %v1596
          %v1658 = vunpack.c.l.bf16 %v1597
          %v1659 = vunpack.c.h.bf16 %v1597
          %v1660 = vunpack.c.l.bf16 %v1598
          %v1661 = vunpack.c.h.bf16 %v1598
          %v1662 = vunpack.c.l.bf16 %v1599
          %v1663 = vunpack.c.h.bf16 %v1599
          %v1664 = vunpack.c.l.bf16 %v1600
          %v1665 = vunpack.c.h.bf16 %v1600
          %v1666 = vunpack.c.l.bf16 %v1601
          %v1667 = vunpack.c.h.bf16 %v1601
          %v1668 = vunpack.c.l.bf16 %v1602
          %v1669 = vunpack.c.h.bf16 %v1602
          %v1670 = vunpack.c.l.bf16 %v1603
          %v1671 = vunpack.c.h.bf16 %v1603
          %v1672 = vunpack.c.l.bf16 %v1604
          %v1673 = vunpack.c.h.bf16 %v1604
          %v1674 = vunpack.c.l.bf16 %v1605
          %v1675 = vunpack.c.h.bf16 %v1605
          %v1676 = vunpack.c.l.bf16 %v1606
          %v1677 = vunpack.c.h.bf16 %v1606
          %v1678 = vunpack.c.l.bf16 %v1607
          %v1679 = vunpack.c.h.bf16 %v1607
          %v1680 = vunpack.c.l.bf16 %v1608
          %v1681 = vunpack.c.h.bf16 %v1608
          %v1682 = vunpack.c.l.bf16 %v1609
          %v1683 = vunpack.c.h.bf16 %v1609
          %v1684 = vunpack.c.l.bf16 %v1610
          %v1685 = vunpack.c.h.bf16 %v1610
          %v1686 = vunpack.c.l.bf16 %v1611
          %v1687 = vunpack.c.h.bf16 %v1611
          %v1688 = vunpack.c.l.bf16 %v1612
          %v1689 = vunpack.c.h.bf16 %v1612
          %v1690 = vunpack.c.l.bf16 %v1613
          %v1691 = vunpack.c.h.bf16 %v1613
          %v1692 = vunpack.c.l.bf16 %v1614
          %v1693 = vunpack.c.h.bf16 %v1614
          %v1694 = vunpack.c.l.bf16 %v1615
          %v1695 = vunpack.c.h.bf16 %v1615
          %v1696 = vunpack.c.l.bf16 %v1616
          %v1697 = vunpack.c.h.bf16 %v1616
          %v1698 = vunpack.c.l.bf16 %v1617
          %v1699 = vunpack.c.h.bf16 %v1617
          %v1700 = vunpack.c.l.bf16 %v1618
          %v1701 = vunpack.c.h.bf16 %v1618
          %v1702 = vunpack.c.l.bf16 %v1619
          %v1703 = vunpack.c.h.bf16 %v1619
          %v1704 = vlaneseq
          %v1705 = vshrl.u32 %v1704, 7
          %v1706 = vsub.s32 0, %v1705
          %v1707 = vrot.slane %v1555, %v1706
          %v1708 = vlaneseq
          %v1709 = vshrl.u32 %v1708, 7
          %v1710 = vsub.s32 0, %v1709
          %v1711 = vrot.slane %v1557, %v1710
          %v1712 = vlaneseq
          %v1713 = vshrl.u32 %v1712, 7
          %v1714 = vsub.s32 0, %v1713
          %v1715 = vrot.slane %v1559, %v1714
          %v1716 = vlaneseq
          %v1717 = vshrl.u32 %v1716, 7
          %v1718 = vsub.s32 0, %v1717
          %v1719 = vrot.slane %v1561, %v1718
          %v1720 = vlaneseq
          %v1721 = vshrl.u32 %v1720, 7
          %v1722 = vsub.s32 0, %v1721
          %v1723 = vrot.slane %v1563, %v1722
          %v1724 = vlaneseq
          %v1725 = vshrl.u32 %v1724, 7
          %v1726 = vsub.s32 0, %v1725
          %v1727 = vrot.slane %v1565, %v1726
          %v1728 = vlaneseq
          %v1729 = vshrl.u32 %v1728, 7
          %v1730 = vsub.s32 0, %v1729
          %v1731 = vrot.slane %v1567, %v1730
          %v1732 = vlaneseq
          %v1733 = vshrl.u32 %v1732, 7
          %v1734 = vsub.s32 0, %v1733
          %v1735 = vrot.slane %v1569, %v1734
          %v1736 = vlaneseq
          %v1737 = vshrl.u32 %v1736, 7
          %v1738 = vsub.s32 0, %v1737
          %v1739 = vrot.slane %v1571, %v1738
          %v1740 = vlaneseq
          %v1741 = vshrl.u32 %v1740, 7
          %v1742 = vsub.s32 0, %v1741
          %v1743 = vrot.slane %v1573, %v1742
          %v1744 = vlaneseq
          %v1745 = vshrl.u32 %v1744, 7
          %v1746 = vsub.s32 0, %v1745
          %v1747 = vrot.slane %v1575, %v1746
          %v1748 = vlaneseq
          %v1749 = vshrl.u32 %v1748, 7
          %v1750 = vsub.s32 0, %v1749
          %v1751 = vrot.slane %v1577, %v1750
          %v1752 = vmul.f32 %v1707, %v1620
          %v1753 = vmul.f32 %v1711, %v1621
          %v1754 = vmul.f32 %v1715, %v1622
          %v1755 = vmul.f32 %v1719, %v1623
          %v1756 = vmul.f32 %v1723, %v1624
          %v1757 = vmul.f32 %v1727, %v1625
          %v1758 = vmul.f32 %v1731, %v1626
          %v1759 = vmul.f32 %v1735, %v1627
          %v1760 = vmul.f32 %v1739, %v1628
          %v1761 = vmul.f32 %v1743, %v1629
          %v1762 = vmul.f32 %v1747, %v1630
          %v1763 = vmul.f32 %v1751, %v1631
          %v1764 = vmul.f32 %v1707, %v1632
          %v1765 = vmul.f32 %v1711, %v1633
          %v1766 = vmul.f32 %v1715, %v1634
          %v1767 = vmul.f32 %v1719, %v1635
          %v1768 = vmul.f32 %v1723, %v1636
          %v1769 = vmul.f32 %v1727, %v1637
          %v1770 = vmul.f32 %v1731, %v1638
          %v1771 = vmul.f32 %v1735, %v1639
          %v1772 = vmul.f32 %v1739, %v1640
          %v1773 = vmul.f32 %v1743, %v1641
          %v1774 = vmul.f32 %v1747, %v1642
          %v1775 = vmul.f32 %v1751, %v1643
          %v1776 = vmul.f32 %v1707, %v1644
          %v1777 = vmul.f32 %v1711, %v1645
          %v1778 = vmul.f32 %v1715, %v1646
          %v1779 = vmul.f32 %v1719, %v1647
          %v1780 = vmul.f32 %v1723, %v1648
          %v1781 = vmul.f32 %v1727, %v1649
          %v1782 = vmul.f32 %v1731, %v1650
          %v1783 = vmul.f32 %v1735, %v1651
          %v1784 = vmul.f32 %v1739, %v1652
          %v1785 = vmul.f32 %v1743, %v1653
          %v1786 = vmul.f32 %v1747, %v1654
          %v1787 = vmul.f32 %v1751, %v1655
          %v1788 = vmul.f32 %v1707, %v1656
          %v1789 = vmul.f32 %v1711, %v1657
          %v1790 = vmul.f32 %v1715, %v1658
          %v1791 = vmul.f32 %v1719, %v1659
          %v1792 = vmul.f32 %v1723, %v1660
          %v1793 = vmul.f32 %v1727, %v1661
          %v1794 = vmul.f32 %v1731, %v1662
          %v1795 = vmul.f32 %v1735, %v1663
          %v1796 = vmul.f32 %v1739, %v1664
          %v1797 = vmul.f32 %v1743, %v1665
          %v1798 = vmul.f32 %v1747, %v1666
          %v1799 = vmul.f32 %v1751, %v1667
          %v1800 = vmul.f32 %v1707, %v1668
          %v1801 = vmul.f32 %v1711, %v1669
          %v1802 = vmul.f32 %v1715, %v1670
          %v1803 = vmul.f32 %v1719, %v1671
          %v1804 = vmul.f32 %v1723, %v1672
          %v1805 = vmul.f32 %v1727, %v1673
          %v1806 = vmul.f32 %v1731, %v1674
          %v1807 = vmul.f32 %v1735, %v1675
          %v1808 = vmul.f32 %v1739, %v1676
          %v1809 = vmul.f32 %v1743, %v1677
          %v1810 = vmul.f32 %v1747, %v1678
          %v1811 = vmul.f32 %v1751, %v1679
          %v1812 = vmul.f32 %v1707, %v1680
          %v1813 = vmul.f32 %v1711, %v1681
          %v1814 = vmul.f32 %v1715, %v1682
          %v1815 = vmul.f32 %v1719, %v1683
          %v1816 = vmul.f32 %v1723, %v1684
          %v1817 = vmul.f32 %v1727, %v1685
          %v1818 = vmul.f32 %v1731, %v1686
          %v1819 = vmul.f32 %v1735, %v1687
          %v1820 = vmul.f32 %v1739, %v1688
          %v1821 = vmul.f32 %v1743, %v1689
          %v1822 = vmul.f32 %v1747, %v1690
          %v1823 = vmul.f32 %v1751, %v1691
          %v1824 = vmul.f32 %v1707, %v1692
          %v1825 = vmul.f32 %v1711, %v1693
          %v1826 = vmul.f32 %v1715, %v1694
          %v1827 = vmul.f32 %v1719, %v1695
          %v1828 = vmul.f32 %v1723, %v1696
          %v1829 = vmul.f32 %v1727, %v1697
          %v1830 = vmul.f32 %v1731, %v1698
          %v1831 = vmul.f32 %v1735, %v1699
          %v1832 = vmul.f32 %v1739, %v1700
          %v1833 = vmul.f32 %v1743, %v1701
          %v1834 = vmul.f32 %v1747, %v1702
          %v1835 = vmul.f32 %v1751, %v1703
          %v1836 = vpack.c.bf16 %v1764, %v1752
          %v1837 = vpack.c.bf16 %v1765, %v1753
          %v1838 = vpack.c.bf16 %v1766, %v1754
          %v1839 = vpack.c.bf16 %v1767, %v1755
          %v1840 = vpack.c.bf16 %v1768, %v1756
          %v1841 = vpack.c.bf16 %v1769, %v1757
          %v1842 = vpack.c.bf16 %v1770, %v1758
          %v1843 = vpack.c.bf16 %v1771, %v1759
          %v1844 = vpack.c.bf16 %v1772, %v1760
          %v1845 = vpack.c.bf16 %v1773, %v1761
          %v1846 = vpack.c.bf16 %v1774, %v1762
          %v1847 = vpack.c.bf16 %v1775, %v1763
          %v1848 = vpack.c.bf16 %v1788, %v1776
          %v1849 = vpack.c.bf16 %v1789, %v1777
          %v1850 = vpack.c.bf16 %v1790, %v1778
          %v1851 = vpack.c.bf16 %v1791, %v1779
          %v1852 = vpack.c.bf16 %v1792, %v1780
          %v1853 = vpack.c.bf16 %v1793, %v1781
          %v1854 = vpack.c.bf16 %v1794, %v1782
          %v1855 = vpack.c.bf16 %v1795, %v1783
          %v1856 = vpack.c.bf16 %v1796, %v1784
          %v1857 = vpack.c.bf16 %v1797, %v1785
          %v1858 = vpack.c.bf16 %v1798, %v1786
          %v1859 = vpack.c.bf16 %v1799, %v1787
          %v1860 = vpack.c.bf16 %v1812, %v1800
          %v1861 = vpack.c.bf16 %v1813, %v1801
          %v1862 = vpack.c.bf16 %v1814, %v1802
          %v1863 = vpack.c.bf16 %v1815, %v1803
          %v1864 = vpack.c.bf16 %v1816, %v1804
          %v1865 = vpack.c.bf16 %v1817, %v1805
          %v1866 = vpack.c.bf16 %v1818, %v1806
          %v1867 = vpack.c.bf16 %v1819, %v1807
          %v1868 = vpack.c.bf16 %v1820, %v1808
          %v1869 = vpack.c.bf16 %v1821, %v1809
          %v1870 = vpack.c.bf16 %v1822, %v1810
          %v1871 = vpack.c.bf16 %v1823, %v1811
          %v1872 = vpack.c.bf16 %v1824, %v1824
          %v1873 = vpack.c.bf16 %v1825, %v1825
          %v1874 = vpack.c.bf16 %v1826, %v1826
          %v1875 = vpack.c.bf16 %v1827, %v1827
          %v1876 = vpack.c.bf16 %v1828, %v1828
          %v1877 = vpack.c.bf16 %v1829, %v1829
          %v1878 = vpack.c.bf16 %v1830, %v1830
          %v1879 = vpack.c.bf16 %v1831, %v1831
          %v1880 = vpack.c.bf16 %v1832, %v1832
          %v1881 = vpack.c.bf16 %v1833, %v1833
          %v1882 = vpack.c.bf16 %v1834, %v1834
          %v1883 = vpack.c.bf16 %v1835, %v1835
          %v1932 = vunpack.c.l.b16 %v1836
          %v1933 = vunpack.c.l.b16 %v1837
          %v1934 = vunpack.c.l.b16 %v1838
          %v1935 = vunpack.c.l.b16 %v1839
          %v1936 = vunpack.c.l.b16 %v1840
          %v1937 = vunpack.c.l.b16 %v1841
          %v1938 = vunpack.c.l.b16 %v1842
          %v1939 = vunpack.c.l.b16 %v1843
          %v1940 = vunpack.c.l.b16 %v1844
          %v1941 = vunpack.c.l.b16 %v1845
          %v1942 = vunpack.c.l.b16 %v1846
          %v1943 = vunpack.c.l.b16 %v1847
          %v1944 = vunpack.c.h.b16 %v1836
          %v1945 = vunpack.c.h.b16 %v1837
          %v1946 = vunpack.c.h.b16 %v1838
          %v1947 = vunpack.c.h.b16 %v1839
          %v1948 = vunpack.c.h.b16 %v1840
          %v1949 = vunpack.c.h.b16 %v1841
          %v1950 = vunpack.c.h.b16 %v1842
          %v1951 = vunpack.c.h.b16 %v1843
          %v1952 = vunpack.c.h.b16 %v1844
          %v1953 = vunpack.c.h.b16 %v1845
          %v1954 = vunpack.c.h.b16 %v1846
          %v1955 = vunpack.c.h.b16 %v1847
          %v1956 = vunpack.c.l.b16 %v1848
          %v1957 = vunpack.c.l.b16 %v1849
          %v1958 = vunpack.c.l.b16 %v1850
          %v1959 = vunpack.c.l.b16 %v1851
          %v1960 = vunpack.c.l.b16 %v1852
          %v1961 = vunpack.c.l.b16 %v1853
          %v1962 = vunpack.c.l.b16 %v1854
          %v1963 = vunpack.c.l.b16 %v1855
          %v1964 = vunpack.c.l.b16 %v1856
          %v1965 = vunpack.c.l.b16 %v1857
          %v1966 = vunpack.c.l.b16 %v1858
          %v1967 = vunpack.c.l.b16 %v1859
          %v1968 = vunpack.c.h.b16 %v1848
          %v1969 = vunpack.c.h.b16 %v1849
          %v1970 = vunpack.c.h.b16 %v1850
          %v1971 = vunpack.c.h.b16 %v1851
          %v1972 = vunpack.c.h.b16 %v1852
          %v1973 = vunpack.c.h.b16 %v1853
          %v1974 = vunpack.c.h.b16 %v1854
          %v1975 = vunpack.c.h.b16 %v1855
          %v1976 = vunpack.c.h.b16 %v1856
          %v1977 = vunpack.c.h.b16 %v1857
          %v1978 = vunpack.c.h.b16 %v1858
          %v1979 = vunpack.c.h.b16 %v1859
          %v1980 = vunpack.c.l.b16 %v1860
          %v1981 = vunpack.c.l.b16 %v1861
          %v1982 = vunpack.c.l.b16 %v1862
          %v1983 = vunpack.c.l.b16 %v1863
          %v1984 = vunpack.c.l.b16 %v1864
          %v1985 = vunpack.c.l.b16 %v1865
          %v1986 = vunpack.c.l.b16 %v1866
          %v1987 = vunpack.c.l.b16 %v1867
          %v1988 = vunpack.c.l.b16 %v1868
          %v1989 = vunpack.c.l.b16 %v1869
          %v1990 = vunpack.c.l.b16 %v1870
          %v1991 = vunpack.c.l.b16 %v1871
          %v1992 = vunpack.c.h.b16 %v1860
          %v1993 = vunpack.c.h.b16 %v1861
          %v1994 = vunpack.c.h.b16 %v1862
          %v1995 = vunpack.c.h.b16 %v1863
          %v1996 = vunpack.c.h.b16 %v1864
          %v1997 = vunpack.c.h.b16 %v1865
          %v1998 = vunpack.c.h.b16 %v1866
          %v1999 = vunpack.c.h.b16 %v1867
          %v2000 = vunpack.c.h.b16 %v1868
          %v2001 = vunpack.c.h.b16 %v1869
          %v2002 = vunpack.c.h.b16 %v1870
          %v2003 = vunpack.c.h.b16 %v1871
          %v2004 = vunpack.c.l.b16 %v1872
          %v2005 = vunpack.c.l.b16 %v1873
          %v2006 = vunpack.c.l.b16 %v1874
          %v2007 = vunpack.c.l.b16 %v1875
          %v2008 = vunpack.c.l.b16 %v1876
          %v2009 = vunpack.c.l.b16 %v1877
          %v2010 = vunpack.c.l.b16 %v1878
          %v2011 = vunpack.c.l.b16 %v1879
          %v2012 = vunpack.c.l.b16 %v1880
          %v2013 = vunpack.c.l.b16 %v1881
          %v2014 = vunpack.c.l.b16 %v1882
          %v2015 = vunpack.c.l.b16 %v1883
          %v2016 = vpack.c.b16 %v1933, %v1932
          %v2017 = vpack.c.b16 %v1935, %v1934
          %v2018 = vpack.c.b16 %v1937, %v1936
          %v2019 = vpack.c.b16 %v1939, %v1938
          %v2020 = vpack.c.b16 %v1941, %v1940
          %v2021 = vpack.c.b16 %v1943, %v1942
          %v2022 = vpack.c.b16 %v1945, %v1944
          %v2023 = vpack.c.b16 %v1947, %v1946
          %v2024 = vpack.c.b16 %v1949, %v1948
          %v2025 = vpack.c.b16 %v1951, %v1950
          %v2026 = vpack.c.b16 %v1953, %v1952
          %v2027 = vpack.c.b16 %v1955, %v1954
          %v2028 = vpack.c.b16 %v1957, %v1956
          %v2029 = vpack.c.b16 %v1959, %v1958
          %v2030 = vpack.c.b16 %v1961, %v1960
          %v2031 = vpack.c.b16 %v1963, %v1962
          %v2032 = vpack.c.b16 %v1965, %v1964
          %v2033 = vpack.c.b16 %v1967, %v1966
          %v2034 = vpack.c.b16 %v1969, %v1968
          %v2035 = vpack.c.b16 %v1971, %v1970
          %v2036 = vpack.c.b16 %v1973, %v1972
          %v2037 = vpack.c.b16 %v1975, %v1974
          %v2038 = vpack.c.b16 %v1977, %v1976
          %v2039 = vpack.c.b16 %v1979, %v1978
          %v2040 = vpack.c.b16 %v1981, %v1980
          %v2041 = vpack.c.b16 %v1983, %v1982
          %v2042 = vpack.c.b16 %v1985, %v1984
          %v2043 = vpack.c.b16 %v1987, %v1986
          %v2044 = vpack.c.b16 %v1989, %v1988
          %v2045 = vpack.c.b16 %v1991, %v1990
          %v2046 = vpack.c.b16 %v1993, %v1992
          %v2047 = vpack.c.b16 %v1995, %v1994
          %v2048 = vpack.c.b16 %v1997, %v1996
          %v2049 = vpack.c.b16 %v1999, %v1998
          %v2050 = vpack.c.b16 %v2001, %v2000
          %v2051 = vpack.c.b16 %v2003, %v2002
          %v2052 = vpack.c.b16 %v2005, %v2004
          %v2053 = vpack.c.b16 %v2007, %v2006
          %v2054 = vpack.c.b16 %v2009, %v2008
          %v2055 = vpack.c.b16 %v2011, %v2010
          %v2056 = vpack.c.b16 %v2013, %v2012
          %v2057 = vpack.c.b16 %v2015, %v2014
          %2100 = vst [vmem:[#allocation2] sm:$0xff] %v2016
          %2101 = vst [vmem:[#allocation2 + $0x8] sm:$0xff] %v2017
          %2102 = vst [vmem:[#allocation2 + $0x10] sm:$0xff] %v2018
          %2103 = vst [vmem:[#allocation2 + $0x18] sm:$0xff] %v2019
          %2104 = vst [vmem:[#allocation2 + $0x20] sm:$0xff] %v2020
          %vm2105 = vcmask 1043456
          %vm2106 = vcmask 850948
          %vm2107 = vmor %vm2106, %vm2105
          %2108 = vst.msk [vmem:[#allocation2 + $0x28] sm:$0xff] %vm2107, %v2021
          %2109 = vst [vmem:[#allocation2 + $0x30] sm:$0xff] %v2022
          %2110 = vst [vmem:[#allocation2 + $0x38] sm:$0xff] %v2023
          %2111 = vst [vmem:[#allocation2 + $0x40] sm:$0xff] %v2024
          %2112 = vst [vmem:[#allocation2 + $0x48] sm:$0xff] %v2025
          %2113 = vst [vmem:[#allocation2 + $0x50] sm:$0xff] %v2026
          %2114 = vst.msk [vmem:[#allocation2 + $0x58] sm:$0xff] %vm2107, %v2027
          %2115 = vst [vmem:[#allocation2 + $0x60] sm:$0xff] %v2028
          %2116 = vst [vmem:[#allocation2 + $0x68] sm:$0xff] %v2029
          %2117 = vst [vmem:[#allocation2 + $0x70] sm:$0xff] %v2030
          %2118 = vst [vmem:[#allocation2 + $0x78] sm:$0xff] %v2031
          %2119 = vst [vmem:[#allocation2 + $0x80] sm:$0xff] %v2032
          %2120 = vst.msk [vmem:[#allocation2 + $0x88] sm:$0xff] %vm2107, %v2033
          %2121 = vst [vmem:[#allocation2 + $0x90] sm:$0xff] %v2034
          %2122 = vst [vmem:[#allocation2 + $0x98] sm:$0xff] %v2035
          %2123 = vst [vmem:[#allocation2 + $0xa0] sm:$0xff] %v2036
          %2124 = vst [vmem:[#allocation2 + $0xa8] sm:$0xff] %v2037
          %2125 = vst [vmem:[#allocation2 + $0xb0] sm:$0xff] %v2038
          %2126 = vst.msk [vmem:[#allocation2 + $0xb8] sm:$0xff] %vm2107, %v2039
          %2127 = vst [vmem:[#allocation2 + $0xc0] sm:$0xff] %v2040
          %2128 = vst [vmem:[#allocation2 + $0xc8] sm:$0xff] %v2041
          %2129 = vst [vmem:[#allocation2 + $0xd0] sm:$0xff] %v2042
          %2130 = vst [vmem:[#allocation2 + $0xd8] sm:$0xff] %v2043
          %2131 = vst [vmem:[#allocation2 + $0xe0] sm:$0xff] %v2044
          %2132 = vst.msk [vmem:[#allocation2 + $0xe8] sm:$0xff] %vm2107, %v2045
          %2133 = vst [vmem:[#allocation2 + $0xf0] sm:$0xff] %v2046
          %2134 = vst [vmem:[#allocation2 + $0xf8] sm:$0xff] %v2047
          %2135 = vst [vmem:[#allocation2 + $0x100] sm:$0xff] %v2048
          %2136 = vst [vmem:[#allocation2 + $0x108] sm:$0xff] %v2049
          %2137 = vst [vmem:[#allocation2 + $0x110] sm:$0xff] %v2050
          %2138 = vst.msk [vmem:[#allocation2 + $0x118] sm:$0xff] %vm2107, %v2051
          %vm2139 = vcmask 1040384
          %vm2140 = vsmask.f32 256
          %vm2141 = vmand %vm2139, %vm2140
          %vm2142 = vcmask 1044484
          %vm2143 = vsmask.f32 4352
          %vm2144 = vmand %vm2142, %vm2143
          %vm2145 = vmor %vm2144, %vm2141
          %v2146 = vld [vmem:[#allocation2 + $0x120] sm:$0x11]
          %v2147 = vsel %vm2145, %v2052, %v2146
          %2148 = vst [vmem:[#allocation2 + $0x120] sm:$0x11] %v2147
          %v2149 = vld [vmem:[#allocation2 + $0x128] sm:$0x11]
          %v2150 = vsel %vm2145, %v2053, %v2149
          %2151 = vst [vmem:[#allocation2 + $0x128] sm:$0x11] %v2150
          %v2152 = vld [vmem:[#allocation2 + $0x130] sm:$0x11]
          %v2153 = vsel %vm2145, %v2054, %v2152
          %2154 = vst [vmem:[#allocation2 + $0x130] sm:$0x11] %v2153
          %v2155 = vld [vmem:[#allocation2 + $0x138] sm:$0x11]
          %v2156 = vsel %vm2145, %v2055, %v2155
          %2157 = vst [vmem:[#allocation2 + $0x138] sm:$0x11] %v2156
          %v2158 = vld [vmem:[#allocation2 + $0x140] sm:$0x11]
          %v2159 = vsel %vm2145, %v2056, %v2158
          %2160 = vst [vmem:[#allocation2 + $0x140] sm:$0x11] %v2159
          %vm2161 = vcmask 847876
          %vm2162 = vmand %vm2161, %vm2143
          %vm2163 = vmor %vm2162, %vm2141
          %v2164 = vld [vmem:[#allocation2 + $0x148] sm:$0x11]
          %v2165 = vsel %vm2163, %v2057, %v2164
          %2166 = vst [vmem:[#allocation2 + $0x148] sm:$0x11] %v2165
        $region99: #{se_conv_bn_add.1} parent=70 // pred_fallthru
          _
        %v2167 = vld [vmem:[#allocation2] sm:$0xff]
        %v2168 = vld [vmem:[#allocation2 + $0x8] sm:$0xff]
        %v2169 = vld [vmem:[#allocation2 + $0x10] sm:$0xff]
        %v2170 = vld [vmem:[#allocation2 + $0x18] sm:$0xff]
        %v2171 = vld [vmem:[#allocation2 + $0x20] sm:$0xff]
        %v2172 = vld [vmem:[#allocation2 + $0x28] sm:$0xff]
        %v2173 = vld [vmem:[#allocation2 + $0x30] sm:$0xff]
        %v2174 = vld [vmem:[#allocation2 + $0x38] sm:$0xff]
        %v2175 = vld [vmem:[#allocation2 + $0x40] sm:$0xff]
        %v2176 = vld [vmem:[#allocation2 + $0x48] sm:$0xff]
        %v2177 = vld [vmem:[#allocation2 + $0x50] sm:$0xff]
        %v2178 = vld [vmem:[#allocation2 + $0x58] sm:$0xff]
        %v2179 = vld [vmem:[#allocation2 + $0x60] sm:$0xff]
        %v2180 = vld [vmem:[#allocation2 + $0x68] sm:$0xff]
        %v2181 = vld [vmem:[#allocation2 + $0x70] sm:$0xff]
        %v2182 = vld [vmem:[#allocation2 + $0x78] sm:$0xff]
        %v2183 = vld [vmem:[#allocation2 + $0x80] sm:$0xff]
        %v2184 = vld [vmem:[#allocation2 + $0x88] sm:$0xff]
        %v2185 = vld [vmem:[#allocation2 + $0x90] sm:$0xff]
        %v2186 = vld [vmem:[#allocation2 + $0x98] sm:$0xff]
        %v2187 = vld [vmem:[#allocation2 + $0xa0] sm:$0xff]
        %v2188 = vld [vmem:[#allocation2 + $0xa8] sm:$0xff]
        %v2189 = vld [vmem:[#allocation2 + $0xb0] sm:$0xff]
        %v2190 = vld [vmem:[#allocation2 + $0xb8] sm:$0xff]
        %v2191 = vld [vmem:[#allocation2 + $0xc0] sm:$0xff]
        %v2192 = vld [vmem:[#allocation2 + $0xc8] sm:$0xff]
        %v2193 = vld [vmem:[#allocation2 + $0xd0] sm:$0xff]
        %v2194 = vld [vmem:[#allocation2 + $0xd8] sm:$0xff]
        %v2195 = vld [vmem:[#allocation2 + $0xe0] sm:$0xff]
        %v2196 = vld [vmem:[#allocation2 + $0xe8] sm:$0xff]
        %v2197 = vld [vmem:[#allocation2 + $0xf0] sm:$0xff]
        %v2198 = vld [vmem:[#allocation2 + $0xf8] sm:$0xff]
        %v2199 = vld [vmem:[#allocation2 + $0x100] sm:$0xff]
        %v2200 = vld [vmem:[#allocation2 + $0x108] sm:$0xff]
        %v2201 = vld [vmem:[#allocation2 + $0x110] sm:$0xff]
        %v2202 = vld [vmem:[#allocation2 + $0x118] sm:$0xff]
        %v2203 = vld [vmem:[#allocation2 + $0x120] sm:$0x11]
        %v2204 = vld [vmem:[#allocation2 + $0x128] sm:$0x11]
        %v2205 = vld [vmem:[#allocation2 + $0x130] sm:$0x11]
        %v2206 = vld [vmem:[#allocation2 + $0x138] sm:$0x11]
        %v2207 = vld [vmem:[#allocation2 + $0x140] sm:$0x11]
        %v2208 = vld [vmem:[#allocation2 + $0x148] sm:$0x11]
        %v2209 = vld [vmem:[%s438] sm:$0xff]
        %v2210 = vld [vmem:[%s438 + $0x8] sm:$0xff]
        %v2211 = vld [vmem:[%s438 + $0x10] sm:$0xff]
        %v2212 = vld [vmem:[%s438 + $0x18] sm:$0xff]
        %v2213 = vld [vmem:[%s438 + $0x20] sm:$0xff]
        %v2214 = vld [vmem:[%s438 + $0x28] sm:$0xff]
        %v2215 = vld [vmem:[%s438 + $0x30] sm:$0xff]
        %v2216 = vld [vmem:[%s438 + $0x38] sm:$0xff]
        %v2217 = vld [vmem:[%s438 + $0x40] sm:$0xff]
        %v2218 = vld [vmem:[%s438 + $0x48] sm:$0xff]
        %v2219 = vld [vmem:[%s438 + $0x50] sm:$0xff]
        %v2220 = vld [vmem:[%s438 + $0x58] sm:$0xff]
        %v2221 = vld [vmem:[%s438 + $0x60] sm:$0xff]
        %v2222 = vld [vmem:[%s438 + $0x68] sm:$0xff]
        %v2223 = vld [vmem:[%s438 + $0x70] sm:$0xff]
        %v2224 = vld [vmem:[%s438 + $0x78] sm:$0xff]
        %v2225 = vld [vmem:[%s438 + $0x80] sm:$0xff]
        %v2226 = vld [vmem:[%s438 + $0x88] sm:$0xff]
        %v2227 = vld [vmem:[%s438 + $0x90] sm:$0xff]
        %v2228 = vld [vmem:[%s438 + $0x98] sm:$0xff]
        %v2229 = vld [vmem:[%s438 + $0xa0] sm:$0xff]
        %v2230 = vld [vmem:[%s438 + $0xa8] sm:$0xff]
        %v2231 = vld [vmem:[%s438 + $0xb0] sm:$0xff]
        %v2232 = vld [vmem:[%s438 + $0xb8] sm:$0xff]
        %v2233 = vld [vmem:[%s438 + $0xc0] sm:$0xff]
        %v2234 = vld [vmem:[%s438 + $0xc8] sm:$0xff]
        %v2235 = vld [vmem:[%s438 + $0xd0] sm:$0xff]
        %v2236 = vld [vmem:[%s438 + $0xd8] sm:$0xff]
        %v2237 = vld [vmem:[%s438 + $0xe0] sm:$0xff]
        %v2238 = vld [vmem:[%s438 + $0xe8] sm:$0xff]
        %v2239 = vld [vmem:[%s438 + $0xf0] sm:$0xff]
        %v2240 = vld [vmem:[%s438 + $0xf8] sm:$0xff]
        %v2241 = vld [vmem:[%s438 + $0x100] sm:$0xff]
        %v2242 = vld [vmem:[%s438 + $0x108] sm:$0xff]
        %v2243 = vld [vmem:[%s438 + $0x110] sm:$0xff]
        %v2244 = vld [vmem:[%s438 + $0x118] sm:$0xff]
        %v2245 = vld [vmem:[%s438 + $0x120] sm:$0xff]
        %v2246 = vld [vmem:[%s438 + $0x128] sm:$0xff]
        %v2247 = vld [vmem:[%s438 + $0x130] sm:$0xff]
        %v2248 = vld [vmem:[%s438 + $0x138] sm:$0xff]
        %v2249 = vld [vmem:[%s438 + $0x140] sm:$0xff]
        %v2250 = vld [vmem:[%s438 + $0x148] sm:$0xff]
        %v2251 = vld [vmem:[%s438 + $0x150] sm:$0xff]
        %v2252 = vld [vmem:[%s438 + $0x158] sm:$0xff]
        %v2253 = vld [vmem:[%s438 + $0x160] sm:$0xff]
        %v2254 = vld [vmem:[%s438 + $0x168] sm:$0xff]
        %v2255 = vld [vmem:[%s438 + $0x170] sm:$0xff]
        %v2256 = vld [vmem:[%s438 + $0x178] sm:$0xff]
        %v2257 = vld [vmem:[%s438 + $0x180] sm:$0xff]
        %v2258 = vld [vmem:[%s438 + $0x188] sm:$0xff]
        %v2259 = vld [vmem:[%s438 + $0x190] sm:$0xff]
        %v2260 = vld [vmem:[%s438 + $0x198] sm:$0xff]
        %v2261 = vld [vmem:[%s438 + $0x1a0] sm:$0xff]
        %v2262 = vld [vmem:[%s438 + $0x1a8] sm:$0xff]
        %v2263 = vld [vmem:[%s438 + $0x1b0] sm:$0xff]
        %v2264 = vld [vmem:[%s438 + $0x1b8] sm:$0xff]
        %v2265 = vld [vmem:[%s438 + $0x1c0] sm:$0xff]
        %v2266 = vld [vmem:[%s438 + $0x1c8] sm:$0xff]
        %v2267 = vld [vmem:[%s438 + $0x1d0] sm:$0xff]
        %v2268 = vld [vmem:[%s438 + $0x1d8] sm:$0xff]
        %v2269 = vld [vmem:[%s438 + $0x1e0] sm:$0xff]
        %v2270 = vld [vmem:[%s438 + $0x1e8] sm:$0xff]
        %v2271 = vld [vmem:[%s438 + $0x1f0] sm:$0xff]
        %v2272 = vld [vmem:[%s438 + $0x1f8] sm:$0xff]
        %v2273 = vld [vmem:[%s438 + $0x200] sm:$0xff]
        %v2274 = vld [vmem:[%s438 + $0x208] sm:$0xff]
        %v2275 = vld [vmem:[%s438 + $0x210] sm:$0xff]
        %v2276 = vld [vmem:[%s438 + $0x218] sm:$0xff]
        %v2277 = vld [vmem:[%s438 + $0x220] sm:$0xff]
        %v2278 = vld [vmem:[%s438 + $0x228] sm:$0xff]
        %v2279 = vld [vmem:[%s438 + $0x230] sm:$0xff]
        %v2280 = vld [vmem:[%s438 + $0x238] sm:$0xff]
        %v2281 = vld [vmem:[%s438 + $0x240] sm:$0xff]
        %v2282 = vld [vmem:[%s438 + $0x248] sm:$0xff]
        %v2283 = vld [vmem:[%s438 + $0x250] sm:$0xff]
        %v2284 = vld [vmem:[%s438 + $0x258] sm:$0xff]
        %v2285 = vld [vmem:[%s438 + $0x260] sm:$0xff]
        %v2286 = vld [vmem:[%s438 + $0x268] sm:$0xff]
        %v2287 = vld [vmem:[%s438 + $0x270] sm:$0xff]
        %v2288 = vld [vmem:[%s438 + $0x278] sm:$0xff]
        %v2289 = vld [vmem:[%s438 + $0x280] sm:$0xff]
        %v2290 = vld [vmem:[%s438 + $0x288] sm:$0xff]
        %v2291 = vld [vmem:[%s438 + $0x290] sm:$0xff]
        %v2292 = vld [vmem:[%s438 + $0x298] sm:$0xff]
        %v2293 = vld [vmem:[%s438 + $0x2a0] sm:$0xff]
        %v2294 = vld [vmem:[%s438 + $0x2a8] sm:$0xff]
        %v2295 = vld [vmem:[%s438 + $0x2b0] sm:$0xff]
        %v2296 = vld [vmem:[%s438 + $0x2b8] sm:$0xff]
        %v2297 = vld [vmem:[%s438 + $0x2c0] sm:$0xff]
        %v2298 = vld [vmem:[%s438 + $0x2c8] sm:$0xff]
        %v2299 = vld [vmem:[%s438 + $0x2d0] sm:$0xff]
        %v2300 = vld [vmem:[%s438 + $0x2d8] sm:$0xff]
        %v2301 = vld [vmem:[%s438 + $0x2e0] sm:$0xff]
        %v2302 = vld [vmem:[%s438 + $0x2e8] sm:$0xff]
        %v2303 = vld [vmem:[%s438 + $0x2f0] sm:$0xff]
        %v2304 = vld [vmem:[%s438 + $0x2f8] sm:$0xff]
        %v2305 = vld [vmem:[%s438 + $0x300] sm:$0xff]
        %v2306 = vld [vmem:[%s438 + $0x308] sm:$0xff]
        %v2307 = vld [vmem:[%s438 + $0x310] sm:$0xff]
        %v2308 = vld [vmem:[%s438 + $0x318] sm:$0xff]
        %v2309 = vld [vmem:[%s438 + $0x320] sm:$0xff]
        %v2310 = vld [vmem:[%s438 + $0x328] sm:$0xff]
        %v2311 = vld [vmem:[%s438 + $0x330] sm:$0xff]
        %v2312 = vld [vmem:[%s438 + $0x338] sm:$0xff]
        %v2313 = vld [vmem:[%s438 + $0x340] sm:$0xff]
        %v2314 = vld [vmem:[%s438 + $0x348] sm:$0xff]
        %v2315 = vld [vmem:[%s438 + $0x350] sm:$0xff]
        %v2316 = vld [vmem:[%s438 + $0x358] sm:$0xff]
        %v2317 = vld [vmem:[%s438 + $0x360] sm:$0xff]
        %v2318 = vld [vmem:[%s438 + $0x368] sm:$0xff]
        %v2319 = vld [vmem:[%s438 + $0x370] sm:$0xff]
        %v2320 = vld [vmem:[%s438 + $0x378] sm:$0xff]
        %v2321 = vld [vmem:[%s438 + $0x380] sm:$0xff]
        %v2322 = vld [vmem:[%s438 + $0x388] sm:$0xff]
        %v2323 = vld [vmem:[%s438 + $0x390] sm:$0xff]
        %v2324 = vld [vmem:[%s438 + $0x398] sm:$0xff]
        %v2325 = vld [vmem:[%s438 + $0x3a0] sm:$0xff]
        %v2326 = vld [vmem:[%s438 + $0x3a8] sm:$0xff]
        %v2327 = vld [vmem:[%s438 + $0x3b0] sm:$0xff]
        %v2328 = vld [vmem:[%s438 + $0x3b8] sm:$0xff]
        %v2329 = vld [vmem:[%s438 + $0x3c0] sm:$0xff]
        %v2330 = vld [vmem:[%s438 + $0x3c8] sm:$0xff]
        %v2331 = vld [vmem:[%s438 + $0x3d0] sm:$0xff]
        %v2332 = vld [vmem:[%s438 + $0x3d8] sm:$0xff]
        %v2333 = vld [vmem:[%s438 + $0x3e0] sm:$0xff]
        %v2334 = vld [vmem:[%s438 + $0x3e8] sm:$0xff]
        %v2335 = vld [vmem:[%s438 + $0x3f0] sm:$0xff]
        %v2336 = vld [vmem:[%s438 + $0x3f8] sm:$0xff]
        %v2337 = vld [vmem:[%s438 + $0x400] sm:$0xff]
        %v2338 = vld [vmem:[%s438 + $0x408] sm:$0xff]
        %v2339 = vld [vmem:[%s438 + $0x410] sm:$0xff]
        %v2340 = vld [vmem:[%s438 + $0x418] sm:$0xff]
        %v2341 = vld [vmem:[%s438 + $0x420] sm:$0xff]
        %v2342 = vld [vmem:[%s438 + $0x428] sm:$0xff]
        %v2343 = vld [vmem:[%s438 + $0x430] sm:$0xff]
        %v2344 = vld [vmem:[%s438 + $0x438] sm:$0xff]
        %v2345 = vld [vmem:[%s438 + $0x440] sm:$0xff]
        %v2346 = vld [vmem:[%s438 + $0x448] sm:$0xff]
        %v2347 = vld [vmem:[%s438 + $0x450] sm:$0xff]
        %v2348 = vld [vmem:[%s438 + $0x458] sm:$0xff]
        %v2349 = vld [vmem:[%s438 + $0x460] sm:$0xff]
        %v2350 = vld [vmem:[%s438 + $0x468] sm:$0xff]
        %v2351 = vld [vmem:[%s438 + $0x470] sm:$0xff]
        %v2352 = vld [vmem:[%s438 + $0x478] sm:$0xff]
        %v2353 = vld [vmem:[%s438 + $0x480] sm:$0xff]
        %v2354 = vld [vmem:[%s438 + $0x488] sm:$0xff]
        %v2355 = vld [vmem:[%s438 + $0x490] sm:$0xff]
        %v2356 = vld [vmem:[%s438 + $0x498] sm:$0xff]
        %v2357 = vld [vmem:[%s438 + $0x4a0] sm:$0xff]
        %v2358 = vld [vmem:[%s438 + $0x4a8] sm:$0xff]
        %v2359 = vld [vmem:[%s438 + $0x4b0] sm:$0xff]
        %v2360 = vld [vmem:[%s438 + $0x4b8] sm:$0xff]
        %v2361 = vld [vmem:[%s438 + $0x4c0] sm:$0xff]
        %v2362 = vld [vmem:[%s438 + $0x4c8] sm:$0xff]
        %v2363 = vld [vmem:[%s438 + $0x4d0] sm:$0xff]
        %v2364 = vld [vmem:[%s438 + $0x4d8] sm:$0xff]
        %v2365 = vld [vmem:[%s438 + $0x4e0] sm:$0xff]
        %v2366 = vld [vmem:[%s438 + $0x4e8] sm:$0xff]
        %v2367 = vld [vmem:[%s438 + $0x4f0] sm:$0xff]
        %v2368 = vld [vmem:[%s438 + $0x4f8] sm:$0xff]
        %v2369 = vld [vmem:[%s438 + $0x500] sm:$0xff]
        %v2370 = vld [vmem:[%s438 + $0x508] sm:$0xff]
        %v2371 = vld [vmem:[%s438 + $0x510] sm:$0xff]
        %v2372 = vld [vmem:[%s438 + $0x518] sm:$0xff]
        %v2373 = vld [vmem:[%s438 + $0x520] sm:$0xff]
        %v2374 = vld [vmem:[%s438 + $0x528] sm:$0xff]
        %v2375 = vld [vmem:[%s438 + $0x530] sm:$0xff]
        %v2376 = vld [vmem:[%s438 + $0x538] sm:$0xff]
        %v2377 = vld [vmem:[%s438 + $0x540] sm:$0xff]
        %v2378 = vld [vmem:[%s438 + $0x548] sm:$0xff]
        %v2379 = vld [vmem:[%s438 + $0x550] sm:$0xff]
        %v2380 = vld [vmem:[%s438 + $0x558] sm:$0xff]
        %v2381 = vld [vmem:[%s438 + $0x560] sm:$0xff]
        %v2382 = vld [vmem:[%s438 + $0x568] sm:$0xff]
        %v2383 = vld [vmem:[%s438 + $0x570] sm:$0xff]
        %v2384 = vld [vmem:[%s438 + $0x578] sm:$0xff]
        %v2385 = vld [vmem:[%s438 + $0x580] sm:$0xff]
        %v2386 = vld [vmem:[%s438 + $0x588] sm:$0xff]
        %v2387 = vld [vmem:[%s438 + $0x590] sm:$0xff]
        %v2388 = vld [vmem:[%s438 + $0x598] sm:$0xff]
        %v2389 = vld [vmem:[%s438 + $0x5a0] sm:$0xff]
        %v2390 = vld [vmem:[%s438 + $0x5a8] sm:$0xff]
        %v2391 = vld [vmem:[%s438 + $0x5b0] sm:$0xff]
        %v2392 = vld [vmem:[%s438 + $0x5b8] sm:$0xff]
        %v2393 = vld [vmem:[%s438 + $0x5c0] sm:$0xff]
        %v2394 = vld [vmem:[%s438 + $0x5c8] sm:$0xff]
        %v2395 = vld [vmem:[%s438 + $0x5d0] sm:$0xff]
        %v2396 = vld [vmem:[%s438 + $0x5d8] sm:$0xff]
        %v2397 = vld [vmem:[%s438 + $0x5e0] sm:$0xff]
        %v2398 = vld [vmem:[%s438 + $0x5e8] sm:$0xff]
        %v2399 = vld [vmem:[%s438 + $0x5f0] sm:$0xff]
        %v2400 = vld [vmem:[%s438 + $0x5f8] sm:$0xff]
        %v2401 = vld [vmem:[%s438 + $0x600] sm:$0xff]
        %v2402 = vld [vmem:[%s438 + $0x608] sm:$0xff]
        %v2403 = vld [vmem:[%s438 + $0x610] sm:$0xff]
        %v2404 = vld [vmem:[%s438 + $0x618] sm:$0xff]
        %v2405 = vld [vmem:[%s438 + $0x620] sm:$0xff]
        %v2406 = vld [vmem:[%s438 + $0x628] sm:$0xff]
        %v2407 = vld [vmem:[%s438 + $0x630] sm:$0xff]
        %v2408 = vld [vmem:[%s438 + $0x638] sm:$0xff]
        %v2409 = vld [vmem:[%s438 + $0x640] sm:$0xff]
        %v2410 = vld [vmem:[%s438 + $0x648] sm:$0xff]
        %v2411 = vld [vmem:[%s438 + $0x650] sm:$0xff]
        %v2412 = vld [vmem:[%s438 + $0x658] sm:$0xff]
        %v2413 = vld [vmem:[%s438 + $0x660] sm:$0xff]
        %v2414 = vld [vmem:[%s438 + $0x668] sm:$0xff]
        %v2415 = vld [vmem:[%s438 + $0x670] sm:$0xff]
        %v2416 = vld [vmem:[%s438 + $0x678] sm:$0xff]
        %v2417 = vld [vmem:[%s438 + $0x680] sm:$0xff]
        %v2418 = vld [vmem:[%s438 + $0x688] sm:$0xff]
        %v2419 = vld [vmem:[%s438 + $0x690] sm:$0xff]
        %v2420 = vld [vmem:[%s438 + $0x698] sm:$0xff]
        %v2421 = vld [vmem:[%s438 + $0x6a0] sm:$0xff]
        %v2422 = vld [vmem:[%s438 + $0x6a8] sm:$0xff]
        %v2423 = vld [vmem:[%s438 + $0x6b0] sm:$0xff]
        %v2424 = vld [vmem:[%s438 + $0x6b8] sm:$0xff]
        %v2425 = vld [vmem:[%s438 + $0x6c0] sm:$0xff]
        %v2426 = vld [vmem:[%s438 + $0x6c8] sm:$0xff]
        %v2427 = vld [vmem:[%s438 + $0x6d0] sm:$0xff]
        %v2428 = vld [vmem:[%s438 + $0x6d8] sm:$0xff]
        %v2429 = vld [vmem:[%s438 + $0x6e0] sm:$0xff]
        %v2430 = vld [vmem:[%s438 + $0x6e8] sm:$0xff]
        %v2431 = vld [vmem:[%s438 + $0x6f0] sm:$0xff]
        %v2432 = vld [vmem:[%s438 + $0x6f8] sm:$0xff]
        %v2433 = vld [vmem:[%s438 + $0x700] sm:$0xff]
        %v2434 = vld [vmem:[%s438 + $0x708] sm:$0xff]
        %v2435 = vld [vmem:[%s438 + $0x710] sm:$0xff]
        %v2436 = vld [vmem:[%s438 + $0x718] sm:$0xff]
        %v2437 = vld [vmem:[%s438 + $0x720] sm:$0xff]
        %v2438 = vld [vmem:[%s438 + $0x728] sm:$0xff]
        %v2439 = vld [vmem:[%s438 + $0x730] sm:$0xff]
        %v2440 = vld [vmem:[%s438 + $0x738] sm:$0xff]
        %v2441 = vld [vmem:[%s438 + $0x740] sm:$0xff]
        %v2442 = vld [vmem:[%s438 + $0x748] sm:$0xff]
        %v2443 = vld [vmem:[%s438 + $0x750] sm:$0xff]
        %v2444 = vld [vmem:[%s438 + $0x758] sm:$0xff]
        %v2445 = vld [vmem:[%s438 + $0x760] sm:$0xff]
        %v2446 = vld [vmem:[%s438 + $0x768] sm:$0xff]
        %v2447 = vld [vmem:[%s438 + $0x770] sm:$0xff]
        %v2448 = vld [vmem:[%s438 + $0x778] sm:$0xff]
        %v2449 = vld [vmem:[%s438 + $0x780] sm:$0xff]
        %v2450 = vld [vmem:[%s438 + $0x788] sm:$0xff]
        %v2451 = vld [vmem:[%s438 + $0x790] sm:$0xff]
        %v2452 = vld [vmem:[%s438 + $0x798] sm:$0xff]
        %v2453 = vld [vmem:[%s438 + $0x7a0] sm:$0xff]
        %v2454 = vld [vmem:[%s438 + $0x7a8] sm:$0xff]
        %v2455 = vld [vmem:[%s438 + $0x7b0] sm:$0xff]
        %v2456 = vld [vmem:[%s438 + $0x7b8] sm:$0xff]
        %v2457 = vld [vmem:[%s438 + $0x7c0] sm:$0xff]
        %v2458 = vld [vmem:[%s438 + $0x7c8] sm:$0xff]
        %v2459 = vld [vmem:[%s438 + $0x7d0] sm:$0xff]
        %v2460 = vld [vmem:[%s438 + $0x7d8] sm:$0xff]
        %v2461 = vld [vmem:[%s438 + $0x7e0] sm:$0xff]
        %v2462 = vld [vmem:[%s438 + $0x7e8] sm:$0xff]
        %v2463 = vld [vmem:[%s438 + $0x7f0] sm:$0xff]
        %v2464 = vld [vmem:[%s438 + $0x7f8] sm:$0xff]
        %v2465 = vld [vmem:[%s438 + $0x800] sm:$0xff]
        %v2466 = vld [vmem:[%s438 + $0x808] sm:$0xff]
        %v2467 = vld [vmem:[%s438 + $0x810] sm:$0xff]
        %v2468 = vld [vmem:[%s438 + $0x818] sm:$0xff]
        %v2469 = vld [vmem:[%s438 + $0x820] sm:$0xff]
        %v2470 = vld [vmem:[%s438 + $0x828] sm:$0xff]
        %v2471 = vld [vmem:[%s438 + $0x830] sm:$0xff]
        %v2472 = vld [vmem:[%s438 + $0x838] sm:$0xff]
        %v2473 = vld [vmem:[%s438 + $0x840] sm:$0xff]
        %v2474 = vld [vmem:[%s438 + $0x848] sm:$0xff]
        %v2475 = vld [vmem:[%s438 + $0x850] sm:$0xff]
        %v2476 = vld [vmem:[%s438 + $0x858] sm:$0xff]
        %v2477 = vld [vmem:[%s438 + $0x860] sm:$0xff]
        %v2478 = vld [vmem:[%s438 + $0x868] sm:$0xff]
        %v2479 = vld [vmem:[%s438 + $0x870] sm:$0xff]
        %v2480 = vld [vmem:[%s438 + $0x878] sm:$0xff]
        %v2481 = vld [vmem:[%s438 + $0x880] sm:$0xff]
        %v2482 = vld [vmem:[%s438 + $0x888] sm:$0xff]
        %v2483 = vld [vmem:[%s438 + $0x890] sm:$0xff]
        %v2484 = vld [vmem:[%s438 + $0x898] sm:$0xff]
        %v2485 = vld [vmem:[%s438 + $0x8a0] sm:$0xff]
        %v2486 = vld [vmem:[%s438 + $0x8a8] sm:$0xff]
        %v2487 = vld [vmem:[%s438 + $0x8b0] sm:$0xff]
        %v2488 = vld [vmem:[%s438 + $0x8b8] sm:$0xff]
        %v2489 = vld [vmem:[%s438 + $0x8c0] sm:$0xff]
        %v2490 = vld [vmem:[%s438 + $0x8c8] sm:$0xff]
        %v2491 = vld [vmem:[%s438 + $0x8d0] sm:$0xff]
        %v2492 = vld [vmem:[%s438 + $0x8d8] sm:$0xff]
        %v2493 = vld [vmem:[%s438 + $0x8e0] sm:$0xff]
        %v2494 = vld [vmem:[%s438 + $0x8e8] sm:$0xff]
        %v2495 = vld [vmem:[%s438 + $0x8f0] sm:$0xff]
        %v2496 = vld [vmem:[%s438 + $0x8f8] sm:$0xff]
        %v2497 = vld [vmem:[%s438 + $0x900] sm:$0xff]
        %v2498 = vld [vmem:[%s438 + $0x908] sm:$0xff]
        %v2499 = vld [vmem:[%s438 + $0x910] sm:$0xff]
        %v2500 = vld [vmem:[%s438 + $0x918] sm:$0xff]
        %v2501 = vld [vmem:[%s438 + $0x920] sm:$0xff]
        %v2502 = vld [vmem:[%s438 + $0x928] sm:$0xff]
        %v2503 = vld [vmem:[%s438 + $0x930] sm:$0xff]
        %v2504 = vld [vmem:[%s438 + $0x938] sm:$0xff]
        %v2505 = vld [vmem:[%s438 + $0x940] sm:$0xff]
        %v2506 = vld [vmem:[%s438 + $0x948] sm:$0xff]
        %v2507 = vld [vmem:[%s438 + $0x950] sm:$0xff]
        %v2508 = vld [vmem:[%s438 + $0x958] sm:$0xff]
        %v2509 = vld [vmem:[%s438 + $0x960] sm:$0xff]
        %v2510 = vld [vmem:[%s438 + $0x968] sm:$0xff]
        %v2511 = vld [vmem:[%s438 + $0x970] sm:$0xff]
        %v2512 = vld [vmem:[%s438 + $0x978] sm:$0xff]
        %v2513 = vld [vmem:[%s438 + $0x980] sm:$0xff]
        %v2514 = vld [vmem:[%s438 + $0x988] sm:$0xff]
        %v2515 = vld [vmem:[%s438 + $0x990] sm:$0xff]
        %v2516 = vld [vmem:[%s438 + $0x998] sm:$0xff]
        %v2517 = vld [vmem:[%s438 + $0x9a0] sm:$0xff]
        %v2518 = vld [vmem:[%s438 + $0x9a8] sm:$0xff]
        %v2519 = vld [vmem:[%s438 + $0x9b0] sm:$0xff]
        %v2520 = vld [vmem:[%s438 + $0x9b8] sm:$0xff]
        %v2521 = vld [vmem:[%s438 + $0x9c0] sm:$0xff]
        %v2522 = vld [vmem:[%s438 + $0x9c8] sm:$0xff]
        %v2523 = vld [vmem:[%s438 + $0x9d0] sm:$0xff]
        %v2524 = vld [vmem:[%s438 + $0x9d8] sm:$0xff]
        %v2525 = vld [vmem:[%s438 + $0x9e0] sm:$0xff]
        %v2526 = vld [vmem:[%s438 + $0x9e8] sm:$0xff]
        %v2527 = vld [vmem:[%s438 + $0x9f0] sm:$0xff]
        %v2528 = vld [vmem:[%s438 + $0x9f8] sm:$0xff]
        %v2529 = vld [vmem:[%s438 + $0xa00] sm:$0xff]
        %v2530 = vld [vmem:[%s438 + $0xa08] sm:$0xff]
        %v2531 = vld [vmem:[%s438 + $0xa10] sm:$0xff]
        %v2532 = vld [vmem:[%s438 + $0xa18] sm:$0xff]
        %v2533 = vld [vmem:[%s438 + $0xa20] sm:$0xff]
        %v2534 = vld [vmem:[%s438 + $0xa28] sm:$0xff]
        %v2535 = vld [vmem:[%s438 + $0xa30] sm:$0xff]
        %v2536 = vld [vmem:[%s438 + $0xa38] sm:$0xff]
        %v2537 = vld [vmem:[%s438 + $0xa40] sm:$0xff]
        %v2538 = vld [vmem:[%s438 + $0xa48] sm:$0xff]
        %v2539 = vld [vmem:[%s438 + $0xa50] sm:$0xff]
        %v2540 = vld [vmem:[%s438 + $0xa58] sm:$0xff]
        %v2541 = vld [vmem:[%s438 + $0xa60] sm:$0xff]
        %v2542 = vld [vmem:[%s438 + $0xa68] sm:$0xff]
        %v2543 = vld [vmem:[%s438 + $0xa70] sm:$0xff]
        %v2544 = vld [vmem:[%s438 + $0xa78] sm:$0xff]
        %v2545 = vld [vmem:[%s438 + $0xa80] sm:$0xff]
        %v2546 = vld [vmem:[%s438 + $0xa88] sm:$0xff]
        %v2547 = vld [vmem:[%s438 + $0xa90] sm:$0xff]
        %v2548 = vld [vmem:[%s438 + $0xa98] sm:$0xff]
        %v2549 = vld [vmem:[%s438 + $0xaa0] sm:$0xff]
        %v2550 = vld [vmem:[%s438 + $0xaa8] sm:$0xff]
        %v2551 = vld [vmem:[%s438 + $0xab0] sm:$0xff]
        %v2552 = vld [vmem:[%s438 + $0xab8] sm:$0xff]
        %v2553 = vld [vmem:[%s438 + $0xac0] sm:$0xff]
        %v2554 = vld [vmem:[%s438 + $0xac8] sm:$0xff]
        %v2555 = vld [vmem:[%s438 + $0xad0] sm:$0xff]
        %v2556 = vld [vmem:[%s438 + $0xad8] sm:$0xff]
        %v2557 = vld [vmem:[%s438 + $0xae0] sm:$0xff]
        %v2558 = vld [vmem:[%s438 + $0xae8] sm:$0xff]
        %v2559 = vld [vmem:[%s438 + $0xaf0] sm:$0xff]
        %v2560 = vld [vmem:[%s438 + $0xaf8] sm:$0xff]
        %v2561 = vld [vmem:[%s438 + $0xb00] sm:$0xff]
        %v2562 = vld [vmem:[%s438 + $0xb08] sm:$0xff]
        %v2563 = vld [vmem:[%s438 + $0xb10] sm:$0xff]
        %v2564 = vld [vmem:[%s438 + $0xb18] sm:$0xff]
        %v2565 = vld [vmem:[%s438 + $0xb20] sm:$0xff]
        %v2566 = vld [vmem:[%s438 + $0xb28] sm:$0xff]
        %v2567 = vld [vmem:[%s438 + $0xb30] sm:$0xff]
        %v2568 = vld [vmem:[%s438 + $0xb38] sm:$0xff]
        %v2569 = vld [vmem:[%s438 + $0xb40] sm:$0xff]
        %v2570 = vld [vmem:[%s438 + $0xb48] sm:$0xff]
        %v2571 = vld [vmem:[%s438 + $0xb50] sm:$0xff]
        %v2572 = vld [vmem:[%s438 + $0xb58] sm:$0xff]
        %v2573 = vld [vmem:[%s438 + $0xb60] sm:$0xff]
        %v2574 = vld [vmem:[%s438 + $0xb68] sm:$0xff]
        %v2575 = vld [vmem:[%s438 + $0xb70] sm:$0xff]
        %v2576 = vld [vmem:[%s438 + $0xb78] sm:$0xff]
        %v2577 = vld [vmem:[%s438 + $0xb80] sm:$0xff]
        %v2578 = vld [vmem:[%s438 + $0xb88] sm:$0xff]
        %v2579 = vld [vmem:[%s438 + $0xb90] sm:$0xff]
        %v2580 = vld [vmem:[%s438 + $0xb98] sm:$0xff]
        %v2581 = vld [vmem:[%s438 + $0xba0] sm:$0xff]
        %v2582 = vld [vmem:[%s438 + $0xba8] sm:$0xff]
        %v2583 = vld [vmem:[%s438 + $0xbb0] sm:$0xff]
        %v2584 = vld [vmem:[%s438 + $0xbb8] sm:$0xff]
        %v2585 = vld [vmem:[%s438 + $0xbc0] sm:$0xff]
        %v2586 = vld [vmem:[%s438 + $0xbc8] sm:$0xff]
        %v2629 = vunpack.c.l.b16 %v2167
        %v2630 = vunpack.c.h.b16 %v2167
        %v2631 = vunpack.c.l.b16 %v2168
        %v2632 = vunpack.c.h.b16 %v2168
        %v2633 = vunpack.c.l.b16 %v2169
        %v2634 = vunpack.c.h.b16 %v2169
        %v2635 = vunpack.c.l.b16 %v2170
        %v2636 = vunpack.c.h.b16 %v2170
        %v2637 = vunpack.c.l.b16 %v2171
        %v2638 = vunpack.c.h.b16 %v2171
        %v2639 = vunpack.c.l.b16 %v2172
        %v2640 = vunpack.c.h.b16 %v2172
        %v2641 = vunpack.c.l.b16 %v2173
        %v2642 = vunpack.c.h.b16 %v2173
        %v2643 = vunpack.c.l.b16 %v2174
        %v2644 = vunpack.c.h.b16 %v2174
        %v2645 = vunpack.c.l.b16 %v2175
        %v2646 = vunpack.c.h.b16 %v2175
        %v2647 = vunpack.c.l.b16 %v2176
        %v2648 = vunpack.c.h.b16 %v2176
        %v2649 = vunpack.c.l.b16 %v2177
        %v2650 = vunpack.c.h.b16 %v2177
        %v2651 = vunpack.c.l.b16 %v2178
        %v2652 = vunpack.c.h.b16 %v2178
        %v2653 = vunpack.c.l.b16 %v2179
        %v2654 = vunpack.c.h.b16 %v2179
        %v2655 = vunpack.c.l.b16 %v2180
        %v2656 = vunpack.c.h.b16 %v2180
        %v2657 = vunpack.c.l.b16 %v2181
        %v2658 = vunpack.c.h.b16 %v2181
        %v2659 = vunpack.c.l.b16 %v2182
        %v2660 = vunpack.c.h.b16 %v2182
        %v2661 = vunpack.c.l.b16 %v2183
        %v2662 = vunpack.c.h.b16 %v2183
        %v2663 = vunpack.c.l.b16 %v2184
        %v2664 = vunpack.c.h.b16 %v2184
        %v2665 = vunpack.c.l.b16 %v2185
        %v2666 = vunpack.c.h.b16 %v2185
        %v2667 = vunpack.c.l.b16 %v2186
        %v2668 = vunpack.c.h.b16 %v2186
        %v2669 = vunpack.c.l.b16 %v2187
        %v2670 = vunpack.c.h.b16 %v2187
        %v2671 = vunpack.c.l.b16 %v2188
        %v2672 = vunpack.c.h.b16 %v2188
        %v2673 = vunpack.c.l.b16 %v2189
        %v2674 = vunpack.c.h.b16 %v2189
        %v2675 = vunpack.c.l.b16 %v2190
        %v2676 = vunpack.c.h.b16 %v2190
        %v2677 = vunpack.c.l.b16 %v2191
        %v2678 = vunpack.c.h.b16 %v2191
        %v2679 = vunpack.c.l.b16 %v2192
        %v2680 = vunpack.c.h.b16 %v2192
        %v2681 = vunpack.c.l.b16 %v2193
        %v2682 = vunpack.c.h.b16 %v2193
        %v2683 = vunpack.c.l.b16 %v2194
        %v2684 = vunpack.c.h.b16 %v2194
        %v2685 = vunpack.c.l.b16 %v2195
        %v2686 = vunpack.c.h.b16 %v2195
        %v2687 = vunpack.c.l.b16 %v2196
        %v2688 = vunpack.c.h.b16 %v2196
        %v2689 = vunpack.c.l.b16 %v2197
        %v2690 = vunpack.c.h.b16 %v2197
        %v2691 = vunpack.c.l.b16 %v2198
        %v2692 = vunpack.c.h.b16 %v2198
        %v2693 = vunpack.c.l.b16 %v2199
        %v2694 = vunpack.c.h.b16 %v2199
        %v2695 = vunpack.c.l.b16 %v2200
        %v2696 = vunpack.c.h.b16 %v2200
        %v2697 = vunpack.c.l.b16 %v2201
        %v2698 = vunpack.c.h.b16 %v2201
        %v2699 = vunpack.c.l.b16 %v2202
        %v2700 = vunpack.c.h.b16 %v2202
        %v2701 = vunpack.c.l.b16 %v2203
        %v2702 = vunpack.c.h.b16 %v2203
        %v2703 = vunpack.c.l.b16 %v2204
        %v2704 = vunpack.c.h.b16 %v2204
        %v2705 = vunpack.c.l.b16 %v2205
        %v2706 = vunpack.c.h.b16 %v2205
        %v2707 = vunpack.c.l.b16 %v2206
        %v2708 = vunpack.c.h.b16 %v2206
        %v2709 = vunpack.c.l.b16 %v2207
        %v2710 = vunpack.c.h.b16 %v2207
        %v2711 = vunpack.c.l.b16 %v2208
        %v2712 = vunpack.c.h.b16 %v2208
        %v2713 = vpack.c.b16 %v2641, %v2629
        %v2714 = vpack.c.b16 %v2642, %v2630
        %v2715 = vpack.c.b16 %v2643, %v2631
        %v2716 = vpack.c.b16 %v2644, %v2632
        %v2717 = vpack.c.b16 %v2645, %v2633
        %v2718 = vpack.c.b16 %v2646, %v2634
        %v2719 = vpack.c.b16 %v2647, %v2635
        %v2720 = vpack.c.b16 %v2648, %v2636
        %v2721 = vpack.c.b16 %v2649, %v2637
        %v2722 = vpack.c.b16 %v2650, %v2638
        %v2723 = vpack.c.b16 %v2651, %v2639
        %v2724 = vpack.c.b16 %v2652, %v2640
        %v2725 = vpack.c.b16 %v2665, %v2653
        %v2726 = vpack.c.b16 %v2666, %v2654
        %v2727 = vpack.c.b16 %v2667, %v2655
        %v2728 = vpack.c.b16 %v2668, %v2656
        %v2729 = vpack.c.b16 %v2669, %v2657
        %v2730 = vpack.c.b16 %v2670, %v2658
        %v2731 = vpack.c.b16 %v2671, %v2659
        %v2732 = vpack.c.b16 %v2672, %v2660
        %v2733 = vpack.c.b16 %v2673, %v2661
        %v2734 = vpack.c.b16 %v2674, %v2662
        %v2735 = vpack.c.b16 %v2675, %v2663
        %v2736 = vpack.c.b16 %v2676, %v2664
        %v2737 = vpack.c.b16 %v2689, %v2677
        %v2738 = vpack.c.b16 %v2690, %v2678
        %v2739 = vpack.c.b16 %v2691, %v2679
        %v2740 = vpack.c.b16 %v2692, %v2680
        %v2741 = vpack.c.b16 %v2693, %v2681
        %v2742 = vpack.c.b16 %v2694, %v2682
        %v2743 = vpack.c.b16 %v2695, %v2683
        %v2744 = vpack.c.b16 %v2696, %v2684
        %v2745 = vpack.c.b16 %v2697, %v2685
        %v2746 = vpack.c.b16 %v2698, %v2686
        %v2747 = vpack.c.b16 %v2699, %v2687
        %v2748 = vpack.c.b16 %v2700, %v2688
        %v2749 = vpack.c.b16 %v2701, %v2701
        %v2750 = vpack.c.b16 %v2702, %v2702
        %v2751 = vpack.c.b16 %v2703, %v2703
        %v2752 = vpack.c.b16 %v2704, %v2704
        %v2753 = vpack.c.b16 %v2705, %v2705
        %v2754 = vpack.c.b16 %v2706, %v2706
        %v2755 = vpack.c.b16 %v2707, %v2707
        %v2756 = vpack.c.b16 %v2708, %v2708
        %v2757 = vpack.c.b16 %v2709, %v2709
        %v2758 = vpack.c.b16 %v2710, %v2710
        %v2759 = vpack.c.b16 %v2711, %v2711
        %v2760 = vpack.c.b16 %v2712, %v2712
        %v3183 = vunpack.c.l.b16 %v2209
        %v3184 = vunpack.c.h.b16 %v2209
        %v3185 = vunpack.c.l.b16 %v2210
        %v3186 = vunpack.c.h.b16 %v2210
        %v3187 = vunpack.c.l.b16 %v2211
        %v3188 = vunpack.c.h.b16 %v2211
        %v3189 = vunpack.c.l.b16 %v2212
        %v3190 = vunpack.c.h.b16 %v2212
        %v3191 = vunpack.c.l.b16 %v2213
        %v3192 = vunpack.c.h.b16 %v2213
        %v3193 = vunpack.c.l.b16 %v2214
        %v3194 = vunpack.c.h.b16 %v2214
        %v3195 = vunpack.c.l.b16 %v2215
        %v3196 = vunpack.c.h.b16 %v2215
        %v3197 = vunpack.c.l.b16 %v2216
        %v3198 = vunpack.c.h.b16 %v2216
        %v3199 = vunpack.c.l.b16 %v2217
        %v3200 = vunpack.c.h.b16 %v2217
        %v3201 = vunpack.c.l.b16 %v2218
        %v3202 = vunpack.c.h.b16 %v2218
        %v3203 = vunpack.c.l.b16 %v2219
        %v3204 = vunpack.c.h.b16 %v2219
        %v3205 = vunpack.c.l.b16 %v2220
        %v3206 = vunpack.c.h.b16 %v2220
        %v3207 = vunpack.c.l.b16 %v2221
        %v3208 = vunpack.c.h.b16 %v2221
        %v3209 = vunpack.c.l.b16 %v2222
        %v3210 = vunpack.c.h.b16 %v2222
        %v3211 = vunpack.c.l.b16 %v2223
        %v3212 = vunpack.c.h.b16 %v2223
        %v3213 = vunpack.c.l.b16 %v2224
        %v3214 = vunpack.c.h.b16 %v2224
        %v3215 = vunpack.c.l.b16 %v2225
        %v3216 = vunpack.c.h.b16 %v2225
        %v3217 = vunpack.c.l.b16 %v2226
        %v3218 = vunpack.c.h.b16 %v2226
        %v3219 = vunpack.c.l.b16 %v2227
        %v3220 = vunpack.c.h.b16 %v2227
        %v3221 = vunpack.c.l.b16 %v2228
        %v3222 = vunpack.c.h.b16 %v2228
        %v3223 = vunpack.c.l.b16 %v2229
        %v3224 = vunpack.c.h.b16 %v2229
        %v3225 = vunpack.c.l.b16 %v2230
        %v3226 = vunpack.c.h.b16 %v2230
        %v3227 = vunpack.c.l.b16 %v2231
        %v3228 = vunpack.c.h.b16 %v2231
        %v3229 = vunpack.c.l.b16 %v2232
        %v3230 = vunpack.c.h.b16 %v2232
        %v3231 = vunpack.c.l.b16 %v2233
        %v3232 = vunpack.c.h.b16 %v2233
        %v3233 = vunpack.c.l.b16 %v2234
        %v3234 = vunpack.c.h.b16 %v2234
        %v3235 = vunpack.c.l.b16 %v2235
        %v3236 = vunpack.c.h.b16 %v2235
        %v3237 = vunpack.c.l.b16 %v2236
        %v3238 = vunpack.c.h.b16 %v2236
        %v3239 = vunpack.c.l.b16 %v2237
        %v3240 = vunpack.c.h.b16 %v2237
        %v3241 = vunpack.c.l.b16 %v2238
        %v3242 = vunpack.c.h.b16 %v2238
        %v3243 = vunpack.c.l.b16 %v2239
        %v3244 = vunpack.c.h.b16 %v2239
        %v3245 = vunpack.c.l.b16 %v2240
        %v3246 = vunpack.c.h.b16 %v2240
        %v3247 = vunpack.c.l.b16 %v2241
        %v3248 = vunpack.c.h.b16 %v2241
        %v3249 = vunpack.c.l.b16 %v2242
        %v3250 = vunpack.c.h.b16 %v2242
        %v3251 = vunpack.c.l.b16 %v2243
        %v3252 = vunpack.c.h.b16 %v2243
        %v3253 = vunpack.c.l.b16 %v2244
        %v3254 = vunpack.c.h.b16 %v2244
        %v3255 = vunpack.c.l.b16 %v2245
        %v3256 = vunpack.c.h.b16 %v2245
        %v3257 = vunpack.c.l.b16 %v2246
        %v3258 = vunpack.c.h.b16 %v2246
        %v3259 = vunpack.c.l.b16 %v2247
        %v3260 = vunpack.c.h.b16 %v2247
        %v3261 = vunpack.c.l.b16 %v2248
        %v3262 = vunpack.c.h.b16 %v2248
        %v3263 = vunpack.c.l.b16 %v2249
        %v3264 = vunpack.c.h.b16 %v2249
        %v3265 = vunpack.c.l.b16 %v2250
        %v3266 = vunpack.c.h.b16 %v2250
        %v3267 = vunpack.c.l.b16 %v2251
        %v3268 = vunpack.c.h.b16 %v2251
        %v3269 = vunpack.c.l.b16 %v2252
        %v3270 = vunpack.c.h.b16 %v2252
        %v3271 = vunpack.c.l.b16 %v2253
        %v3272 = vunpack.c.h.b16 %v2253
        %v3273 = vunpack.c.l.b16 %v2254
        %v3274 = vunpack.c.h.b16 %v2254
        %v3275 = vunpack.c.l.b16 %v2255
        %v3276 = vunpack.c.h.b16 %v2255
        %v3277 = vunpack.c.l.b16 %v2256
        %v3278 = vunpack.c.h.b16 %v2256
        %v3279 = vunpack.c.l.b16 %v2257
        %v3280 = vunpack.c.h.b16 %v2257
        %v3281 = vunpack.c.l.b16 %v2258
        %v3282 = vunpack.c.h.b16 %v2258
        %v3283 = vunpack.c.l.b16 %v2259
        %v3284 = vunpack.c.h.b16 %v2259
        %v3285 = vunpack.c.l.b16 %v2260
        %v3286 = vunpack.c.h.b16 %v2260
        %v3287 = vunpack.c.l.b16 %v2261
        %v3288 = vunpack.c.h.b16 %v2261
        %v3289 = vunpack.c.l.b16 %v2262
        %v3290 = vunpack.c.h.b16 %v2262
        %v3291 = vunpack.c.l.b16 %v2263
        %v3292 = vunpack.c.h.b16 %v2263
        %v3293 = vunpack.c.l.b16 %v2264
        %v3294 = vunpack.c.h.b16 %v2264
        %v3295 = vunpack.c.l.b16 %v2265
        %v3296 = vunpack.c.h.b16 %v2265
        %v3297 = vunpack.c.l.b16 %v2266
        %v3298 = vunpack.c.h.b16 %v2266
        %v3299 = vunpack.c.l.b16 %v2267
        %v3300 = vunpack.c.h.b16 %v2267
        %v3301 = vunpack.c.l.b16 %v2268
        %v3302 = vunpack.c.h.b16 %v2268
        %v3303 = vunpack.c.l.b16 %v2269
        %v3304 = vunpack.c.h.b16 %v2269
        %v3305 = vunpack.c.l.b16 %v2270
        %v3306 = vunpack.c.h.b16 %v2270
        %v3307 = vunpack.c.l.b16 %v2271
        %v3308 = vunpack.c.h.b16 %v2271
        %v3309 = vunpack.c.l.b16 %v2272
        %v3310 = vunpack.c.h.b16 %v2272
        %v3311 = vunpack.c.l.b16 %v2273
        %v3312 = vunpack.c.h.b16 %v2273
        %v3313 = vunpack.c.l.b16 %v2274
        %v3314 = vunpack.c.h.b16 %v2274
        %v3315 = vunpack.c.l.b16 %v2275
        %v3316 = vunpack.c.h.b16 %v2275
        %v3317 = vunpack.c.l.b16 %v2276
        %v3318 = vunpack.c.h.b16 %v2276
        %v3319 = vunpack.c.l.b16 %v2277
        %v3320 = vunpack.c.h.b16 %v2277
        %v3321 = vunpack.c.l.b16 %v2278
        %v3322 = vunpack.c.h.b16 %v2278
        %v3323 = vunpack.c.l.b16 %v2279
        %v3324 = vunpack.c.h.b16 %v2279
        %v3325 = vunpack.c.l.b16 %v2280
        %v3326 = vunpack.c.h.b16 %v2280
        %v3327 = vunpack.c.l.b16 %v2281
        %v3328 = vunpack.c.h.b16 %v2281
        %v3329 = vunpack.c.l.b16 %v2282
        %v3330 = vunpack.c.h.b16 %v2282
        %v3331 = vunpack.c.l.b16 %v2283
        %v3332 = vunpack.c.h.b16 %v2283
        %v3333 = vunpack.c.l.b16 %v2284
        %v3334 = vunpack.c.h.b16 %v2284
        %v3335 = vunpack.c.l.b16 %v2285
        %v3336 = vunpack.c.h.b16 %v2285
        %v3337 = vunpack.c.l.b16 %v2286
        %v3338 = vunpack.c.h.b16 %v2286
        %v3339 = vunpack.c.l.b16 %v2287
        %v3340 = vunpack.c.h.b16 %v2287
        %v3341 = vunpack.c.l.b16 %v2288
        %v3342 = vunpack.c.h.b16 %v2288
        %v3343 = vunpack.c.l.b16 %v2289
        %v3344 = vunpack.c.h.b16 %v2289
        %v3345 = vunpack.c.l.b16 %v2290
        %v3346 = vunpack.c.h.b16 %v2290
        %v3347 = vunpack.c.l.b16 %v2291
        %v3348 = vunpack.c.h.b16 %v2291
        %v3349 = vunpack.c.l.b16 %v2292
        %v3350 = vunpack.c.h.b16 %v2292
        %v3351 = vunpack.c.l.b16 %v2293
        %v3352 = vunpack.c.h.b16 %v2293
        %v3353 = vunpack.c.l.b16 %v2294
        %v3354 = vunpack.c.h.b16 %v2294
        %v3355 = vunpack.c.l.b16 %v2295
        %v3356 = vunpack.c.h.b16 %v2295
        %v3357 = vunpack.c.l.b16 %v2296
        %v3358 = vunpack.c.h.b16 %v2296
        %v3359 = vunpack.c.l.b16 %v2297
        %v3360 = vunpack.c.h.b16 %v2297
        %v3361 = vunpack.c.l.b16 %v2298
        %v3362 = vunpack.c.h.b16 %v2298
        %v3363 = vunpack.c.l.b16 %v2299
        %v3364 = vunpack.c.h.b16 %v2299
        %v3365 = vunpack.c.l.b16 %v2300
        %v3366 = vunpack.c.h.b16 %v2300
        %v3367 = vunpack.c.l.b16 %v2301
        %v3368 = vunpack.c.h.b16 %v2301
        %v3369 = vunpack.c.l.b16 %v2302
        %v3370 = vunpack.c.h.b16 %v2302
        %v3371 = vunpack.c.l.b16 %v2303
        %v3372 = vunpack.c.h.b16 %v2303
        %v3373 = vunpack.c.l.b16 %v2304
        %v3374 = vunpack.c.h.b16 %v2304
        %v3375 = vunpack.c.l.b16 %v2305
        %v3376 = vunpack.c.h.b16 %v2305
        %v3377 = vunpack.c.l.b16 %v2306
        %v3378 = vunpack.c.h.b16 %v2306
        %v3379 = vunpack.c.l.b16 %v2307
        %v3380 = vunpack.c.h.b16 %v2307
        %v3381 = vunpack.c.l.b16 %v2308
        %v3382 = vunpack.c.h.b16 %v2308
        %v3383 = vunpack.c.l.b16 %v2309
        %v3384 = vunpack.c.h.b16 %v2309
        %v3385 = vunpack.c.l.b16 %v2310
        %v3386 = vunpack.c.h.b16 %v2310
        %v3387 = vunpack.c.l.b16 %v2311
        %v3388 = vunpack.c.h.b16 %v2311
        %v3389 = vunpack.c.l.b16 %v2312
        %v3390 = vunpack.c.h.b16 %v2312
        %v3391 = vunpack.c.l.b16 %v2313
        %v3392 = vunpack.c.h.b16 %v2313
        %v3393 = vunpack.c.l.b16 %v2314
        %v3394 = vunpack.c.h.b16 %v2314
        %v3395 = vunpack.c.l.b16 %v2315
        %v3396 = vunpack.c.h.b16 %v2315
        %v3397 = vunpack.c.l.b16 %v2316
        %v3398 = vunpack.c.h.b16 %v2316
        %v3399 = vunpack.c.l.b16 %v2317
        %v3400 = vunpack.c.h.b16 %v2317
        %v3401 = vunpack.c.l.b16 %v2318
        %v3402 = vunpack.c.h.b16 %v2318
        %v3403 = vunpack.c.l.b16 %v2319
        %v3404 = vunpack.c.h.b16 %v2319
        %v3405 = vunpack.c.l.b16 %v2320
        %v3406 = vunpack.c.h.b16 %v2320
        %v3407 = vunpack.c.l.b16 %v2321
        %v3408 = vunpack.c.h.b16 %v2321
        %v3409 = vunpack.c.l.b16 %v2322
        %v3410 = vunpack.c.h.b16 %v2322
        %v3411 = vunpack.c.l.b16 %v2323
        %v3412 = vunpack.c.h.b16 %v2323
        %v3413 = vunpack.c.l.b16 %v2324
        %v3414 = vunpack.c.h.b16 %v2324
        %v3415 = vunpack.c.l.b16 %v2325
        %v3416 = vunpack.c.h.b16 %v2325
        %v3417 = vunpack.c.l.b16 %v2326
        %v3418 = vunpack.c.h.b16 %v2326
        %v3419 = vunpack.c.l.b16 %v2327
        %v3420 = vunpack.c.h.b16 %v2327
        %v3421 = vunpack.c.l.b16 %v2328
        %v3422 = vunpack.c.h.b16 %v2328
        %v3423 = vunpack.c.l.b16 %v2329
        %v3424 = vunpack.c.h.b16 %v2329
        %v3425 = vunpack.c.l.b16 %v2330
        %v3426 = vunpack.c.h.b16 %v2330
        %v3427 = vunpack.c.l.b16 %v2331
        %v3428 = vunpack.c.h.b16 %v2331
        %v3429 = vunpack.c.l.b16 %v2332
        %v3430 = vunpack.c.h.b16 %v2332
        %v3431 = vunpack.c.l.b16 %v2333
        %v3432 = vunpack.c.h.b16 %v2333
        %v3433 = vunpack.c.l.b16 %v2334
        %v3434 = vunpack.c.h.b16 %v2334
        %v3435 = vunpack.c.l.b16 %v2335
        %v3436 = vunpack.c.h.b16 %v2335
        %v3437 = vunpack.c.l.b16 %v2336
        %v3438 = vunpack.c.h.b16 %v2336
        %v3439 = vunpack.c.l.b16 %v2337
        %v3440 = vunpack.c.h.b16 %v2337
        %v3441 = vunpack.c.l.b16 %v2338
        %v3442 = vunpack.c.h.b16 %v2338
        %v3443 = vunpack.c.l.b16 %v2339
        %v3444 = vunpack.c.h.b16 %v2339
        %v3445 = vunpack.c.l.b16 %v2340
        %v3446 = vunpack.c.h.b16 %v2340
        %v3447 = vunpack.c.l.b16 %v2341
        %v3448 = vunpack.c.h.b16 %v2341
        %v3449 = vunpack.c.l.b16 %v2342
        %v3450 = vunpack.c.h.b16 %v2342
        %v3451 = vunpack.c.l.b16 %v2343
        %v3452 = vunpack.c.h.b16 %v2343
        %v3453 = vunpack.c.l.b16 %v2344
        %v3454 = vunpack.c.h.b16 %v2344
        %v3455 = vunpack.c.l.b16 %v2345
        %v3456 = vunpack.c.h.b16 %v2345
        %v3457 = vunpack.c.l.b16 %v2346
        %v3458 = vunpack.c.h.b16 %v2346
        %v3459 = vunpack.c.l.b16 %v2347
        %v3460 = vunpack.c.h.b16 %v2347
        %v3461 = vunpack.c.l.b16 %v2348
        %v3462 = vunpack.c.h.b16 %v2348
        %v3463 = vunpack.c.l.b16 %v2349
        %v3464 = vunpack.c.h.b16 %v2349
        %v3465 = vunpack.c.l.b16 %v2350
        %v3466 = vunpack.c.h.b16 %v2350
        %v3467 = vunpack.c.l.b16 %v2351
        %v3468 = vunpack.c.h.b16 %v2351
        %v3469 = vunpack.c.l.b16 %v2352
        %v3470 = vunpack.c.h.b16 %v2352
        %v3471 = vunpack.c.l.b16 %v2353
        %v3472 = vunpack.c.h.b16 %v2353
        %v3473 = vunpack.c.l.b16 %v2354
        %v3474 = vunpack.c.h.b16 %v2354
        %v3475 = vunpack.c.l.b16 %v2355
        %v3476 = vunpack.c.h.b16 %v2355
        %v3477 = vunpack.c.l.b16 %v2356
        %v3478 = vunpack.c.h.b16 %v2356
        %v3479 = vunpack.c.l.b16 %v2357
        %v3480 = vunpack.c.h.b16 %v2357
        %v3481 = vunpack.c.l.b16 %v2358
        %v3482 = vunpack.c.h.b16 %v2358
        %v3483 = vunpack.c.l.b16 %v2359
        %v3484 = vunpack.c.h.b16 %v2359
        %v3485 = vunpack.c.l.b16 %v2360
        %v3486 = vunpack.c.h.b16 %v2360
        %v3487 = vunpack.c.l.b16 %v2361
        %v3488 = vunpack.c.h.b16 %v2361
        %v3489 = vunpack.c.l.b16 %v2362
        %v3490 = vunpack.c.h.b16 %v2362
        %v3491 = vunpack.c.l.b16 %v2363
        %v3492 = vunpack.c.h.b16 %v2363
        %v3493 = vunpack.c.l.b16 %v2364
        %v3494 = vunpack.c.h.b16 %v2364
        %v3495 = vunpack.c.l.b16 %v2365
        %v3496 = vunpack.c.h.b16 %v2365
        %v3497 = vunpack.c.l.b16 %v2366
        %v3498 = vunpack.c.h.b16 %v2366
        %v3499 = vunpack.c.l.b16 %v2367
        %v3500 = vunpack.c.h.b16 %v2367
        %v3501 = vunpack.c.l.b16 %v2368
        %v3502 = vunpack.c.h.b16 %v2368
        %v3503 = vunpack.c.l.b16 %v2369
        %v3504 = vunpack.c.h.b16 %v2369
        %v3505 = vunpack.c.l.b16 %v2370
        %v3506 = vunpack.c.h.b16 %v2370
        %v3507 = vunpack.c.l.b16 %v2371
        %v3508 = vunpack.c.h.b16 %v2371
        %v3509 = vunpack.c.l.b16 %v2372
        %v3510 = vunpack.c.h.b16 %v2372
        %v3511 = vunpack.c.l.b16 %v2373
        %v3512 = vunpack.c.h.b16 %v2373
        %v3513 = vunpack.c.l.b16 %v2374
        %v3514 = vunpack.c.h.b16 %v2374
        %v3515 = vunpack.c.l.b16 %v2375
        %v3516 = vunpack.c.h.b16 %v2375
        %v3517 = vunpack.c.l.b16 %v2376
        %v3518 = vunpack.c.h.b16 %v2376
        %v3519 = vunpack.c.l.b16 %v2377
        %v3520 = vunpack.c.h.b16 %v2377
        %v3521 = vunpack.c.l.b16 %v2378
        %v3522 = vunpack.c.h.b16 %v2378
        %v3523 = vunpack.c.l.b16 %v2379
        %v3524 = vunpack.c.h.b16 %v2379
        %v3525 = vunpack.c.l.b16 %v2380
        %v3526 = vunpack.c.h.b16 %v2380
        %v3527 = vunpack.c.l.b16 %v2381
        %v3528 = vunpack.c.h.b16 %v2381
        %v3529 = vunpack.c.l.b16 %v2382
        %v3530 = vunpack.c.h.b16 %v2382
        %v3531 = vunpack.c.l.b16 %v2383
        %v3532 = vunpack.c.h.b16 %v2383
        %v3533 = vunpack.c.l.b16 %v2384
        %v3534 = vunpack.c.h.b16 %v2384
        %v3535 = vunpack.c.l.b16 %v2385
        %v3536 = vunpack.c.h.b16 %v2385
        %v3537 = vunpack.c.l.b16 %v2386
        %v3538 = vunpack.c.h.b16 %v2386
        %v3539 = vunpack.c.l.b16 %v2387
        %v3540 = vunpack.c.h.b16 %v2387
        %v3541 = vunpack.c.l.b16 %v2388
        %v3542 = vunpack.c.h.b16 %v2388
        %v3543 = vunpack.c.l.b16 %v2389
        %v3544 = vunpack.c.h.b16 %v2389
        %v3545 = vunpack.c.l.b16 %v2390
        %v3546 = vunpack.c.h.b16 %v2390
        %v3547 = vunpack.c.l.b16 %v2391
        %v3548 = vunpack.c.h.b16 %v2391
        %v3549 = vunpack.c.l.b16 %v2392
        %v3550 = vunpack.c.h.b16 %v2392
        %v3551 = vunpack.c.l.b16 %v2393
        %v3552 = vunpack.c.h.b16 %v2393
        %v3553 = vunpack.c.l.b16 %v2394
        %v3554 = vunpack.c.h.b16 %v2394
        %v3555 = vunpack.c.l.b16 %v2395
        %v3556 = vunpack.c.h.b16 %v2395
        %v3557 = vunpack.c.l.b16 %v2396
        %v3558 = vunpack.c.h.b16 %v2396
        %v3559 = vunpack.c.l.b16 %v2397
        %v3560 = vunpack.c.h.b16 %v2397
        %v3561 = vunpack.c.l.b16 %v2398
        %v3562 = vunpack.c.h.b16 %v2398
        %v3563 = vunpack.c.l.b16 %v2399
        %v3564 = vunpack.c.h.b16 %v2399
        %v3565 = vunpack.c.l.b16 %v2400
        %v3566 = vunpack.c.h.b16 %v2400
        %v3567 = vunpack.c.l.b16 %v2401
        %v3568 = vunpack.c.h.b16 %v2401
        %v3569 = vunpack.c.l.b16 %v2402
        %v3570 = vunpack.c.h.b16 %v2402
        %v3571 = vunpack.c.l.b16 %v2403
        %v3572 = vunpack.c.h.b16 %v2403
        %v3573 = vunpack.c.l.b16 %v2404
        %v3574 = vunpack.c.h.b16 %v2404
        %v3575 = vunpack.c.l.b16 %v2405
        %v3576 = vunpack.c.h.b16 %v2405
        %v3577 = vunpack.c.l.b16 %v2406
        %v3578 = vunpack.c.h.b16 %v2406
        %v3579 = vunpack.c.l.b16 %v2407
        %v3580 = vunpack.c.h.b16 %v2407
        %v3581 = vunpack.c.l.b16 %v2408
        %v3582 = vunpack.c.h.b16 %v2408
        %v3583 = vunpack.c.l.b16 %v2409
        %v3584 = vunpack.c.h.b16 %v2409
        %v3585 = vunpack.c.l.b16 %v2410
        %v3586 = vunpack.c.h.b16 %v2410
        %v3587 = vunpack.c.l.b16 %v2411
        %v3588 = vunpack.c.h.b16 %v2411
        %v3589 = vunpack.c.l.b16 %v2412
        %v3590 = vunpack.c.h.b16 %v2412
        %v3591 = vunpack.c.l.b16 %v2413
        %v3592 = vunpack.c.h.b16 %v2413
        %v3593 = vunpack.c.l.b16 %v2414
        %v3594 = vunpack.c.h.b16 %v2414
        %v3595 = vunpack.c.l.b16 %v2415
        %v3596 = vunpack.c.h.b16 %v2415
        %v3597 = vunpack.c.l.b16 %v2416
        %v3598 = vunpack.c.h.b16 %v2416
        %v3599 = vunpack.c.l.b16 %v2417
        %v3600 = vunpack.c.h.b16 %v2417
        %v3601 = vunpack.c.l.b16 %v2418
        %v3602 = vunpack.c.h.b16 %v2418
        %v3603 = vunpack.c.l.b16 %v2419
        %v3604 = vunpack.c.h.b16 %v2419
        %v3605 = vunpack.c.l.b16 %v2420
        %v3606 = vunpack.c.h.b16 %v2420
        %v3607 = vunpack.c.l.b16 %v2421
        %v3608 = vunpack.c.h.b16 %v2421
        %v3609 = vunpack.c.l.b16 %v2422
        %v3610 = vunpack.c.h.b16 %v2422
        %v3611 = vunpack.c.l.b16 %v2423
        %v3612 = vunpack.c.h.b16 %v2423
        %v3613 = vunpack.c.l.b16 %v2424
        %v3614 = vunpack.c.h.b16 %v2424
        %v3615 = vunpack.c.l.b16 %v2425
        %v3616 = vunpack.c.h.b16 %v2425
        %v3617 = vunpack.c.l.b16 %v2426
        %v3618 = vunpack.c.h.b16 %v2426
        %v3619 = vunpack.c.l.b16 %v2427
        %v3620 = vunpack.c.h.b16 %v2427
        %v3621 = vunpack.c.l.b16 %v2428
        %v3622 = vunpack.c.h.b16 %v2428
        %v3623 = vunpack.c.l.b16 %v2429
        %v3624 = vunpack.c.h.b16 %v2429
        %v3625 = vunpack.c.l.b16 %v2430
        %v3626 = vunpack.c.h.b16 %v2430
        %v3627 = vunpack.c.l.b16 %v2431
        %v3628 = vunpack.c.h.b16 %v2431
        %v3629 = vunpack.c.l.b16 %v2432
        %v3630 = vunpack.c.h.b16 %v2432
        %v3631 = vunpack.c.l.b16 %v2433
        %v3632 = vunpack.c.h.b16 %v2433
        %v3633 = vunpack.c.l.b16 %v2434
        %v3634 = vunpack.c.h.b16 %v2434
        %v3635 = vunpack.c.l.b16 %v2435
        %v3636 = vunpack.c.h.b16 %v2435
        %v3637 = vunpack.c.l.b16 %v2436
        %v3638 = vunpack.c.h.b16 %v2436
        %v3639 = vunpack.c.l.b16 %v2437
        %v3640 = vunpack.c.h.b16 %v2437
        %v3641 = vunpack.c.l.b16 %v2438
        %v3642 = vunpack.c.h.b16 %v2438
        %v3643 = vunpack.c.l.b16 %v2439
        %v3644 = vunpack.c.h.b16 %v2439
        %v3645 = vunpack.c.l.b16 %v2440
        %v3646 = vunpack.c.h.b16 %v2440
        %v3647 = vunpack.c.l.b16 %v2441
        %v3648 = vunpack.c.h.b16 %v2441
        %v3649 = vunpack.c.l.b16 %v2442
        %v3650 = vunpack.c.h.b16 %v2442
        %v3651 = vunpack.c.l.b16 %v2443
        %v3652 = vunpack.c.h.b16 %v2443
        %v3653 = vunpack.c.l.b16 %v2444
        %v3654 = vunpack.c.h.b16 %v2444
        %v3655 = vunpack.c.l.b16 %v2445
        %v3656 = vunpack.c.h.b16 %v2445
        %v3657 = vunpack.c.l.b16 %v2446
        %v3658 = vunpack.c.h.b16 %v2446
        %v3659 = vunpack.c.l.b16 %v2447
        %v3660 = vunpack.c.h.b16 %v2447
        %v3661 = vunpack.c.l.b16 %v2448
        %v3662 = vunpack.c.h.b16 %v2448
        %v3663 = vunpack.c.l.b16 %v2449
        %v3664 = vunpack.c.h.b16 %v2449
        %v3665 = vunpack.c.l.b16 %v2450
        %v3666 = vunpack.c.h.b16 %v2450
        %v3667 = vunpack.c.l.b16 %v2451
        %v3668 = vunpack.c.h.b16 %v2451
        %v3669 = vunpack.c.l.b16 %v2452
        %v3670 = vunpack.c.h.b16 %v2452
        %v3671 = vunpack.c.l.b16 %v2453
        %v3672 = vunpack.c.h.b16 %v2453
        %v3673 = vunpack.c.l.b16 %v2454
        %v3674 = vunpack.c.h.b16 %v2454
        %v3675 = vunpack.c.l.b16 %v2455
        %v3676 = vunpack.c.h.b16 %v2455
        %v3677 = vunpack.c.l.b16 %v2456
        %v3678 = vunpack.c.h.b16 %v2456
        %v3679 = vunpack.c.l.b16 %v2457
        %v3680 = vunpack.c.h.b16 %v2457
        %v3681 = vunpack.c.l.b16 %v2458
        %v3682 = vunpack.c.h.b16 %v2458
        %v3683 = vunpack.c.l.b16 %v2459
        %v3684 = vunpack.c.h.b16 %v2459
        %v3685 = vunpack.c.l.b16 %v2460
        %v3686 = vunpack.c.h.b16 %v2460
        %v3687 = vunpack.c.l.b16 %v2461
        %v3688 = vunpack.c.h.b16 %v2461
        %v3689 = vunpack.c.l.b16 %v2462
        %v3690 = vunpack.c.h.b16 %v2462
        %v3691 = vunpack.c.l.b16 %v2463
        %v3692 = vunpack.c.h.b16 %v2463
        %v3693 = vunpack.c.l.b16 %v2464
        %v3694 = vunpack.c.h.b16 %v2464
        %v3695 = vunpack.c.l.b16 %v2465
        %v3696 = vunpack.c.h.b16 %v2465
        %v3697 = vunpack.c.l.b16 %v2466
        %v3698 = vunpack.c.h.b16 %v2466
        %v3699 = vunpack.c.l.b16 %v2467
        %v3700 = vunpack.c.h.b16 %v2467
        %v3701 = vunpack.c.l.b16 %v2468
        %v3702 = vunpack.c.h.b16 %v2468
        %v3703 = vunpack.c.l.b16 %v2469
        %v3704 = vunpack.c.h.b16 %v2469
        %v3705 = vunpack.c.l.b16 %v2470
        %v3706 = vunpack.c.h.b16 %v2470
        %v3707 = vunpack.c.l.b16 %v2471
        %v3708 = vunpack.c.h.b16 %v2471
        %v3709 = vunpack.c.l.b16 %v2472
        %v3710 = vunpack.c.h.b16 %v2472
        %v3711 = vunpack.c.l.b16 %v2473
        %v3712 = vunpack.c.h.b16 %v2473
        %v3713 = vunpack.c.l.b16 %v2474
        %v3714 = vunpack.c.h.b16 %v2474
        %v3715 = vunpack.c.l.b16 %v2475
        %v3716 = vunpack.c.h.b16 %v2475
        %v3717 = vunpack.c.l.b16 %v2476
        %v3718 = vunpack.c.h.b16 %v2476
        %v3719 = vunpack.c.l.b16 %v2477
        %v3720 = vunpack.c.h.b16 %v2477
        %v3721 = vunpack.c.l.b16 %v2478
        %v3722 = vunpack.c.h.b16 %v2478
        %v3723 = vunpack.c.l.b16 %v2479
        %v3724 = vunpack.c.h.b16 %v2479
        %v3725 = vunpack.c.l.b16 %v2480
        %v3726 = vunpack.c.h.b16 %v2480
        %v3727 = vunpack.c.l.b16 %v2481
        %v3728 = vunpack.c.h.b16 %v2481
        %v3729 = vunpack.c.l.b16 %v2482
        %v3730 = vunpack.c.h.b16 %v2482
        %v3731 = vunpack.c.l.b16 %v2483
        %v3732 = vunpack.c.h.b16 %v2483
        %v3733 = vunpack.c.l.b16 %v2484
        %v3734 = vunpack.c.h.b16 %v2484
        %v3735 = vunpack.c.l.b16 %v2485
        %v3736 = vunpack.c.h.b16 %v2485
        %v3737 = vunpack.c.l.b16 %v2486
        %v3738 = vunpack.c.h.b16 %v2486
        %v3739 = vunpack.c.l.b16 %v2487
        %v3740 = vunpack.c.h.b16 %v2487
        %v3741 = vunpack.c.l.b16 %v2488
        %v3742 = vunpack.c.h.b16 %v2488
        %v3743 = vunpack.c.l.b16 %v2489
        %v3744 = vunpack.c.h.b16 %v2489
        %v3745 = vunpack.c.l.b16 %v2490
        %v3746 = vunpack.c.h.b16 %v2490
        %v3747 = vunpack.c.l.b16 %v2491
        %v3748 = vunpack.c.h.b16 %v2491
        %v3749 = vunpack.c.l.b16 %v2492
        %v3750 = vunpack.c.h.b16 %v2492
        %v3751 = vunpack.c.l.b16 %v2493
        %v3752 = vunpack.c.h.b16 %v2493
        %v3753 = vunpack.c.l.b16 %v2494
        %v3754 = vunpack.c.h.b16 %v2494
        %v3755 = vunpack.c.l.b16 %v2495
        %v3756 = vunpack.c.h.b16 %v2495
        %v3757 = vunpack.c.l.b16 %v2496
        %v3758 = vunpack.c.h.b16 %v2496
        %v3759 = vunpack.c.l.b16 %v2497
        %v3760 = vunpack.c.h.b16 %v2497
        %v3761 = vunpack.c.l.b16 %v2498
        %v3762 = vunpack.c.h.b16 %v2498
        %v3763 = vunpack.c.l.b16 %v2499
        %v3764 = vunpack.c.h.b16 %v2499
        %v3765 = vunpack.c.l.b16 %v2500
        %v3766 = vunpack.c.h.b16 %v2500
        %v3767 = vunpack.c.l.b16 %v2501
        %v3768 = vunpack.c.h.b16 %v2501
        %v3769 = vunpack.c.l.b16 %v2502
        %v3770 = vunpack.c.h.b16 %v2502
        %v3771 = vunpack.c.l.b16 %v2503
        %v3772 = vunpack.c.h.b16 %v2503
        %v3773 = vunpack.c.l.b16 %v2504
        %v3774 = vunpack.c.h.b16 %v2504
        %v3775 = vunpack.c.l.b16 %v2505
        %v3776 = vunpack.c.h.b16 %v2505
        %v3777 = vunpack.c.l.b16 %v2506
        %v3778 = vunpack.c.h.b16 %v2506
        %v3779 = vunpack.c.l.b16 %v2507
        %v3780 = vunpack.c.h.b16 %v2507
        %v3781 = vunpack.c.l.b16 %v2508
        %v3782 = vunpack.c.h.b16 %v2508
        %v3783 = vunpack.c.l.b16 %v2509
        %v3784 = vunpack.c.h.b16 %v2509
        %v3785 = vunpack.c.l.b16 %v2510
        %v3786 = vunpack.c.h.b16 %v2510
        %v3787 = vunpack.c.l.b16 %v2511
        %v3788 = vunpack.c.h.b16 %v2511
        %v3789 = vunpack.c.l.b16 %v2512
        %v3790 = vunpack.c.h.b16 %v2512
        %v3791 = vunpack.c.l.b16 %v2513
        %v3792 = vunpack.c.h.b16 %v2513
        %v3793 = vunpack.c.l.b16 %v2514
        %v3794 = vunpack.c.h.b16 %v2514
        %v3795 = vunpack.c.l.b16 %v2515
        %v3796 = vunpack.c.h.b16 %v2515
        %v3797 = vunpack.c.l.b16 %v2516
        %v3798 = vunpack.c.h.b16 %v2516
        %v3799 = vunpack.c.l.b16 %v2517
        %v3800 = vunpack.c.h.b16 %v2517
        %v3801 = vunpack.c.l.b16 %v2518
        %v3802 = vunpack.c.h.b16 %v2518
        %v3803 = vunpack.c.l.b16 %v2519
        %v3804 = vunpack.c.h.b16 %v2519
        %v3805 = vunpack.c.l.b16 %v2520
        %v3806 = vunpack.c.h.b16 %v2520
        %v3807 = vunpack.c.l.b16 %v2521
        %v3808 = vunpack.c.h.b16 %v2521
        %v3809 = vunpack.c.l.b16 %v2522
        %v3810 = vunpack.c.h.b16 %v2522
        %v3811 = vunpack.c.l.b16 %v2523
        %v3812 = vunpack.c.h.b16 %v2523
        %v3813 = vunpack.c.l.b16 %v2524
        %v3814 = vunpack.c.h.b16 %v2524
        %v3815 = vunpack.c.l.b16 %v2525
        %v3816 = vunpack.c.h.b16 %v2525
        %v3817 = vunpack.c.l.b16 %v2526
        %v3818 = vunpack.c.h.b16 %v2526
        %v3819 = vunpack.c.l.b16 %v2527
        %v3820 = vunpack.c.h.b16 %v2527
        %v3821 = vunpack.c.l.b16 %v2528
        %v3822 = vunpack.c.h.b16 %v2528
        %v3823 = vunpack.c.l.b16 %v2529
        %v3824 = vunpack.c.h.b16 %v2529
        %v3825 = vunpack.c.l.b16 %v2530
        %v3826 = vunpack.c.h.b16 %v2530
        %v3827 = vunpack.c.l.b16 %v2531
        %v3828 = vunpack.c.h.b16 %v2531
        %v3829 = vunpack.c.l.b16 %v2532
        %v3830 = vunpack.c.h.b16 %v2532
        %v3831 = vunpack.c.l.b16 %v2533
        %v3832 = vunpack.c.h.b16 %v2533
        %v3833 = vunpack.c.l.b16 %v2534
        %v3834 = vunpack.c.h.b16 %v2534
        %v3835 = vunpack.c.l.b16 %v2535
        %v3836 = vunpack.c.h.b16 %v2535
        %v3837 = vunpack.c.l.b16 %v2536
        %v3838 = vunpack.c.h.b16 %v2536
        %v3839 = vunpack.c.l.b16 %v2537
        %v3840 = vunpack.c.h.b16 %v2537
        %v3841 = vunpack.c.l.b16 %v2538
        %v3842 = vunpack.c.h.b16 %v2538
        %v3843 = vunpack.c.l.b16 %v2539
        %v3844 = vunpack.c.h.b16 %v2539
        %v3845 = vunpack.c.l.b16 %v2540
        %v3846 = vunpack.c.h.b16 %v2540
        %v3847 = vunpack.c.l.b16 %v2541
        %v3848 = vunpack.c.h.b16 %v2541
        %v3849 = vunpack.c.l.b16 %v2542
        %v3850 = vunpack.c.h.b16 %v2542
        %v3851 = vunpack.c.l.b16 %v2543
        %v3852 = vunpack.c.h.b16 %v2543
        %v3853 = vunpack.c.l.b16 %v2544
        %v3854 = vunpack.c.h.b16 %v2544
        %v3855 = vunpack.c.l.b16 %v2545
        %v3856 = vunpack.c.h.b16 %v2545
        %v3857 = vunpack.c.l.b16 %v2546
        %v3858 = vunpack.c.h.b16 %v2546
        %v3859 = vunpack.c.l.b16 %v2547
        %v3860 = vunpack.c.h.b16 %v2547
        %v3861 = vunpack.c.l.b16 %v2548
        %v3862 = vunpack.c.h.b16 %v2548
        %v3863 = vunpack.c.l.b16 %v2549
        %v3864 = vunpack.c.h.b16 %v2549
        %v3865 = vunpack.c.l.b16 %v2550
        %v3866 = vunpack.c.h.b16 %v2550
        %v3867 = vunpack.c.l.b16 %v2551
        %v3868 = vunpack.c.h.b16 %v2551
        %v3869 = vunpack.c.l.b16 %v2552
        %v3870 = vunpack.c.h.b16 %v2552
        %v3871 = vunpack.c.l.b16 %v2553
        %v3872 = vunpack.c.h.b16 %v2553
        %v3873 = vunpack.c.l.b16 %v2554
        %v3874 = vunpack.c.h.b16 %v2554
        %v3875 = vunpack.c.l.b16 %v2555
        %v3876 = vunpack.c.h.b16 %v2555
        %v3877 = vunpack.c.l.b16 %v2556
        %v3878 = vunpack.c.h.b16 %v2556
        %v3879 = vunpack.c.l.b16 %v2557
        %v3880 = vunpack.c.h.b16 %v2557
        %v3881 = vunpack.c.l.b16 %v2558
        %v3882 = vunpack.c.h.b16 %v2558
        %v3883 = vunpack.c.l.b16 %v2559
        %v3884 = vunpack.c.h.b16 %v2559
        %v3885 = vunpack.c.l.b16 %v2560
        %v3886 = vunpack.c.h.b16 %v2560
        %v3887 = vunpack.c.l.b16 %v2561
        %v3888 = vunpack.c.h.b16 %v2561
        %v3889 = vunpack.c.l.b16 %v2562
        %v3890 = vunpack.c.h.b16 %v2562
        %v3891 = vunpack.c.l.b16 %v2563
        %v3892 = vunpack.c.h.b16 %v2563
        %v3893 = vunpack.c.l.b16 %v2564
        %v3894 = vunpack.c.h.b16 %v2564
        %v3895 = vunpack.c.l.b16 %v2565
        %v3896 = vunpack.c.h.b16 %v2565
        %v3897 = vunpack.c.l.b16 %v2566
        %v3898 = vunpack.c.h.b16 %v2566
        %v3899 = vunpack.c.l.b16 %v2567
        %v3900 = vunpack.c.h.b16 %v2567
        %v3901 = vunpack.c.l.b16 %v2568
        %v3902 = vunpack.c.h.b16 %v2568
        %v3903 = vunpack.c.l.b16 %v2569
        %v3904 = vunpack.c.h.b16 %v2569
        %v3905 = vunpack.c.l.b16 %v2570
        %v3906 = vunpack.c.h.b16 %v2570
        %v3907 = vunpack.c.l.b16 %v2571
        %v3908 = vunpack.c.h.b16 %v2571
        %v3909 = vunpack.c.l.b16 %v2572
        %v3910 = vunpack.c.h.b16 %v2572
        %v3911 = vunpack.c.l.b16 %v2573
        %v3912 = vunpack.c.h.b16 %v2573
        %v3913 = vunpack.c.l.b16 %v2574
        %v3914 = vunpack.c.h.b16 %v2574
        %v3915 = vunpack.c.l.b16 %v2575
        %v3916 = vunpack.c.h.b16 %v2575
        %v3917 = vunpack.c.l.b16 %v2576
        %v3918 = vunpack.c.h.b16 %v2576
        %v3919 = vunpack.c.l.b16 %v2577
        %v3920 = vunpack.c.h.b16 %v2577
        %v3921 = vunpack.c.l.b16 %v2578
        %v3922 = vunpack.c.h.b16 %v2578
        %v3923 = vunpack.c.l.b16 %v2579
        %v3924 = vunpack.c.h.b16 %v2579
        %v3925 = vunpack.c.l.b16 %v2580
        %v3926 = vunpack.c.h.b16 %v2580
        %v3927 = vunpack.c.l.b16 %v2581
        %v3928 = vunpack.c.h.b16 %v2581
        %v3929 = vunpack.c.l.b16 %v2582
        %v3930 = vunpack.c.h.b16 %v2582
        %v3931 = vunpack.c.l.b16 %v2583
        %v3932 = vunpack.c.h.b16 %v2583
        %v3933 = vunpack.c.l.b16 %v2584
        %v3934 = vunpack.c.h.b16 %v2584
        %v3935 = vunpack.c.l.b16 %v2585
        %v3936 = vunpack.c.h.b16 %v2585
        %v3937 = vunpack.c.l.b16 %v2586
        %v3938 = vunpack.c.h.b16 %v2586
        %v3939 = vpack.c.b16 %v3187, %v3183
        %v3940 = vpack.c.b16 %v3188, %v3184
        %v3941 = vpack.c.b16 %v3189, %v3185
        %v3942 = vpack.c.b16 %v3190, %v3186
        %v3943 = vpack.c.b16 %v3195, %v3191
        %v3944 = vpack.c.b16 %v3196, %v3192
        %v3945 = vpack.c.b16 %v3197, %v3193
        %v3946 = vpack.c.b16 %v3198, %v3194
        %v3947 = vpack.c.b16 %v3203, %v3199
        %v3948 = vpack.c.b16 %v3204, %v3200
        %v3949 = vpack.c.b16 %v3205, %v3201
        %v3950 = vpack.c.b16 %v3206, %v3202
        %v3951 = vpack.c.b16 %v3211, %v3207
        %v3952 = vpack.c.b16 %v3212, %v3208
        %v3953 = vpack.c.b16 %v3213, %v3209
        %v3954 = vpack.c.b16 %v3214, %v3210
        %v3955 = vpack.c.b16 %v3219, %v3215
        %v3956 = vpack.c.b16 %v3220, %v3216
        %v3957 = vpack.c.b16 %v3221, %v3217
        %v3958 = vpack.c.b16 %v3222, %v3218
        %v3959 = vpack.c.b16 %v3227, %v3223
        %v3960 = vpack.c.b16 %v3228, %v3224
        %v3961 = vpack.c.b16 %v3229, %v3225
        %v3962 = vpack.c.b16 %v3230, %v3226
        %v3963 = vpack.c.b16 %v3235, %v3231
        %v3964 = vpack.c.b16 %v3236, %v3232
        %v3965 = vpack.c.b16 %v3237, %v3233
        %v3966 = vpack.c.b16 %v3238, %v3234
        %v3967 = vpack.c.b16 %v3243, %v3239
        %v3968 = vpack.c.b16 %v3244, %v3240
        %v3969 = vpack.c.b16 %v3245, %v3241
        %v3970 = vpack.c.b16 %v3246, %v3242
        %v3971 = vpack.c.b16 %v3251, %v3247
        %v3972 = vpack.c.b16 %v3252, %v3248
        %v3973 = vpack.c.b16 %v3253, %v3249
        %v3974 = vpack.c.b16 %v3254, %v3250
        %v3975 = vpack.c.b16 %v3259, %v3255
        %v3976 = vpack.c.b16 %v3260, %v3256
        %v3977 = vpack.c.b16 %v3261, %v3257
        %v3978 = vpack.c.b16 %v3262, %v3258
        %v3979 = vpack.c.b16 %v3267, %v3263
        %v3980 = vpack.c.b16 %v3268, %v3264
        %v3981 = vpack.c.b16 %v3269, %v3265
        %v3982 = vpack.c.b16 %v3270, %v3266
        %v3983 = vpack.c.b16 %v3275, %v3271
        %v3984 = vpack.c.b16 %v3276, %v3272
        %v3985 = vpack.c.b16 %v3277, %v3273
        %v3986 = vpack.c.b16 %v3278, %v3274
        %v3987 = vpack.c.b16 %v3283, %v3279
        %v3988 = vpack.c.b16 %v3284, %v3280
        %v3989 = vpack.c.b16 %v3285, %v3281
        %v3990 = vpack.c.b16 %v3286, %v3282
        %v3991 = vpack.c.b16 %v3291, %v3287
        %v3992 = vpack.c.b16 %v3292, %v3288
        %v3993 = vpack.c.b16 %v3293, %v3289
        %v3994 = vpack.c.b16 %v3294, %v3290
        %v3995 = vpack.c.b16 %v3299, %v3295
        %v3996 = vpack.c.b16 %v3300, %v3296
        %v3997 = vpack.c.b16 %v3301, %v3297
        %v3998 = vpack.c.b16 %v3302, %v3298
        %v3999 = vpack.c.b16 %v3307, %v3303
        %v4000 = vpack.c.b16 %v3308, %v3304
        %v4001 = vpack.c.b16 %v3309, %v3305
        %v4002 = vpack.c.b16 %v3310, %v3306
        %v4003 = vpack.c.b16 %v3315, %v3311
        %v4004 = vpack.c.b16 %v3316, %v3312
        %v4005 = vpack.c.b16 %v3317, %v3313
        %v4006 = vpack.c.b16 %v3318, %v3314
        %v4007 = vpack.c.b16 %v3323, %v3319
        %v4008 = vpack.c.b16 %v3324, %v3320
        %v4009 = vpack.c.b16 %v3325, %v3321
        %v4010 = vpack.c.b16 %v3326, %v3322
        %v4011 = vpack.c.b16 %v3331, %v3327
        %v4012 = vpack.c.b16 %v3332, %v3328
        %v4013 = vpack.c.b16 %v3333, %v3329
        %v4014 = vpack.c.b16 %v3334, %v3330
        %v4015 = vpack.c.b16 %v3339, %v3335
        %v4016 = vpack.c.b16 %v3340, %v3336
        %v4017 = vpack.c.b16 %v3341, %v3337
        %v4018 = vpack.c.b16 %v3342, %v3338
        %v4019 = vpack.c.b16 %v3347, %v3343
        %v4020 = vpack.c.b16 %v3348, %v3344
        %v4021 = vpack.c.b16 %v3349, %v3345
        %v4022 = vpack.c.b16 %v3350, %v3346
        %v4023 = vpack.c.b16 %v3355, %v3351
        %v4024 = vpack.c.b16 %v3356, %v3352
        %v4025 = vpack.c.b16 %v3357, %v3353
        %v4026 = vpack.c.b16 %v3358, %v3354
        %v4027 = vpack.c.b16 %v3363, %v3359
        %v4028 = vpack.c.b16 %v3364, %v3360
        %v4029 = vpack.c.b16 %v3365, %v3361
        %v4030 = vpack.c.b16 %v3366, %v3362
        %v4031 = vpack.c.b16 %v3371, %v3367
        %v4032 = vpack.c.b16 %v3372, %v3368
        %v4033 = vpack.c.b16 %v3373, %v3369
        %v4034 = vpack.c.b16 %v3374, %v3370
        %v4035 = vpack.c.b16 %v3379, %v3375
        %v4036 = vpack.c.b16 %v3380, %v3376
        %v4037 = vpack.c.b16 %v3381, %v3377
        %v4038 = vpack.c.b16 %v3382, %v3378
        %v4039 = vpack.c.b16 %v3387, %v3383
        %v4040 = vpack.c.b16 %v3388, %v3384
        %v4041 = vpack.c.b16 %v3389, %v3385
        %v4042 = vpack.c.b16 %v3390, %v3386
        %v4043 = vpack.c.b16 %v3395, %v3391
        %v4044 = vpack.c.b16 %v3396, %v3392
        %v4045 = vpack.c.b16 %v3397, %v3393
        %v4046 = vpack.c.b16 %v3398, %v3394
        %v4047 = vpack.c.b16 %v3403, %v3399
        %v4048 = vpack.c.b16 %v3404, %v3400
        %v4049 = vpack.c.b16 %v3405, %v3401
        %v4050 = vpack.c.b16 %v3406, %v3402
        %v4051 = vpack.c.b16 %v3411, %v3407
        %v4052 = vpack.c.b16 %v3412, %v3408
        %v4053 = vpack.c.b16 %v3413, %v3409
        %v4054 = vpack.c.b16 %v3414, %v3410
        %v4055 = vpack.c.b16 %v3419, %v3415
        %v4056 = vpack.c.b16 %v3420, %v3416
        %v4057 = vpack.c.b16 %v3421, %v3417
        %v4058 = vpack.c.b16 %v3422, %v3418
        %v4059 = vpack.c.b16 %v3427, %v3423
        %v4060 = vpack.c.b16 %v3428, %v3424
        %v4061 = vpack.c.b16 %v3429, %v3425
        %v4062 = vpack.c.b16 %v3430, %v3426
        %v4063 = vpack.c.b16 %v3435, %v3431
        %v4064 = vpack.c.b16 %v3436, %v3432
        %v4065 = vpack.c.b16 %v3437, %v3433
        %v4066 = vpack.c.b16 %v3438, %v3434
        %v4067 = vpack.c.b16 %v3443, %v3439
        %v4068 = vpack.c.b16 %v3444, %v3440
        %v4069 = vpack.c.b16 %v3445, %v3441
        %v4070 = vpack.c.b16 %v3446, %v3442
        %v4071 = vpack.c.b16 %v3451, %v3447
        %v4072 = vpack.c.b16 %v3452, %v3448
        %v4073 = vpack.c.b16 %v3453, %v3449
        %v4074 = vpack.c.b16 %v3454, %v3450
        %v4075 = vpack.c.b16 %v3459, %v3455
        %v4076 = vpack.c.b16 %v3460, %v3456
        %v4077 = vpack.c.b16 %v3461, %v3457
        %v4078 = vpack.c.b16 %v3462, %v3458
        %v4079 = vpack.c.b16 %v3467, %v3463
        %v4080 = vpack.c.b16 %v3468, %v3464
        %v4081 = vpack.c.b16 %v3469, %v3465
        %v4082 = vpack.c.b16 %v3470, %v3466
        %v4083 = vpack.c.b16 %v3475, %v3471
        %v4084 = vpack.c.b16 %v3476, %v3472
        %v4085 = vpack.c.b16 %v3477, %v3473
        %v4086 = vpack.c.b16 %v3478, %v3474
        %v4087 = vpack.c.b16 %v3483, %v3479
        %v4088 = vpack.c.b16 %v3484, %v3480
        %v4089 = vpack.c.b16 %v3485, %v3481
        %v4090 = vpack.c.b16 %v3486, %v3482
        %v4091 = vpack.c.b16 %v3491, %v3487
        %v4092 = vpack.c.b16 %v3492, %v3488
        %v4093 = vpack.c.b16 %v3493, %v3489
        %v4094 = vpack.c.b16 %v3494, %v3490
        %v4095 = vpack.c.b16 %v3499, %v3495
        %v4096 = vpack.c.b16 %v3500, %v3496
        %v4097 = vpack.c.b16 %v3501, %v3497
        %v4098 = vpack.c.b16 %v3502, %v3498
        %v4099 = vpack.c.b16 %v3507, %v3503
        %v4100 = vpack.c.b16 %v3508, %v3504
        %v4101 = vpack.c.b16 %v3509, %v3505
        %v4102 = vpack.c.b16 %v3510, %v3506
        %v4103 = vpack.c.b16 %v3515, %v3511
        %v4104 = vpack.c.b16 %v3516, %v3512
        %v4105 = vpack.c.b16 %v3517, %v3513
        %v4106 = vpack.c.b16 %v3518, %v3514
        %v4107 = vpack.c.b16 %v3523, %v3519
        %v4108 = vpack.c.b16 %v3524, %v3520
        %v4109 = vpack.c.b16 %v3525, %v3521
        %v4110 = vpack.c.b16 %v3526, %v3522
        %v4111 = vpack.c.b16 %v3531, %v3527
        %v4112 = vpack.c.b16 %v3532, %v3528
        %v4113 = vpack.c.b16 %v3533, %v3529
        %v4114 = vpack.c.b16 %v3534, %v3530
        %v4115 = vpack.c.b16 %v3539, %v3535
        %v4116 = vpack.c.b16 %v3540, %v3536
        %v4117 = vpack.c.b16 %v3541, %v3537
        %v4118 = vpack.c.b16 %v3542, %v3538
        %v4119 = vpack.c.b16 %v3547, %v3543
        %v4120 = vpack.c.b16 %v3548, %v3544
        %v4121 = vpack.c.b16 %v3549, %v3545
        %v4122 = vpack.c.b16 %v3550, %v3546
        %v4123 = vpack.c.b16 %v3555, %v3551
        %v4124 = vpack.c.b16 %v3556, %v3552
        %v4125 = vpack.c.b16 %v3557, %v3553
        %v4126 = vpack.c.b16 %v3558, %v3554
        %v4127 = vpack.c.b16 %v3563, %v3559
        %v4128 = vpack.c.b16 %v3564, %v3560
        %v4129 = vpack.c.b16 %v3565, %v3561
        %v4130 = vpack.c.b16 %v3566, %v3562
        %v4131 = vpack.c.b16 %v3571, %v3567
        %v4132 = vpack.c.b16 %v3572, %v3568
        %v4133 = vpack.c.b16 %v3573, %v3569
        %v4134 = vpack.c.b16 %v3574, %v3570
        %v4135 = vpack.c.b16 %v3579, %v3575
        %v4136 = vpack.c.b16 %v3580, %v3576
        %v4137 = vpack.c.b16 %v3581, %v3577
        %v4138 = vpack.c.b16 %v3582, %v3578
        %v4139 = vpack.c.b16 %v3587, %v3583
        %v4140 = vpack.c.b16 %v3588, %v3584
        %v4141 = vpack.c.b16 %v3589, %v3585
        %v4142 = vpack.c.b16 %v3590, %v3586
        %v4143 = vpack.c.b16 %v3595, %v3591
        %v4144 = vpack.c.b16 %v3596, %v3592
        %v4145 = vpack.c.b16 %v3597, %v3593
        %v4146 = vpack.c.b16 %v3598, %v3594
        %v4147 = vpack.c.b16 %v3603, %v3599
        %v4148 = vpack.c.b16 %v3604, %v3600
        %v4149 = vpack.c.b16 %v3605, %v3601
        %v4150 = vpack.c.b16 %v3606, %v3602
        %v4151 = vpack.c.b16 %v3611, %v3607
        %v4152 = vpack.c.b16 %v3612, %v3608
        %v4153 = vpack.c.b16 %v3613, %v3609
        %v4154 = vpack.c.b16 %v3614, %v3610
        %v4155 = vpack.c.b16 %v3619, %v3615
        %v4156 = vpack.c.b16 %v3620, %v3616
        %v4157 = vpack.c.b16 %v3621, %v3617
        %v4158 = vpack.c.b16 %v3622, %v3618
        %v4159 = vpack.c.b16 %v3627, %v3623
        %v4160 = vpack.c.b16 %v3628, %v3624
        %v4161 = vpack.c.b16 %v3629, %v3625
        %v4162 = vpack.c.b16 %v3630, %v3626
        %v4163 = vpack.c.b16 %v3635, %v3631
        %v4164 = vpack.c.b16 %v3636, %v3632
        %v4165 = vpack.c.b16 %v3637, %v3633
        %v4166 = vpack.c.b16 %v3638, %v3634
        %v4167 = vpack.c.b16 %v3643, %v3639
        %v4168 = vpack.c.b16 %v3644, %v3640
        %v4169 = vpack.c.b16 %v3645, %v3641
        %v4170 = vpack.c.b16 %v3646, %v3642
        %v4171 = vpack.c.b16 %v3651, %v3647
        %v4172 = vpack.c.b16 %v3652, %v3648
        %v4173 = vpack.c.b16 %v3653, %v3649
        %v4174 = vpack.c.b16 %v3654, %v3650
        %v4175 = vpack.c.b16 %v3659, %v3655
        %v4176 = vpack.c.b16 %v3660, %v3656
        %v4177 = vpack.c.b16 %v3661, %v3657
        %v4178 = vpack.c.b16 %v3662, %v3658
        %v4179 = vpack.c.b16 %v3667, %v3663
        %v4180 = vpack.c.b16 %v3668, %v3664
        %v4181 = vpack.c.b16 %v3669, %v3665
        %v4182 = vpack.c.b16 %v3670, %v3666
        %v4183 = vpack.c.b16 %v3675, %v3671
        %v4184 = vpack.c.b16 %v3676, %v3672
        %v4185 = vpack.c.b16 %v3677, %v3673
        %v4186 = vpack.c.b16 %v3678, %v3674
        %v4187 = vpack.c.b16 %v3683, %v3679
        %v4188 = vpack.c.b16 %v3684, %v3680
        %v4189 = vpack.c.b16 %v3685, %v3681
        %v4190 = vpack.c.b16 %v3686, %v3682
        %v4191 = vpack.c.b16 %v3691, %v3687
        %v4192 = vpack.c.b16 %v3692, %v3688
        %v4193 = vpack.c.b16 %v3693, %v3689
        %v4194 = vpack.c.b16 %v3694, %v3690
        %v4195 = vpack.c.b16 %v3699, %v3695
        %v4196 = vpack.c.b16 %v3700, %v3696
        %v4197 = vpack.c.b16 %v3701, %v3697
        %v4198 = vpack.c.b16 %v3702, %v3698
        %v4199 = vpack.c.b16 %v3707, %v3703
        %v4200 = vpack.c.b16 %v3708, %v3704
        %v4201 = vpack.c.b16 %v3709, %v3705
        %v4202 = vpack.c.b16 %v3710, %v3706
        %v4203 = vpack.c.b16 %v3715, %v3711
        %v4204 = vpack.c.b16 %v3716, %v3712
        %v4205 = vpack.c.b16 %v3717, %v3713
        %v4206 = vpack.c.b16 %v3718, %v3714
        %v4207 = vpack.c.b16 %v3723, %v3719
        %v4208 = vpack.c.b16 %v3724, %v3720
        %v4209 = vpack.c.b16 %v3725, %v3721
        %v4210 = vpack.c.b16 %v3726, %v3722
        %v4211 = vpack.c.b16 %v3731, %v3727
        %v4212 = vpack.c.b16 %v3732, %v3728
        %v4213 = vpack.c.b16 %v3733, %v3729
        %v4214 = vpack.c.b16 %v3734, %v3730
        %v4215 = vpack.c.b16 %v3739, %v3735
        %v4216 = vpack.c.b16 %v3740, %v3736
        %v4217 = vpack.c.b16 %v3741, %v3737
        %v4218 = vpack.c.b16 %v3742, %v3738
        %v4219 = vpack.c.b16 %v3747, %v3743
        %v4220 = vpack.c.b16 %v3748, %v3744
        %v4221 = vpack.c.b16 %v3749, %v3745
        %v4222 = vpack.c.b16 %v3750, %v3746
        %v4223 = vpack.c.b16 %v3755, %v3751
        %v4224 = vpack.c.b16 %v3756, %v3752
        %v4225 = vpack.c.b16 %v3757, %v3753
        %v4226 = vpack.c.b16 %v3758, %v3754
        %v4227 = vpack.c.b16 %v3763, %v3759
        %v4228 = vpack.c.b16 %v3764, %v3760
        %v4229 = vpack.c.b16 %v3765, %v3761
        %v4230 = vpack.c.b16 %v3766, %v3762
        %v4231 = vpack.c.b16 %v3771, %v3767
        %v4232 = vpack.c.b16 %v3772, %v3768
        %v4233 = vpack.c.b16 %v3773, %v3769
        %v4234 = vpack.c.b16 %v3774, %v3770
        %v4235 = vpack.c.b16 %v3779, %v3775
        %v4236 = vpack.c.b16 %v3780, %v3776
        %v4237 = vpack.c.b16 %v3781, %v3777
        %v4238 = vpack.c.b16 %v3782, %v3778
        %v4239 = vpack.c.b16 %v3787, %v3783
        %v4240 = vpack.c.b16 %v3788, %v3784
        %v4241 = vpack.c.b16 %v3789, %v3785
        %v4242 = vpack.c.b16 %v3790, %v3786
        %v4243 = vpack.c.b16 %v3795, %v3791
        %v4244 = vpack.c.b16 %v3796, %v3792
        %v4245 = vpack.c.b16 %v3797, %v3793
        %v4246 = vpack.c.b16 %v3798, %v3794
        %v4247 = vpack.c.b16 %v3803, %v3799
        %v4248 = vpack.c.b16 %v3804, %v3800
        %v4249 = vpack.c.b16 %v3805, %v3801
        %v4250 = vpack.c.b16 %v3806, %v3802
        %v4251 = vpack.c.b16 %v3811, %v3807
        %v4252 = vpack.c.b16 %v3812, %v3808
        %v4253 = vpack.c.b16 %v3813, %v3809
        %v4254 = vpack.c.b16 %v3814, %v3810
        %v4255 = vpack.c.b16 %v3819, %v3815
        %v4256 = vpack.c.b16 %v3820, %v3816
        %v4257 = vpack.c.b16 %v3821, %v3817
        %v4258 = vpack.c.b16 %v3822, %v3818
        %v4259 = vpack.c.b16 %v3827, %v3823
        %v4260 = vpack.c.b16 %v3828, %v3824
        %v4261 = vpack.c.b16 %v3829, %v3825
        %v4262 = vpack.c.b16 %v3830, %v3826
        %v4263 = vpack.c.b16 %v3835, %v3831
        %v4264 = vpack.c.b16 %v3836, %v3832
        %v4265 = vpack.c.b16 %v3837, %v3833
        %v4266 = vpack.c.b16 %v3838, %v3834
        %v4267 = vpack.c.b16 %v3843, %v3839
        %v4268 = vpack.c.b16 %v3844, %v3840
        %v4269 = vpack.c.b16 %v3845, %v3841
        %v4270 = vpack.c.b16 %v3846, %v3842
        %v4271 = vpack.c.b16 %v3851, %v3847
        %v4272 = vpack.c.b16 %v3852, %v3848
        %v4273 = vpack.c.b16 %v3853, %v3849
        %v4274 = vpack.c.b16 %v3854, %v3850
        %v4275 = vpack.c.b16 %v3859, %v3855
        %v4276 = vpack.c.b16 %v3860, %v3856
        %v4277 = vpack.c.b16 %v3861, %v3857
        %v4278 = vpack.c.b16 %v3862, %v3858
        %v4279 = vpack.c.b16 %v3867, %v3863
        %v4280 = vpack.c.b16 %v3868, %v3864
        %v4281 = vpack.c.b16 %v3869, %v3865
        %v4282 = vpack.c.b16 %v3870, %v3866
        %v4283 = vpack.c.b16 %v3875, %v3871
        %v4284 = vpack.c.b16 %v3876, %v3872
        %v4285 = vpack.c.b16 %v3877, %v3873
        %v4286 = vpack.c.b16 %v3878, %v3874
        %v4287 = vpack.c.b16 %v3883, %v3879
        %v4288 = vpack.c.b16 %v3884, %v3880
        %v4289 = vpack.c.b16 %v3885, %v3881
        %v4290 = vpack.c.b16 %v3886, %v3882
        %v4291 = vpack.c.b16 %v3891, %v3887
        %v4292 = vpack.c.b16 %v3892, %v3888
        %v4293 = vpack.c.b16 %v3893, %v3889
        %v4294 = vpack.c.b16 %v3894, %v3890
        %v4295 = vpack.c.b16 %v3899, %v3895
        %v4296 = vpack.c.b16 %v3900, %v3896
        %v4297 = vpack.c.b16 %v3901, %v3897
        %v4298 = vpack.c.b16 %v3902, %v3898
        %v4299 = vpack.c.b16 %v3907, %v3903
        %v4300 = vpack.c.b16 %v3908, %v3904
        %v4301 = vpack.c.b16 %v3909, %v3905
        %v4302 = vpack.c.b16 %v3910, %v3906
        %v4303 = vpack.c.b16 %v3915, %v3911
        %v4304 = vpack.c.b16 %v3916, %v3912
        %v4305 = vpack.c.b16 %v3917, %v3913
        %v4306 = vpack.c.b16 %v3918, %v3914
        %v4307 = vpack.c.b16 %v3923, %v3919
        %v4308 = vpack.c.b16 %v3924, %v3920
        %v4309 = vpack.c.b16 %v3925, %v3921
        %v4310 = vpack.c.b16 %v3926, %v3922
        %v4311 = vpack.c.b16 %v3931, %v3927
        %v4312 = vpack.c.b16 %v3932, %v3928
        %v4313 = vpack.c.b16 %v3933, %v3929
        %v4314 = vpack.c.b16 %v3934, %v3930
        %v4315 = vpack.c.b16 %v3935, %v3935
        %v4316 = vpack.c.b16 %v3936, %v3936
        %v4317 = vpack.c.b16 %v3937, %v3937
        %v4318 = vpack.c.b16 %v3938, %v3938
        %vm4695 = vcmask 850944
        %v4697 = vsel %vm4695, %v2724, 0
        %v4700 = vsel %vm4695, %v2736, 0
        %v4703 = vsel %vm4695, %v2748, 0
        %v4706 = vsel %vm4695, %v2760, 0
        %vm4708 = vcmask 1043456
        %v4710 = vsel %vm4708, %v4315, 0
        %v4713 = vsel %vm4708, %v4316, 0
        %v4716 = vsel %vm4708, %v4317, 0
        %v4719 = vsel %vm4708, %v4318, 0
        %4721 = vmatprep.subr.bf16.mxu0 %v3940
        %4722 = vmatpush1.bf16.msra.mxu0 %v3939
        %4723 = vmatprep.subr.bf16.mxu0 %v3944
        %4724 = vmatpush1.bf16.msra.mxu0 %v3943
        %4725 = vmatprep.subr.bf16.mxu0 %v3948
        %4726 = vmatpush1.bf16.msra.mxu0 %v3947
        %4727 = vmatprep.subr.bf16.mxu0 %v3952
        %4728 = vmatpush1.bf16.msra.mxu0 %v3951
        %4729 = vmatprep.subr.bf16.mxu0 %v3956
        %4730 = vmatpush1.bf16.msra.mxu0 %v3955
        %4731 = vmatprep.subr.bf16.mxu0 %v3960
        %4732 = vmatpush1.bf16.msra.mxu0 %v3959
        %4733 = vmatprep.subr.bf16.mxu0 %v3964
        %4734 = vmatpush1.bf16.msra.mxu0 %v3963
        %4735 = vmatprep.subr.bf16.mxu0 %v3968
        %4736 = vmatpush1.bf16.msra.mxu0 %v3967
        %4737 = vmatprep.subr.bf16.mxu0 %v3972
        %4738 = vmatpush1.bf16.msra.mxu0 %v3971
        %4739 = vmatprep.subr.bf16.mxu0 %v3976
        %4740 = vmatpush1.bf16.msra.mxu0 %v3975
        %4741 = vmatprep.subr.bf16.mxu0 %v3980
        %4742 = vmatpush1.bf16.msra.mxu0 %v3979
        %4743 = vmatprep.subr.bf16.mxu0 %v3984
        %4744 = vmatpush1.bf16.msra.mxu0 %v3983
        %4745 = vmatprep.subr.bf16.mxu0 %v3988
        %4746 = vmatpush1.bf16.msra.mxu0 %v3987
        %4747 = vmatprep.subr.bf16.mxu0 %v3992
        %4748 = vmatpush1.bf16.msra.mxu0 %v3991
        %4749 = vmatprep.subr.bf16.mxu0 %v3996
        %4750 = vmatpush1.bf16.msra.mxu0 %v3995
        %4751 = vmatprep.subr.bf16.mxu0 %v4000
        %4752 = vmatpush1.bf16.msra.mxu0 %v3999
        %4753 = vmatprep.mubr.bf16.mxu0 %v2714
        %4754 = vmatmul.mubr.bf16.gmra.mrb[0].mxu0 %v2713
        %v4755 = vpop.f32.mrb[0].mxu0
        %v4756 = vadd.f32 0.0, %v4755
        %v4757 = vpop.f32.mrb[0].mxu0
        %v4758 = vadd.f32 0.0, %v4757
        %v4759 = vpop.f32.mrb[0].mxu0
        %v4760 = vadd.f32 0.0, %v4759
        %v4761 = vpop.f32.mrb[0].mxu0
        %v4762 = vadd.f32 0.0, %v4761
        %4763 = vmatprep.mubr.bf16.mxu0 %v2726
        %4764 = vmatmul.mubr.bf16.gmra.mrb[0].mxu0 %v2725
        %v4765 = vpop.f32.mrb[0].mxu0
        %v4766 = vadd.f32 0.0, %v4765
        %v4767 = vpop.f32.mrb[0].mxu0
        %v4768 = vadd.f32 0.0, %v4767
        %v4769 = vpop.f32.mrb[0].mxu0
        %v4770 = vadd.f32 0.0, %v4769
        %v4771 = vpop.f32.mrb[0].mxu0
        %v4772 = vadd.f32 0.0, %v4771
        %4773 = vmatprep.mubr.bf16.mxu0 %v2738
        %4774 = vmatmul.mubr.bf16.gmra.mrb[0].mxu0 %v2737
        %v4775 = vpop.f32.mrb[0].mxu0
        %v4776 = vadd.f32 0.0, %v4775
        %v4777 = vpop.f32.mrb[0].mxu0
        %v4778 = vadd.f32 0.0, %v4777
        %v4779 = vpop.f32.mrb[0].mxu0
        %v4780 = vadd.f32 0.0, %v4779
        %v4781 = vpop.f32.mrb[0].mxu0
        %v4782 = vadd.f32 0.0, %v4781
        %4783 = vmatprep.mubr.bf16.mxu0 %v2750
        %4784 = vmatmul.mubr.bf16.gmra.mrb[0].mxu0 %v2749
        %v4785 = vpop.f32.mrb[0].mxu0
        %v4786 = vadd.f32 0.0, %v4785
        %v4787 = vpop.f32.mrb[0].mxu0
        %v4788 = vadd.f32 0.0, %v4787
        %v4789 = vpop.f32.mrb[0].mxu0
        %v4790 = vpop.f32.mrb[0].mxu0
        %4791 = vdwg.mxu0
        %4792 = vmatprep.subr.bf16.mxu0 %v4004
        %4793 = vmatpush1.bf16.msra.mxu0 %v4003
        %4794 = vmatprep.subr.bf16.mxu0 %v4008
        %4795 = vmatpush1.bf16.msra.mxu0 %v4007
        %4796 = vmatprep.subr.bf16.mxu0 %v4012
        %4797 = vmatpush1.bf16.msra.mxu0 %v4011
        %4798 = vmatprep.subr.bf16.mxu0 %v4016
        %4799 = vmatpush1.bf16.msra.mxu0 %v4015
        %4800 = vmatprep.subr.bf16.mxu0 %v4020
        %4801 = vmatpush1.bf16.msra.mxu0 %v4019
        %4802 = vmatprep.subr.bf16.mxu0 %v4024
        %4803 = vmatpush1.bf16.msra.mxu0 %v4023
        %4804 = vmatprep.subr.bf16.mxu0 %v4028
        %4805 = vmatpush1.bf16.msra.mxu0 %v4027
        %4806 = vmatprep.subr.bf16.mxu0 %v4032
        %4807 = vmatpush1.bf16.msra.mxu0 %v4031
        %4808 = vmatprep.subr.bf16.mxu0 %v4036
        %4809 = vmatpush1.bf16.msra.mxu0 %v4035
        %4810 = vmatprep.subr.bf16.mxu0 %v4040
        %4811 = vmatpush1.bf16.msra.mxu0 %v4039
        %4812 = vmatprep.subr.bf16.mxu0 %v4044
        %4813 = vmatpush1.bf16.msra.mxu0 %v4043
        %4814 = vmatprep.subr.bf16.mxu0 %v4048
        %4815 = vmatpush1.bf16.msra.mxu0 %v4047
        %4816 = vmatprep.subr.bf16.mxu0 %v4052
        %4817 = vmatpush1.bf16.msra.mxu0 %v4051
        %4818 = vmatprep.subr.bf16.mxu0 %v4056
        %4819 = vmatpush1.bf16.msra.mxu0 %v4055
        %4820 = vmatprep.subr.bf16.mxu0 %v4060
        %4821 = vmatpush1.bf16.msra.mxu0 %v4059
        %4822 = vmatprep.subr.bf16.mxu0 %v4064
        %4823 = vmatpush1.bf16.msra.mxu0 %v4063
        %4824 = vmatprep.mubr.bf16.mxu0 %v2716
        %4825 = vmatmul.mubr.bf16.gmra.mrb[0].mxu0 %v2715
        %v4826 = vpop.f32.mrb[0].mxu0
        %v4827 = vadd.f32 %v4756, %v4826
        %v4828 = vpop.f32.mrb[0].mxu0
        %v4829 = vadd.f32 %v4758, %v4828
        %v4830 = vpop.f32.mrb[0].mxu0
        %v4831 = vadd.f32 %v4760, %v4830
        %v4832 = vpop.f32.mrb[0].mxu0
        %v4833 = vadd.f32 %v4762, %v4832
        %4834 = vmatprep.mubr.bf16.mxu0 %v2728
        %4835 = vmatmul.mubr.bf16.gmra.mrb[0].mxu0 %v2727
        %v4836 = vpop.f32.mrb[0].mxu0
        %v4837 = vadd.f32 %v4766, %v4836
        %v4838 = vpop.f32.mrb[0].mxu0
        %v4839 = vadd.f32 %v4768, %v4838
        %v4840 = vpop.f32.mrb[0].mxu0
        %v4841 = vadd.f32 %v4770, %v4840
        %v4842 = vpop.f32.mrb[0].mxu0
        %v4843 = vadd.f32 %v4772, %v4842
        %4844 = vmatprep.mubr.bf16.mxu0 %v2740
        %4845 = vmatmul.mubr.bf16.gmra.mrb[0].mxu0 %v2739
        %v4846 = vpop.f32.mrb[0].mxu0
        %v4847 = vadd.f32 %v4776, %v4846
        %v4848 = vpop.f32.mrb[0].mxu0
        %v4849 = vadd.f32 %v4778, %v4848
        %v4850 = vpop.f32.mrb[0].mxu0
        %v4851 = vadd.f32 %v4780, %v4850
        %v4852 = vpop.f32.mrb[0].mxu0
        %v4853 = vadd.f32 %v4782, %v4852
        %4854 = vmatprep.mubr.bf16.mxu0 %v2752
        %4855 = vmatmul.mubr.bf16.gmra.mrb[0].mxu0 %v2751
        %v4856 = vpop.f32.mrb[0].mxu0
        %v4857 = vadd.f32 %v4786, %v4856
        %v4858 = vpop.f32.mrb[0].mxu0
        %v4859 = vadd.f32 %v4788, %v4858
        %v4860 = vpop.f32.mrb[0].mxu0
        %v4861 = vpop.f32.mrb[0].mxu0
        %4862 = vdwg.mxu0
        %4863 = vmatprep.subr.bf16.mxu0 %v4068
        %4864 = vmatpush1.bf16.msra.mxu0 %v4067
        %4865 = vmatprep.subr.bf16.mxu0 %v4072
        %4866 = vmatpush1.bf16.msra.mxu0 %v4071
        %4867 = vmatprep.subr.bf16.mxu0 %v4076
        %4868 = vmatpush1.bf16.msra.mxu0 %v4075
        %4869 = vmatprep.subr.bf16.mxu0 %v4080
        %4870 = vmatpush1.bf16.msra.mxu0 %v4079
        %4871 = vmatprep.subr.bf16.mxu0 %v4084
        %4872 = vmatpush1.bf16.msra.mxu0 %v4083
        %4873 = vmatprep.subr.bf16.mxu0 %v4088
        %4874 = vmatpush1.bf16.msra.mxu0 %v4087
        %4875 = vmatprep.subr.bf16.mxu0 %v4092
        %4876 = vmatpush1.bf16.msra.mxu0 %v4091
        %4877 = vmatprep.subr.bf16.mxu0 %v4096
        %4878 = vmatpush1.bf16.msra.mxu0 %v4095
        %4879 = vmatprep.subr.bf16.mxu0 %v4100
        %4880 = vmatpush1.bf16.msra.mxu0 %v4099
        %4881 = vmatprep.subr.bf16.mxu0 %v4104
        %4882 = vmatpush1.bf16.msra.mxu0 %v4103
        %4883 = vmatprep.subr.bf16.mxu0 %v4108
        %4884 = vmatpush1.bf16.msra.mxu0 %v4107
        %4885 = vmatprep.subr.bf16.mxu0 %v4112
        %4886 = vmatpush1.bf16.msra.mxu0 %v4111
        %4887 = vmatprep.subr.bf16.mxu0 %v4116
        %4888 = vmatpush1.bf16.msra.mxu0 %v4115
        %4889 = vmatprep.subr.bf16.mxu0 %v4120
        %4890 = vmatpush1.bf16.msra.mxu0 %v4119
        %4891 = vmatprep.subr.bf16.mxu0 %v4124
        %4892 = vmatpush1.bf16.msra.mxu0 %v4123
        %4893 = vmatprep.subr.bf16.mxu0 %v4128
        %4894 = vmatpush1.bf16.msra.mxu0 %v4127
        %4895 = vmatprep.mubr.bf16.mxu0 %v2718
        %4896 = vmatmul.mubr.bf16.gmra.mrb[0].mxu0 %v2717
        %v4897 = vpop.f32.mrb[0].mxu0
        %v4898 = vadd.f32 %v4827, %v4897
        %v4899 = vpop.f32.mrb[0].mxu0
        %v4900 = vadd.f32 %v4829, %v4899
        %v4901 = vpop.f32.mrb[0].mxu0
        %v4902 = vadd.f32 %v4831, %v4901
        %v4903 = vpop.f32.mrb[0].mxu0
        %v4904 = vadd.f32 %v4833, %v4903
        %4905 = vmatprep.mubr.bf16.mxu0 %v2730
        %4906 = vmatmul.mubr.bf16.gmra.mrb[0].mxu0 %v2729
        %v4907 = vpop.f32.mrb[0].mxu0
        %v4908 = vadd.f32 %v4837, %v4907
        %v4909 = vpop.f32.mrb[0].mxu0
        %v4910 = vadd.f32 %v4839, %v4909
        %v4911 = vpop.f32.mrb[0].mxu0
        %v4912 = vadd.f32 %v4841, %v4911
        %v4913 = vpop.f32.mrb[0].mxu0
        %v4914 = vadd.f32 %v4843, %v4913
        %4915 = vmatprep.mubr.bf16.mxu0 %v2742
        %4916 = vmatmul.mubr.bf16.gmra.mrb[0].mxu0 %v2741
        %v4917 = vpop.f32.mrb[0].mxu0
        %v4918 = vadd.f32 %v4847, %v4917
        %v4919 = vpop.f32.mrb[0].mxu0
        %v4920 = vadd.f32 %v4849, %v4919
        %v4921 = vpop.f32.mrb[0].mxu0
        %v4922 = vadd.f32 %v4851, %v4921
        %v4923 = vpop.f32.mrb[0].mxu0
        %v4924 = vadd.f32 %v4853, %v4923
        %4925 = vmatprep.mubr.bf16.mxu0 %v2754
        %4926 = vmatmul.mubr.bf16.gmra.mrb[0].mxu0 %v2753
        %v4927 = vpop.f32.mrb[0].mxu0
        %v4928 = vadd.f32 %v4857, %v4927
        %v4929 = vpop.f32.mrb[0].mxu0
        %v4930 = vadd.f32 %v4859, %v4929
        %v4931 = vpop.f32.mrb[0].mxu0
        %v4932 = vpop.f32.mrb[0].mxu0
        %4933 = vdwg.mxu0
        %4934 = vmatprep.subr.bf16.mxu0 %v4132
        %4935 = vmatpush1.bf16.msra.mxu0 %v4131
        %4936 = vmatprep.subr.bf16.mxu0 %v4136
        %4937 = vmatpush1.bf16.msra.mxu0 %v4135
        %4938 = vmatprep.subr.bf16.mxu0 %v4140
        %4939 = vmatpush1.bf16.msra.mxu0 %v4139
        %4940 = vmatprep.subr.bf16.mxu0 %v4144
        %4941 = vmatpush1.bf16.msra.mxu0 %v4143
        %4942 = vmatprep.subr.bf16.mxu0 %v4148
        %4943 = vmatpush1.bf16.msra.mxu0 %v4147
        %4944 = vmatprep.subr.bf16.mxu0 %v4152
        %4945 = vmatpush1.bf16.msra.mxu0 %v4151
        %4946 = vmatprep.subr.bf16.mxu0 %v4156
        %4947 = vmatpush1.bf16.msra.mxu0 %v4155
        %4948 = vmatprep.subr.bf16.mxu0 %v4160
        %4949 = vmatpush1.bf16.msra.mxu0 %v4159
        %4950 = vmatprep.subr.bf16.mxu0 %v4164
        %4951 = vmatpush1.bf16.msra.mxu0 %v4163
        %4952 = vmatprep.subr.bf16.mxu0 %v4168
        %4953 = vmatpush1.bf16.msra.mxu0 %v4167
        %4954 = vmatprep.subr.bf16.mxu0 %v4172
        %4955 = vmatpush1.bf16.msra.mxu0 %v4171
        %4956 = vmatprep.subr.bf16.mxu0 %v4176
        %4957 = vmatpush1.bf16.msra.mxu0 %v4175
        %4958 = vmatprep.subr.bf16.mxu0 %v4180
        %4959 = vmatpush1.bf16.msra.mxu0 %v4179
        %4960 = vmatprep.subr.bf16.mxu0 %v4184
        %4961 = vmatpush1.bf16.msra.mxu0 %v4183
        %4962 = vmatprep.subr.bf16.mxu0 %v4188
        %4963 = vmatpush1.bf16.msra.mxu0 %v4187
        %4964 = vmatprep.subr.bf16.mxu0 %v4192
        %4965 = vmatpush1.bf16.msra.mxu0 %v4191
        %4966 = vmatprep.mubr.bf16.mxu0 %v2720
        %4967 = vmatmul.mubr.bf16.gmra.mrb[0].mxu0 %v2719
        %v4968 = vpop.f32.mrb[0].mxu0
        %v4969 = vadd.f32 %v4898, %v4968
        %v4970 = vpop.f32.mrb[0].mxu0
        %v4971 = vadd.f32 %v4900, %v4970
        %v4972 = vpop.f32.mrb[0].mxu0
        %v4973 = vadd.f32 %v4902, %v4972
        %v4974 = vpop.f32.mrb[0].mxu0
        %v4975 = vadd.f32 %v4904, %v4974
        %4976 = vmatprep.mubr.bf16.mxu0 %v2732
        %4977 = vmatmul.mubr.bf16.gmra.mrb[0].mxu0 %v2731
        %v4978 = vpop.f32.mrb[0].mxu0
        %v4979 = vadd.f32 %v4908, %v4978
        %v4980 = vpop.f32.mrb[0].mxu0
        %v4981 = vadd.f32 %v4910, %v4980
        %v4982 = vpop.f32.mrb[0].mxu0
        %v4983 = vadd.f32 %v4912, %v4982
        %v4984 = vpop.f32.mrb[0].mxu0
        %v4985 = vadd.f32 %v4914, %v4984
        %4986 = vmatprep.mubr.bf16.mxu0 %v2744
        %4987 = vmatmul.mubr.bf16.gmra.mrb[0].mxu0 %v2743
        %v4988 = vpop.f32.mrb[0].mxu0
        %v4989 = vadd.f32 %v4918, %v4988
        %v4990 = vpop.f32.mrb[0].mxu0
        %v4991 = vadd.f32 %v4920, %v4990
        %v4992 = vpop.f32.mrb[0].mxu0
        %v4993 = vadd.f32 %v4922, %v4992
        %v4994 = vpop.f32.mrb[0].mxu0
        %v4995 = vadd.f32 %v4924, %v4994
        %4996 = vmatprep.mubr.bf16.mxu0 %v2756
        %4997 = vmatmul.mubr.bf16.gmra.mrb[0].mxu0 %v2755
        %v4998 = vpop.f32.mrb[0].mxu0
        %v4999 = vadd.f32 %v4928, %v4998
        %v5000 = vpop.f32.mrb[0].mxu0
        %v5001 = vadd.f32 %v4930, %v5000
        %v5002 = vpop.f32.mrb[0].mxu0
        %v5003 = vpop.f32.mrb[0].mxu0
        %5004 = vdwg.mxu0
        %5005 = vmatprep.subr.bf16.mxu0 %v4196
        %5006 = vmatpush1.bf16.msra.mxu0 %v4195
        %5007 = vmatprep.subr.bf16.mxu0 %v4200
        %5008 = vmatpush1.bf16.msra.mxu0 %v4199
        %5009 = vmatprep.subr.bf16.mxu0 %v4204
        %5010 = vmatpush1.bf16.msra.mxu0 %v4203
        %5011 = vmatprep.subr.bf16.mxu0 %v4208
        %5012 = vmatpush1.bf16.msra.mxu0 %v4207
        %5013 = vmatprep.subr.bf16.mxu0 %v4212
        %5014 = vmatpush1.bf16.msra.mxu0 %v4211
        %5015 = vmatprep.subr.bf16.mxu0 %v4216
        %5016 = vmatpush1.bf16.msra.mxu0 %v4215
        %5017 = vmatprep.subr.bf16.mxu0 %v4220
        %5018 = vmatpush1.bf16.msra.mxu0 %v4219
        %5019 = vmatprep.subr.bf16.mxu0 %v4224
        %5020 = vmatpush1.bf16.msra.mxu0 %v4223
        %5021 = vmatprep.subr.bf16.mxu0 %v4228
        %5022 = vmatpush1.bf16.msra.mxu0 %v4227
        %5023 = vmatprep.subr.bf16.mxu0 %v4232
        %5024 = vmatpush1.bf16.msra.mxu0 %v4231
        %5025 = vmatprep.subr.bf16.mxu0 %v4236
        %5026 = vmatpush1.bf16.msra.mxu0 %v4235
        %5027 = vmatprep.subr.bf16.mxu0 %v4240
        %5028 = vmatpush1.bf16.msra.mxu0 %v4239
        %5029 = vmatprep.subr.bf16.mxu0 %v4244
        %5030 = vmatpush1.bf16.msra.mxu0 %v4243
        %5031 = vmatprep.subr.bf16.mxu0 %v4248
        %5032 = vmatpush1.bf16.msra.mxu0 %v4247
        %5033 = vmatprep.subr.bf16.mxu0 %v4252
        %5034 = vmatpush1.bf16.msra.mxu0 %v4251
        %5035 = vmatprep.subr.bf16.mxu0 %v4256
        %5036 = vmatpush1.bf16.msra.mxu0 %v4255
        %5037 = vmatprep.mubr.bf16.mxu0 %v2722
        %5038 = vmatmul.mubr.bf16.gmra.mrb[0].mxu0 %v2721
        %v5039 = vpop.f32.mrb[0].mxu0
        %v5040 = vadd.f32 %v4969, %v5039
        %v5041 = vpop.f32.mrb[0].mxu0
        %v5042 = vadd.f32 %v4971, %v5041
        %v5043 = vpop.f32.mrb[0].mxu0
        %v5044 = vadd.f32 %v4973, %v5043
        %v5045 = vpop.f32.mrb[0].mxu0
        %v5046 = vadd.f32 %v4975, %v5045
        %5047 = vmatprep.mubr.bf16.mxu0 %v2734
        %5048 = vmatmul.mubr.bf16.gmra.mrb[0].mxu0 %v2733
        %v5049 = vpop.f32.mrb[0].mxu0
        %v5050 = vadd.f32 %v4979, %v5049
        %v5051 = vpop.f32.mrb[0].mxu0
        %v5052 = vadd.f32 %v4981, %v5051
        %v5053 = vpop.f32.mrb[0].mxu0
        %v5054 = vadd.f32 %v4983, %v5053
        %v5055 = vpop.f32.mrb[0].mxu0
        %v5056 = vadd.f32 %v4985, %v5055
        %5057 = vmatprep.mubr.bf16.mxu0 %v2746
        %5058 = vmatmul.mubr.bf16.gmra.mrb[0].mxu0 %v2745
        %v5059 = vpop.f32.mrb[0].mxu0
        %v5060 = vadd.f32 %v4989, %v5059
        %v5061 = vpop.f32.mrb[0].mxu0
        %v5062 = vadd.f32 %v4991, %v5061
        %v5063 = vpop.f32.mrb[0].mxu0
        %v5064 = vadd.f32 %v4993, %v5063
        %v5065 = vpop.f32.mrb[0].mxu0
        %v5066 = vadd.f32 %v4995, %v5065
        %5067 = vmatprep.mubr.bf16.mxu0 %v2758
        %5068 = vmatmul.mubr.bf16.gmra.mrb[0].mxu0 %v2757
        %v5069 = vpop.f32.mrb[0].mxu0
        %v5070 = vadd.f32 %v4999, %v5069
        %v5071 = vpop.f32.mrb[0].mxu0
        %v5072 = vadd.f32 %v5001, %v5071
        %v5073 = vpop.f32.mrb[0].mxu0
        %v5074 = vpop.f32.mrb[0].mxu0
        %5075 = vdwg.mxu0
        %5076 = vmatprep.subr.bf16.mxu0 %v4260
        %5077 = vmatpush1.bf16.msra.mxu0 %v4259
        %5078 = vmatprep.subr.bf16.mxu0 %v4264
        %5079 = vmatpush1.bf16.msra.mxu0 %v4263
        %5080 = vmatprep.subr.bf16.mxu0 %v4268
        %5081 = vmatpush1.bf16.msra.mxu0 %v4267
        %5082 = vmatprep.subr.bf16.mxu0 %v4272
        %5083 = vmatpush1.bf16.msra.mxu0 %v4271
        %5084 = vmatprep.subr.bf16.mxu0 %v4276
        %5085 = vmatpush1.bf16.msra.mxu0 %v4275
        %5086 = vmatprep.subr.bf16.mxu0 %v4280
        %5087 = vmatpush1.bf16.msra.mxu0 %v4279
        %5088 = vmatprep.subr.bf16.mxu0 %v4284
        %5089 = vmatpush1.bf16.msra.mxu0 %v4283
        %5090 = vmatprep.subr.bf16.mxu0 %v4288
        %5091 = vmatpush1.bf16.msra.mxu0 %v4287
        %5092 = vmatprep.subr.bf16.mxu0 %v4292
        %5093 = vmatpush1.bf16.msra.mxu0 %v4291
        %5094 = vmatprep.subr.bf16.mxu0 %v4296
        %5095 = vmatpush1.bf16.msra.mxu0 %v4295
        %5096 = vmatprep.subr.bf16.mxu0 %v4300
        %5097 = vmatpush1.bf16.msra.mxu0 %v4299
        %5098 = vmatprep.subr.bf16.mxu0 %v4304
        %5099 = vmatpush1.bf16.msra.mxu0 %v4303
        %5100 = vmatprep.subr.bf16.mxu0 %v4308
        %5101 = vmatpush1.bf16.msra.mxu0 %v4307
        %5102 = vmatprep.subr.bf16.mxu0 %v4312
        %5103 = vmatpush1.bf16.msra.mxu0 %v4311
        %5104 = vmatprep.subr.bf16.mxu0 %v4713
        %5105 = vmatpush1.bf16.msra.mxu0 %v4710
        %5106 = vmatprep.subr.bf16.mxu0 0
        %5107 = vmatpush1.bf16.msra.mxu0 0
        %5108 = vmatprep.mubr.bf16.mxu0 %v4697
        %5109 = vmatmul.mubr.bf16.gmra.mrb[0].mxu0 %v2723
        %v5110 = vpop.f32.mrb[0].mxu0
        %v5111 = vadd.f32 %v5040, %v5110
        %v5112 = vpop.f32.mrb[0].mxu0
        %v5113 = vadd.f32 %v5042, %v5112
        %v5114 = vpop.f32.mrb[0].mxu0
        %v5115 = vadd.f32 %v5044, %v5114
        %v5116 = vpop.f32.mrb[0].mxu0
        %v5117 = vadd.f32 %v5046, %v5116
        %5118 = vmatprep.mubr.bf16.mxu0 %v4700
        %5119 = vmatmul.mubr.bf16.gmra.mrb[0].mxu0 %v2735
        %v5120 = vpop.f32.mrb[0].mxu0
        %v5121 = vadd.f32 %v5050, %v5120
        %v5122 = vpop.f32.mrb[0].mxu0
        %v5123 = vadd.f32 %v5052, %v5122
        %v5124 = vpop.f32.mrb[0].mxu0
        %v5125 = vadd.f32 %v5054, %v5124
        %v5126 = vpop.f32.mrb[0].mxu0
        %v5127 = vadd.f32 %v5056, %v5126
        %5128 = vmatprep.mubr.bf16.mxu0 %v4703
        %5129 = vmatmul.mubr.bf16.gmra.mrb[0].mxu0 %v2747
        %v5130 = vpop.f32.mrb[0].mxu0
        %v5131 = vadd.f32 %v5060, %v5130
        %v5132 = vpop.f32.mrb[0].mxu0
        %v5133 = vadd.f32 %v5062, %v5132
        %v5134 = vpop.f32.mrb[0].mxu0
        %v5135 = vadd.f32 %v5064, %v5134
        %v5136 = vpop.f32.mrb[0].mxu0
        %v5137 = vadd.f32 %v5066, %v5136
        %5138 = vmatprep.mubr.bf16.mxu0 %v4706
        %5139 = vmatmul.mubr.bf16.gmra.mrb[0].mxu0 %v2759
        %v5140 = vpop.f32.mrb[0].mxu0
        %v5141 = vadd.f32 %v5070, %v5140
        %v5142 = vpop.f32.mrb[0].mxu0
        %v5143 = vadd.f32 %v5072, %v5142
        %v5144 = vpop.f32.mrb[0].mxu0
        %v5145 = vpop.f32.mrb[0].mxu0
        %5146 = vdwg.mxu0
        %5147 = vmatprep.subr.bf16.mxu0 %v3942
        %5148 = vmatpush1.bf16.msra.mxu0 %v3941
        %5149 = vmatprep.subr.bf16.mxu0 %v3946
        %5150 = vmatpush1.bf16.msra.mxu0 %v3945
        %5151 = vmatprep.subr.bf16.mxu0 %v3950
        %5152 = vmatpush1.bf16.msra.mxu0 %v3949
        %5153 = vmatprep.subr.bf16.mxu0 %v3954
        %5154 = vmatpush1.bf16.msra.mxu0 %v3953
        %5155 = vmatprep.subr.bf16.mxu0 %v3958
        %5156 = vmatpush1.bf16.msra.mxu0 %v3957
        %5157 = vmatprep.subr.bf16.mxu0 %v3962
        %5158 = vmatpush1.bf16.msra.mxu0 %v3961
        %5159 = vmatprep.subr.bf16.mxu0 %v3966
        %5160 = vmatpush1.bf16.msra.mxu0 %v3965
        %5161 = vmatprep.subr.bf16.mxu0 %v3970
        %5162 = vmatpush1.bf16.msra.mxu0 %v3969
        %5163 = vmatprep.subr.bf16.mxu0 %v3974
        %5164 = vmatpush1.bf16.msra.mxu0 %v3973
        %5165 = vmatprep.subr.bf16.mxu0 %v3978
        %5166 = vmatpush1.bf16.msra.mxu0 %v3977
        %5167 = vmatprep.subr.bf16.mxu0 %v3982
        %5168 = vmatpush1.bf16.msra.mxu0 %v3981
        %5169 = vmatprep.subr.bf16.mxu0 %v3986
        %5170 = vmatpush1.bf16.msra.mxu0 %v3985
        %5171 = vmatprep.subr.bf16.mxu0 %v3990
        %5172 = vmatpush1.bf16.msra.mxu0 %v3989
        %5173 = vmatprep.subr.bf16.mxu0 %v3994
        %5174 = vmatpush1.bf16.msra.mxu0 %v3993
        %5175 = vmatprep.subr.bf16.mxu0 %v3998
        %5176 = vmatpush1.bf16.msra.mxu0 %v3997
        %5177 = vmatprep.subr.bf16.mxu0 %v4002
        %5178 = vmatpush1.bf16.msra.mxu0 %v4001
        %5179 = vmatprep.mubr.bf16.mxu0 %v2714
        %5180 = vmatmul.mubr.bf16.gmra.mrb[0].mxu0 %v2713
        %v5181 = vpop.f32.mrb[0].mxu0
        %v5182 = vadd.f32 0.0, %v5181
        %v5183 = vpop.f32.mrb[0].mxu0
        %v5184 = vadd.f32 0.0, %v5183
        %v5185 = vpop.f32.mrb[0].mxu0
        %v5186 = vadd.f32 0.0, %v5185
        %v5187 = vpop.f32.mrb[0].mxu0
        %v5188 = vadd.f32 0.0, %v5187
        %5189 = vmatprep.mubr.bf16.mxu0 %v2726
        %5190 = vmatmul.mubr.bf16.gmra.mrb[0].mxu0 %v2725
        %v5191 = vpop.f32.mrb[0].mxu0
        %v5192 = vadd.f32 0.0, %v5191
        %v5193 = vpop.f32.mrb[0].mxu0
        %v5194 = vadd.f32 0.0, %v5193
        %v5195 = vpop.f32.mrb[0].mxu0
        %v5196 = vadd.f32 0.0, %v5195
        %v5197 = vpop.f32.mrb[0].mxu0
        %v5198 = vadd.f32 0.0, %v5197
        %5199 = vmatprep.mubr.bf16.mxu0 %v2738
        %5200 = vmatmul.mubr.bf16.gmra.mrb[0].mxu0 %v2737
        %v5201 = vpop.f32.mrb[0].mxu0
        %v5202 = vadd.f32 0.0, %v5201
        %v5203 = vpop.f32.mrb[0].mxu0
        %v5204 = vadd.f32 0.0, %v5203
        %v5205 = vpop.f32.mrb[0].mxu0
        %v5206 = vadd.f32 0.0, %v5205
        %v5207 = vpop.f32.mrb[0].mxu0
        %v5208 = vadd.f32 0.0, %v5207
        %5209 = vmatprep.mubr.bf16.mxu0 %v2750
        %5210 = vmatmul.mubr.bf16.gmra.mrb[0].mxu0 %v2749
        %v5211 = vpop.f32.mrb[0].mxu0
        %v5212 = vadd.f32 0.0, %v5211
        %v5213 = vpop.f32.mrb[0].mxu0
        %v5214 = vadd.f32 0.0, %v5213
        %v5215 = vpop.f32.mrb[0].mxu0
        %v5216 = vpop.f32.mrb[0].mxu0
        %5217 = vdwg.mxu0
        %5218 = vmatprep.subr.bf16.mxu0 %v4006
        %5219 = vmatpush1.bf16.msra.mxu0 %v4005
        %5220 = vmatprep.subr.bf16.mxu0 %v4010
        %5221 = vmatpush1.bf16.msra.mxu0 %v4009
        %5222 = vmatprep.subr.bf16.mxu0 %v4014
        %5223 = vmatpush1.bf16.msra.mxu0 %v4013
        %5224 = vmatprep.subr.bf16.mxu0 %v4018
        %5225 = vmatpush1.bf16.msra.mxu0 %v4017
        %5226 = vmatprep.subr.bf16.mxu0 %v4022
        %5227 = vmatpush1.bf16.msra.mxu0 %v4021
        %5228 = vmatprep.subr.bf16.mxu0 %v4026
        %5229 = vmatpush1.bf16.msra.mxu0 %v4025
        %5230 = vmatprep.subr.bf16.mxu0 %v4030
        %5231 = vmatpush1.bf16.msra.mxu0 %v4029
        %5232 = vmatprep.subr.bf16.mxu0 %v4034
        %5233 = vmatpush1.bf16.msra.mxu0 %v4033
        %5234 = vmatprep.subr.bf16.mxu0 %v4038
        %5235 = vmatpush1.bf16.msra.mxu0 %v4037
        %5236 = vmatprep.subr.bf16.mxu0 %v4042
        %5237 = vmatpush1.bf16.msra.mxu0 %v4041
        %5238 = vmatprep.subr.bf16.mxu0 %v4046
        %5239 = vmatpush1.bf16.msra.mxu0 %v4045
        %5240 = vmatprep.subr.bf16.mxu0 %v4050
        %5241 = vmatpush1.bf16.msra.mxu0 %v4049
        %5242 = vmatprep.subr.bf16.mxu0 %v4054
        %5243 = vmatpush1.bf16.msra.mxu0 %v4053
        %5244 = vmatprep.subr.bf16.mxu0 %v4058
        %5245 = vmatpush1.bf16.msra.mxu0 %v4057
        %5246 = vmatprep.subr.bf16.mxu0 %v4062
        %5247 = vmatpush1.bf16.msra.mxu0 %v4061
        %5248 = vmatprep.subr.bf16.mxu0 %v4066
        %5249 = vmatpush1.bf16.msra.mxu0 %v4065
        %5250 = vmatprep.mubr.bf16.mxu0 %v2716
        %5251 = vmatmul.mubr.bf16.gmra.mrb[0].mxu0 %v2715
        %v5252 = vpop.f32.mrb[0].mxu0
        %v5253 = vadd.f32 %v5182, %v5252
        %v5254 = vpop.f32.mrb[0].mxu0
        %v5255 = vadd.f32 %v5184, %v5254
        %v5256 = vpop.f32.mrb[0].mxu0
        %v5257 = vadd.f32 %v5186, %v5256
        %v5258 = vpop.f32.mrb[0].mxu0
        %v5259 = vadd.f32 %v5188, %v5258
        %5260 = vmatprep.mubr.bf16.mxu0 %v2728
        %5261 = vmatmul.mubr.bf16.gmra.mrb[0].mxu0 %v2727
        %v5262 = vpop.f32.mrb[0].mxu0
        %v5263 = vadd.f32 %v5192, %v5262
        %v5264 = vpop.f32.mrb[0].mxu0
        %v5265 = vadd.f32 %v5194, %v5264
        %v5266 = vpop.f32.mrb[0].mxu0
        %v5267 = vadd.f32 %v5196, %v5266
        %v5268 = vpop.f32.mrb[0].mxu0
        %v5269 = vadd.f32 %v5198, %v5268
        %5270 = vmatprep.mubr.bf16.mxu0 %v2740
        %5271 = vmatmul.mubr.bf16.gmra.mrb[0].mxu0 %v2739
        %v5272 = vpop.f32.mrb[0].mxu0
        %v5273 = vadd.f32 %v5202, %v5272
        %v5274 = vpop.f32.mrb[0].mxu0
        %v5275 = vadd.f32 %v5204, %v5274
        %v5276 = vpop.f32.mrb[0].mxu0
        %v5277 = vadd.f32 %v5206, %v5276
        %v5278 = vpop.f32.mrb[0].mxu0
        %v5279 = vadd.f32 %v5208, %v5278
        %5280 = vmatprep.mubr.bf16.mxu0 %v2752
        %5281 = vmatmul.mubr.bf16.gmra.mrb[0].mxu0 %v2751
        %v5282 = vpop.f32.mrb[0].mxu0
        %v5283 = vadd.f32 %v5212, %v5282
        %v5284 = vpop.f32.mrb[0].mxu0
        %v5285 = vadd.f32 %v5214, %v5284
        %v5286 = vpop.f32.mrb[0].mxu0
        %v5287 = vpop.f32.mrb[0].mxu0
        %5288 = vdwg.mxu0
        %5289 = vmatprep.subr.bf16.mxu0 %v4070
        %5290 = vmatpush1.bf16.msra.mxu0 %v4069
        %5291 = vmatprep.subr.bf16.mxu0 %v4074
        %5292 = vmatpush1.bf16.msra.mxu0 %v4073
        %5293 = vmatprep.subr.bf16.mxu0 %v4078
        %5294 = vmatpush1.bf16.msra.mxu0 %v4077
        %5295 = vmatprep.subr.bf16.mxu0 %v4082
        %5296 = vmatpush1.bf16.msra.mxu0 %v4081
        %5297 = vmatprep.subr.bf16.mxu0 %v4086
        %5298 = vmatpush1.bf16.msra.mxu0 %v4085
        %5299 = vmatprep.subr.bf16.mxu0 %v4090
        %5300 = vmatpush1.bf16.msra.mxu0 %v4089
        %5301 = vmatprep.subr.bf16.mxu0 %v4094
        %5302 = vmatpush1.bf16.msra.mxu0 %v4093
        %5303 = vmatprep.subr.bf16.mxu0 %v4098
        %5304 = vmatpush1.bf16.msra.mxu0 %v4097
        %5305 = vmatprep.subr.bf16.mxu0 %v4102
        %5306 = vmatpush1.bf16.msra.mxu0 %v4101
        %5307 = vmatprep.subr.bf16.mxu0 %v4106
        %5308 = vmatpush1.bf16.msra.mxu0 %v4105
        %5309 = vmatprep.subr.bf16.mxu0 %v4110
        %5310 = vmatpush1.bf16.msra.mxu0 %v4109
        %5311 = vmatprep.subr.bf16.mxu0 %v4114
        %5312 = vmatpush1.bf16.msra.mxu0 %v4113
        %5313 = vmatprep.subr.bf16.mxu0 %v4118
        %5314 = vmatpush1.bf16.msra.mxu0 %v4117
        %5315 = vmatprep.subr.bf16.mxu0 %v4122
        %5316 = vmatpush1.bf16.msra.mxu0 %v4121
        %5317 = vmatprep.subr.bf16.mxu0 %v4126
        %5318 = vmatpush1.bf16.msra.mxu0 %v4125
        %5319 = vmatprep.subr.bf16.mxu0 %v4130
        %5320 = vmatpush1.bf16.msra.mxu0 %v4129
        %5321 = vmatprep.mubr.bf16.mxu0 %v2718
        %5322 = vmatmul.mubr.bf16.gmra.mrb[0].mxu0 %v2717
        %v5323 = vpop.f32.mrb[0].mxu0
        %v5324 = vadd.f32 %v5253, %v5323
        %v5325 = vpop.f32.mrb[0].mxu0
        %v5326 = vadd.f32 %v5255, %v5325
        %v5327 = vpop.f32.mrb[0].mxu0
        %v5328 = vadd.f32 %v5257, %v5327
        %v5329 = vpop.f32.mrb[0].mxu0
        %v5330 = vadd.f32 %v5259, %v5329
        %5331 = vmatprep.mubr.bf16.mxu0 %v2730
        %5332 = vmatmul.mubr.bf16.gmra.mrb[0].mxu0 %v2729
        %v5333 = vpop.f32.mrb[0].mxu0
        %v5334 = vadd.f32 %v5263, %v5333
        %v5335 = vpop.f32.mrb[0].mxu0
        %v5336 = vadd.f32 %v5265, %v5335
        %v5337 = vpop.f32.mrb[0].mxu0
        %v5338 = vadd.f32 %v5267, %v5337
        %v5339 = vpop.f32.mrb[0].mxu0
        %v5340 = vadd.f32 %v5269, %v5339
        %5341 = vmatprep.mubr.bf16.mxu0 %v2742
        %5342 = vmatmul.mubr.bf16.gmra.mrb[0].mxu0 %v2741
        %v5343 = vpop.f32.mrb[0].mxu0
        %v5344 = vadd.f32 %v5273, %v5343
        %v5345 = vpop.f32.mrb[0].mxu0
        %v5346 = vadd.f32 %v5275, %v5345
        %v5347 = vpop.f32.mrb[0].mxu0
        %v5348 = vadd.f32 %v5277, %v5347
        %v5349 = vpop.f32.mrb[0].mxu0
        %v5350 = vadd.f32 %v5279, %v5349
        %5351 = vmatprep.mubr.bf16.mxu0 %v2754
        %5352 = vmatmul.mubr.bf16.gmra.mrb[0].mxu0 %v2753
        %v5353 = vpop.f32.mrb[0].mxu0
        %v5354 = vadd.f32 %v5283, %v5353
        %v5355 = vpop.f32.mrb[0].mxu0
        %v5356 = vadd.f32 %v5285, %v5355
        %v5357 = vpop.f32.mrb[0].mxu0
        %v5358 = vpop.f32.mrb[0].mxu0
        %5359 = vdwg.mxu0
        %5360 = vmatprep.subr.bf16.mxu0 %v4134
        %5361 = vmatpush1.bf16.msra.mxu0 %v4133
        %5362 = vmatprep.subr.bf16.mxu0 %v4138
        %5363 = vmatpush1.bf16.msra.mxu0 %v4137
        %5364 = vmatprep.subr.bf16.mxu0 %v4142
        %5365 = vmatpush1.bf16.msra.mxu0 %v4141
        %5366 = vmatprep.subr.bf16.mxu0 %v4146
        %5367 = vmatpush1.bf16.msra.mxu0 %v4145
        %5368 = vmatprep.subr.bf16.mxu0 %v4150
        %5369 = vmatpush1.bf16.msra.mxu0 %v4149
        %5370 = vmatprep.subr.bf16.mxu0 %v4154
        %5371 = vmatpush1.bf16.msra.mxu0 %v4153
        %5372 = vmatprep.subr.bf16.mxu0 %v4158
        %5373 = vmatpush1.bf16.msra.mxu0 %v4157
        %5374 = vmatprep.subr.bf16.mxu0 %v4162
        %5375 = vmatpush1.bf16.msra.mxu0 %v4161
        %5376 = vmatprep.subr.bf16.mxu0 %v4166
        %5377 = vmatpush1.bf16.msra.mxu0 %v4165
        %5378 = vmatprep.subr.bf16.mxu0 %v4170
        %5379 = vmatpush1.bf16.msra.mxu0 %v4169
        %5380 = vmatprep.subr.bf16.mxu0 %v4174
        %5381 = vmatpush1.bf16.msra.mxu0 %v4173
        %5382 = vmatprep.subr.bf16.mxu0 %v4178
        %5383 = vmatpush1.bf16.msra.mxu0 %v4177
        %5384 = vmatprep.subr.bf16.mxu0 %v4182
        %5385 = vmatpush1.bf16.msra.mxu0 %v4181
        %5386 = vmatprep.subr.bf16.mxu0 %v4186
        %5387 = vmatpush1.bf16.msra.mxu0 %v4185
        %5388 = vmatprep.subr.bf16.mxu0 %v4190
        %5389 = vmatpush1.bf16.msra.mxu0 %v4189
        %5390 = vmatprep.subr.bf16.mxu0 %v4194
        %5391 = vmatpush1.bf16.msra.mxu0 %v4193
        %5392 = vmatprep.mubr.bf16.mxu0 %v2720
        %5393 = vmatmul.mubr.bf16.gmra.mrb[0].mxu0 %v2719
        %v5394 = vpop.f32.mrb[0].mxu0
        %v5395 = vadd.f32 %v5324, %v5394
        %v5396 = vpop.f32.mrb[0].mxu0
        %v5397 = vadd.f32 %v5326, %v5396
        %v5398 = vpop.f32.mrb[0].mxu0
        %v5399 = vadd.f32 %v5328, %v5398
        %v5400 = vpop.f32.mrb[0].mxu0
        %v5401 = vadd.f32 %v5330, %v5400
        %5402 = vmatprep.mubr.bf16.mxu0 %v2732
        %5403 = vmatmul.mubr.bf16.gmra.mrb[0].mxu0 %v2731
        %v5404 = vpop.f32.mrb[0].mxu0
        %v5405 = vadd.f32 %v5334, %v5404
        %v5406 = vpop.f32.mrb[0].mxu0
        %v5407 = vadd.f32 %v5336, %v5406
        %v5408 = vpop.f32.mrb[0].mxu0
        %v5409 = vadd.f32 %v5338, %v5408
        %v5410 = vpop.f32.mrb[0].mxu0
        %v5411 = vadd.f32 %v5340, %v5410
        %5412 = vmatprep.mubr.bf16.mxu0 %v2744
        %5413 = vmatmul.mubr.bf16.gmra.mrb[0].mxu0 %v2743
        %v5414 = vpop.f32.mrb[0].mxu0
        %v5415 = vadd.f32 %v5344, %v5414
        %v5416 = vpop.f32.mrb[0].mxu0
        %v5417 = vadd.f32 %v5346, %v5416
        %v5418 = vpop.f32.mrb[0].mxu0
        %v5419 = vadd.f32 %v5348, %v5418
        %v5420 = vpop.f32.mrb[0].mxu0
        %v5421 = vadd.f32 %v5350, %v5420
        %5422 = vmatprep.mubr.bf16.mxu0 %v2756
        %5423 = vmatmul.mubr.bf16.gmra.mrb[0].mxu0 %v2755
        %v5424 = vpop.f32.mrb[0].mxu0
        %v5425 = vadd.f32 %v5354, %v5424
        %v5426 = vpop.f32.mrb[0].mxu0
        %v5427 = vadd.f32 %v5356, %v5426
        %v5428 = vpop.f32.mrb[0].mxu0
        %v5429 = vpop.f32.mrb[0].mxu0
        %5430 = vdwg.mxu0
        %5431 = vmatprep.subr.bf16.mxu0 %v4198
        %5432 = vmatpush1.bf16.msra.mxu0 %v4197
        %5433 = vmatprep.subr.bf16.mxu0 %v4202
        %5434 = vmatpush1.bf16.msra.mxu0 %v4201
        %5435 = vmatprep.subr.bf16.mxu0 %v4206
        %5436 = vmatpush1.bf16.msra.mxu0 %v4205
        %5437 = vmatprep.subr.bf16.mxu0 %v4210
        %5438 = vmatpush1.bf16.msra.mxu0 %v4209
        %5439 = vmatprep.subr.bf16.mxu0 %v4214
        %5440 = vmatpush1.bf16.msra.mxu0 %v4213
        %5441 = vmatprep.subr.bf16.mxu0 %v4218
        %5442 = vmatpush1.bf16.msra.mxu0 %v4217
        %5443 = vmatprep.subr.bf16.mxu0 %v4222
        %5444 = vmatpush1.bf16.msra.mxu0 %v4221
        %5445 = vmatprep.subr.bf16.mxu0 %v4226
        %5446 = vmatpush1.bf16.msra.mxu0 %v4225
        %5447 = vmatprep.subr.bf16.mxu0 %v4230
        %5448 = vmatpush1.bf16.msra.mxu0 %v4229
        %5449 = vmatprep.subr.bf16.mxu0 %v4234
        %5450 = vmatpush1.bf16.msra.mxu0 %v4233
        %5451 = vmatprep.subr.bf16.mxu0 %v4238
        %5452 = vmatpush1.bf16.msra.mxu0 %v4237
        %5453 = vmatprep.subr.bf16.mxu0 %v4242
        %5454 = vmatpush1.bf16.msra.mxu0 %v4241
        %5455 = vmatprep.subr.bf16.mxu0 %v4246
        %5456 = vmatpush1.bf16.msra.mxu0 %v4245
        %5457 = vmatprep.subr.bf16.mxu0 %v4250
        %5458 = vmatpush1.bf16.msra.mxu0 %v4249
        %5459 = vmatprep.subr.bf16.mxu0 %v4254
        %5460 = vmatpush1.bf16.msra.mxu0 %v4253
        %5461 = vmatprep.subr.bf16.mxu0 %v4258
        %5462 = vmatpush1.bf16.msra.mxu0 %v4257
        %5463 = vmatprep.mubr.bf16.mxu0 %v2722
        %5464 = vmatmul.mubr.bf16.gmra.mrb[0].mxu0 %v2721
        %v5465 = vpop.f32.mrb[0].mxu0
        %v5466 = vadd.f32 %v5395, %v5465
        %v5467 = vpop.f32.mrb[0].mxu0
        %v5468 = vadd.f32 %v5397, %v5467
        %v5469 = vpop.f32.mrb[0].mxu0
        %v5470 = vadd.f32 %v5399, %v5469
        %v5471 = vpop.f32.mrb[0].mxu0
        %v5472 = vadd.f32 %v5401, %v5471
        %5473 = vmatprep.mubr.bf16.mxu0 %v2734
        %5474 = vmatmul.mubr.bf16.gmra.mrb[0].mxu0 %v2733
        %v5475 = vpop.f32.mrb[0].mxu0
        %v5476 = vadd.f32 %v5405, %v5475
        %v5477 = vpop.f32.mrb[0].mxu0
        %v5478 = vadd.f32 %v5407, %v5477
        %v5479 = vpop.f32.mrb[0].mxu0
        %v5480 = vadd.f32 %v5409, %v5479
        %v5481 = vpop.f32.mrb[0].mxu0
        %v5482 = vadd.f32 %v5411, %v5481
        %5483 = vmatprep.mubr.bf16.mxu0 %v2746
        %5484 = vmatmul.mubr.bf16.gmra.mrb[0].mxu0 %v2745
        %v5485 = vpop.f32.mrb[0].mxu0
        %v5486 = vadd.f32 %v5415, %v5485
        %v5487 = vpop.f32.mrb[0].mxu0
        %v5488 = vadd.f32 %v5417, %v5487
        %v5489 = vpop.f32.mrb[0].mxu0
        %v5490 = vadd.f32 %v5419, %v5489
        %v5491 = vpop.f32.mrb[0].mxu0
        %v5492 = vadd.f32 %v5421, %v5491
        %5493 = vmatprep.mubr.bf16.mxu0 %v2758
        %5494 = vmatmul.mubr.bf16.gmra.mrb[0].mxu0 %v2757
        %v5495 = vpop.f32.mrb[0].mxu0
        %v5496 = vadd.f32 %v5425, %v5495
        %v5497 = vpop.f32.mrb[0].mxu0
        %v5498 = vadd.f32 %v5427, %v5497
        %v5499 = vpop.f32.mrb[0].mxu0
        %v5500 = vpop.f32.mrb[0].mxu0
        %5501 = vdwg.mxu0
        %5502 = vmatprep.subr.bf16.mxu0 %v4262
        %5503 = vmatpush1.bf16.msra.mxu0 %v4261
        %5504 = vmatprep.subr.bf16.mxu0 %v4266
        %5505 = vmatpush1.bf16.msra.mxu0 %v4265
        %5506 = vmatprep.subr.bf16.mxu0 %v4270
        %5507 = vmatpush1.bf16.msra.mxu0 %v4269
        %5508 = vmatprep.subr.bf16.mxu0 %v4274
        %5509 = vmatpush1.bf16.msra.mxu0 %v4273
        %5510 = vmatprep.subr.bf16.mxu0 %v4278
        %5511 = vmatpush1.bf16.msra.mxu0 %v4277
        %5512 = vmatprep.subr.bf16.mxu0 %v4282
        %5513 = vmatpush1.bf16.msra.mxu0 %v4281
        %5514 = vmatprep.subr.bf16.mxu0 %v4286
        %5515 = vmatpush1.bf16.msra.mxu0 %v4285
        %5516 = vmatprep.subr.bf16.mxu0 %v4290
        %5517 = vmatpush1.bf16.msra.mxu0 %v4289
        %5518 = vmatprep.subr.bf16.mxu0 %v4294
        %5519 = vmatpush1.bf16.msra.mxu0 %v4293
        %5520 = vmatprep.subr.bf16.mxu0 %v4298
        %5521 = vmatpush1.bf16.msra.mxu0 %v4297
        %5522 = vmatprep.subr.bf16.mxu0 %v4302
        %5523 = vmatpush1.bf16.msra.mxu0 %v4301
        %5524 = vmatprep.subr.bf16.mxu0 %v4306
        %5525 = vmatpush1.bf16.msra.mxu0 %v4305
        %5526 = vmatprep.subr.bf16.mxu0 %v4310
        %5527 = vmatpush1.bf16.msra.mxu0 %v4309
        %5528 = vmatprep.subr.bf16.mxu0 %v4314
        %5529 = vmatpush1.bf16.msra.mxu0 %v4313
        %5530 = vmatprep.subr.bf16.mxu0 %v4719
        %5531 = vmatpush1.bf16.msra.mxu0 %v4716
        %5532 = vmatprep.subr.bf16.mxu0 0
        %5533 = vmatpush1.bf16.msra.mxu0 0
        %5534 = vmatprep.mubr.bf16.mxu0 %v4697
        %5535 = vmatmul.mubr.bf16.gmra.mrb[0].mxu0 %v2723
        %v5536 = vpop.f32.mrb[0].mxu0
        %v5537 = vadd.f32 %v5466, %v5536
        %v5538 = vpop.f32.mrb[0].mxu0
        %v5539 = vadd.f32 %v5468, %v5538
        %v5540 = vpop.f32.mrb[0].mxu0
        %v5541 = vadd.f32 %v5470, %v5540
        %v5542 = vpop.f32.mrb[0].mxu0
        %v5543 = vadd.f32 %v5472, %v5542
        %5544 = vmatprep.mubr.bf16.mxu0 %v4700
        %5545 = vmatmul.mubr.bf16.gmra.mrb[0].mxu0 %v2735
        %v5546 = vpop.f32.mrb[0].mxu0
        %v5547 = vadd.f32 %v5476, %v5546
        %v5548 = vpop.f32.mrb[0].mxu0
        %v5549 = vadd.f32 %v5478, %v5548
        %v5550 = vpop.f32.mrb[0].mxu0
        %v5551 = vadd.f32 %v5480, %v5550
        %v5552 = vpop.f32.mrb[0].mxu0
        %v5553 = vadd.f32 %v5482, %v5552
        %5554 = vmatprep.mubr.bf16.mxu0 %v4703
        %5555 = vmatmul.mubr.bf16.gmra.mrb[0].mxu0 %v2747
        %v5556 = vpop.f32.mrb[0].mxu0
        %v5557 = vadd.f32 %v5486, %v5556
        %v5558 = vpop.f32.mrb[0].mxu0
        %v5559 = vadd.f32 %v5488, %v5558
        %v5560 = vpop.f32.mrb[0].mxu0
        %v5561 = vadd.f32 %v5490, %v5560
        %v5562 = vpop.f32.mrb[0].mxu0
        %v5563 = vadd.f32 %v5492, %v5562
        %5564 = vmatprep.mubr.bf16.mxu0 %v4706
        %5565 = vmatmul.mubr.bf16.gmra.mrb[0].mxu0 %v2759
        %v5566 = vpop.f32.mrb[0].mxu0
        %v5567 = vadd.f32 %v5496, %v5566
        %v5568 = vpop.f32.mrb[0].mxu0
        %v5569 = vadd.f32 %v5498, %v5568
        %v5570 = vpop.f32.mrb[0].mxu0
        %v5571 = vpop.f32.mrb[0].mxu0
        %5572 = vdwg.mxu0
        %v5573 = vadd.f32 %v5111, %v5115
        %v5574 = vadd.f32 %v5573, %v5121
        %v5575 = vadd.f32 %v5574, %v5125
        %v5576 = vadd.f32 %v5575, %v5131
        %v5577 = vadd.f32 %v5576, %v5135
        %vm5578 = vcmask 1040384
        %v5579 = vsel %vm5578, %v5141, 0.0
        %v5580 = vadd.f32 %v5577, %v5579
        %v5581 = vrot.slane %v5580, 4
        %v5582 = vadd.f32 %v5580, %v5581
        %v5583 = vrot.slane %v5582, 2
        %v5584 = vadd.f32 %v5582, %v5583
        %v5585 = vrot.slane %v5584, 1
        %v5586 = vadd.f32 %v5584, %v5585
        %v5587 = vadd.f32 %v5113, %v5117
        %v5588 = vadd.f32 %v5587, %v5123
        %v5589 = vadd.f32 %v5588, %v5127
        %v5590 = vadd.f32 %v5589, %v5133
        %v5591 = vadd.f32 %v5590, %v5137
        %v5592 = vsel %vm5578, %v5143, 0.0
        %v5593 = vadd.f32 %v5591, %v5592
        %v5594 = vrot.slane %v5593, 4
        %v5595 = vadd.f32 %v5593, %v5594
        %v5596 = vrot.slane %v5595, 2
        %v5597 = vadd.f32 %v5595, %v5596
        %v5598 = vrot.slane %v5597, 1
        %v5599 = vadd.f32 %v5597, %v5598
        %v5600 = vadd.f32 %v5537, %v5541
        %v5601 = vadd.f32 %v5600, %v5547
        %v5602 = vadd.f32 %v5601, %v5551
        %v5603 = vadd.f32 %v5602, %v5557
        %v5604 = vadd.f32 %v5603, %v5561
        %v5605 = vsel %vm5578, %v5567, 0.0
        %v5606 = vadd.f32 %v5604, %v5605
        %v5607 = vrot.slane %v5606, 4
        %v5608 = vadd.f32 %v5606, %v5607
        %v5609 = vrot.slane %v5608, 2
        %v5610 = vadd.f32 %v5608, %v5609
        %v5611 = vrot.slane %v5610, 1
        %v5612 = vadd.f32 %v5610, %v5611
        %v5613 = vadd.f32 %v5539, %v5543
        %v5614 = vadd.f32 %v5613, %v5549
        %v5615 = vadd.f32 %v5614, %v5553
        %v5616 = vadd.f32 %v5615, %v5559
        %v5617 = vadd.f32 %v5616, %v5563
        %v5618 = vsel %vm5578, %v5569, 0.0
        %v5619 = vadd.f32 %v5617, %v5618
        %v5620 = vrot.slane %v5619, 4
        %v5621 = vadd.f32 %v5619, %v5620
        %v5622 = vrot.slane %v5621, 2
        %v5623 = vadd.f32 %v5621, %v5622
        %v5624 = vrot.slane %v5623, 1
        %v5625 = vadd.f32 %v5623, %v5624
        %v5626 = vrcp.pop 49.0
        %v5627 = vmul.f32 %v5586, %v5626
        %v5628 = vmul.f32 %v5599, %v5626
        %v5629 = vmul.f32 %v5612, %v5626
        %v5630 = vmul.f32 %v5625, %v5626
        %v5631 = vsub.f32 %v5111, %v5627
        %v5632 = vsub.f32 %v5113, %v5628
        %v5633 = vsub.f32 %v5537, %v5629
        %v5634 = vsub.f32 %v5539, %v5630
        %v5635 = vsub.f32 %v5115, %v5627
        %v5636 = vsub.f32 %v5117, %v5628
        %v5637 = vsub.f32 %v5541, %v5629
        %v5638 = vsub.f32 %v5543, %v5630
        %v5639 = vsub.f32 %v5121, %v5627
        %v5640 = vsub.f32 %v5123, %v5628
        %v5641 = vsub.f32 %v5547, %v5629
        %v5642 = vsub.f32 %v5549, %v5630
        %v5643 = vsub.f32 %v5125, %v5627
        %v5644 = vsub.f32 %v5127, %v5628
        %v5645 = vsub.f32 %v5551, %v5629
        %v5646 = vsub.f32 %v5553, %v5630
        %v5647 = vsub.f32 %v5131, %v5627
        %v5648 = vsub.f32 %v5133, %v5628
        %v5649 = vsub.f32 %v5557, %v5629
        %v5650 = vsub.f32 %v5559, %v5630
        %v5651 = vsub.f32 %v5135, %v5627
        %v5652 = vsub.f32 %v5137, %v5628
        %v5653 = vsub.f32 %v5561, %v5629
        %v5654 = vsub.f32 %v5563, %v5630
        %v5655 = vsub.f32 %v5141, %v5627
        %v5656 = vsub.f32 %v5143, %v5628
        %v5657 = vsub.f32 %v5567, %v5629
        %v5658 = vsub.f32 %v5569, %v5630
        %v5659 = vmul.f32 %v5631, %v5631
        %v5660 = vmul.f32 %v5632, %v5632
        %v5661 = vmul.f32 %v5633, %v5633
        %v5662 = vmul.f32 %v5634, %v5634
        %v5663 = vmul.f32 %v5635, %v5635
        %v5664 = vmul.f32 %v5636, %v5636
        %v5665 = vmul.f32 %v5637, %v5637
        %v5666 = vmul.f32 %v5638, %v5638
        %v5667 = vmul.f32 %v5639, %v5639
        %v5668 = vmul.f32 %v5640, %v5640
        %v5669 = vmul.f32 %v5641, %v5641
        %v5670 = vmul.f32 %v5642, %v5642
        %v5671 = vmul.f32 %v5643, %v5643
        %v5672 = vmul.f32 %v5644, %v5644
        %v5673 = vmul.f32 %v5645, %v5645
        %v5674 = vmul.f32 %v5646, %v5646
        %v5675 = vmul.f32 %v5647, %v5647
        %v5676 = vmul.f32 %v5648, %v5648
        %v5677 = vmul.f32 %v5649, %v5649
        %v5678 = vmul.f32 %v5650, %v5650
        %v5679 = vmul.f32 %v5651, %v5651
        %v5680 = vmul.f32 %v5652, %v5652
        %v5681 = vmul.f32 %v5653, %v5653
        %v5682 = vmul.f32 %v5654, %v5654
        %v5683 = vmul.f32 %v5655, %v5655
        %v5684 = vmul.f32 %v5656, %v5656
        %v5685 = vmul.f32 %v5657, %v5657
        %v5686 = vmul.f32 %v5658, %v5658
        %v5687 = vadd.f32 %v5659, %v5663
        %v5688 = vadd.f32 %v5687, %v5667
        %v5689 = vadd.f32 %v5688, %v5671
        %v5690 = vadd.f32 %v5689, %v5675
        %v5691 = vadd.f32 %v5690, %v5679
        %v5692 = vsel %vm5578, %v5683, 0.0
        %v5693 = vadd.f32 %v5691, %v5692
        %v5694 = vrot.slane %v5693, 4
        %v5695 = vadd.f32 %v5693, %v5694
        %v5696 = vrot.slane %v5695, 2
        %v5697 = vadd.f32 %v5695, %v5696
        %v5698 = vrot.slane %v5697, 1
        %v5699 = vadd.f32 %v5697, %v5698
        %v5700 = vadd.f32 %v5660, %v5664
        %v5701 = vadd.f32 %v5700, %v5668
        %v5702 = vadd.f32 %v5701, %v5672
        %v5703 = vadd.f32 %v5702, %v5676
        %v5704 = vadd.f32 %v5703, %v5680
        %v5705 = vsel %vm5578, %v5684, 0.0
        %v5706 = vadd.f32 %v5704, %v5705
        %v5707 = vrot.slane %v5706, 4
        %v5708 = vadd.f32 %v5706, %v5707
        %v5709 = vrot.slane %v5708, 2
        %v5710 = vadd.f32 %v5708, %v5709
        %v5711 = vrot.slane %v5710, 1
        %v5712 = vadd.f32 %v5710, %v5711
        %v5713 = vadd.f32 %v5661, %v5665
        %v5714 = vadd.f32 %v5713, %v5669
        %v5715 = vadd.f32 %v5714, %v5673
        %v5716 = vadd.f32 %v5715, %v5677
        %v5717 = vadd.f32 %v5716, %v5681
        %v5718 = vsel %vm5578, %v5685, 0.0
        %v5719 = vadd.f32 %v5717, %v5718
        %v5720 = vrot.slane %v5719, 4
        %v5721 = vadd.f32 %v5719, %v5720
        %v5722 = vrot.slane %v5721, 2
        %v5723 = vadd.f32 %v5721, %v5722
        %v5724 = vrot.slane %v5723, 1
        %v5725 = vadd.f32 %v5723, %v5724
        %v5726 = vadd.f32 %v5662, %v5666
        %v5727 = vadd.f32 %v5726, %v5670
        %v5728 = vadd.f32 %v5727, %v5674
        %v5729 = vadd.f32 %v5728, %v5678
        %v5730 = vadd.f32 %v5729, %v5682
        %v5731 = vsel %vm5578, %v5686, 0.0
        %v5732 = vadd.f32 %v5730, %v5731
        %v5733 = vrot.slane %v5732, 4
        %v5734 = vadd.f32 %v5732, %v5733
        %v5735 = vrot.slane %v5734, 2
        %v5736 = vadd.f32 %v5734, %v5735
        %v5737 = vrot.slane %v5736, 1
        %v5738 = vadd.f32 %v5736, %v5737
        %v5739 = vmul.f32 %v5699, %v5626
        %v5740 = vmul.f32 %v5712, %v5626
        %v5741 = vmul.f32 %v5725, %v5626
        %v5742 = vmul.f32 %v5738, %v5626
        %v5743 = vadd.f32 %v5739, 1e-05
        %v5744 = vadd.f32 %v5740, 1e-05
        %v5745 = vadd.f32 %v5741, 1e-05
        %v5746 = vadd.f32 %v5742, 1e-05
        %v5747 = vrsqrt.pop %v5743
        %v5748 = vrsqrt.pop %v5744
        %v5749 = vrsqrt.pop %v5745
        %v5750 = vrsqrt.pop %v5746
        %v5751 = vmul.f32 %v5631, %v5747
        %v5752 = vmul.f32 %v5632, %v5748
        %v5753 = vmul.f32 %v5633, %v5749
        %v5754 = vmul.f32 %v5634, %v5750
        %v5755 = vmul.f32 %v5635, %v5747
        %v5756 = vmul.f32 %v5636, %v5748
        %v5757 = vmul.f32 %v5637, %v5749
        %v5758 = vmul.f32 %v5638, %v5750
        %v5759 = vmul.f32 %v5639, %v5747
        %v5760 = vmul.f32 %v5640, %v5748
        %v5761 = vmul.f32 %v5641, %v5749
        %v5762 = vmul.f32 %v5642, %v5750
        %v5763 = vmul.f32 %v5643, %v5747
        %v5764 = vmul.f32 %v5644, %v5748
        %v5765 = vmul.f32 %v5645, %v5749
        %v5766 = vmul.f32 %v5646, %v5750
        %v5767 = vmul.f32 %v5647, %v5747
        %v5768 = vmul.f32 %v5648, %v5748
        %v5769 = vmul.f32 %v5649, %v5749
        %v5770 = vmul.f32 %v5650, %v5750
        %v5771 = vmul.f32 %v5651, %v5747
        %v5772 = vmul.f32 %v5652, %v5748
        %v5773 = vmul.f32 %v5653, %v5749
        %v5774 = vmul.f32 %v5654, %v5750
        %v5775 = vmul.f32 %v5655, %v5747
        %v5776 = vmul.f32 %v5656, %v5748
        %v5777 = vmul.f32 %v5657, %v5749
        %v5778 = vmul.f32 %v5658, %v5750
        %v5779 = vld [vmem:[%s447] sm:$0xf]
        %v5781 = vlaneseq
        %v5782 = vshrl.u32 %v5781, 7
        %v5783 = vsub.s32 0, %v5782
        %v5784 = vrot.slane %v5779, %v5783
        %v5785 = vlaneseq
        %v5786 = vshrl.u32 %v5785, 7
        %v5787 = vsub.s32 1, %v5786
        %v5788 = vrot.slane %v5779, %v5787
        %v5789 = vlaneseq
        %v5790 = vshrl.u32 %v5789, 7
        %v5791 = vsub.s32 2, %v5790
        %v5792 = vrot.slane %v5779, %v5791
        %v5793 = vlaneseq
        %v5794 = vshrl.u32 %v5793, 7
        %v5795 = vsub.s32 3, %v5794
        %v5796 = vrot.slane %v5779, %v5795
        %v5801 = vmul.f32 %v5751, %v5784
        %v5802 = vmul.f32 %v5752, %v5788
        %v5803 = vmul.f32 %v5753, %v5792
        %v5804 = vmul.f32 %v5754, %v5796
        %v5805 = vmul.f32 %v5755, %v5784
        %v5806 = vmul.f32 %v5756, %v5788
        %v5807 = vmul.f32 %v5757, %v5792
        %v5808 = vmul.f32 %v5758, %v5796
        %v5809 = vmul.f32 %v5759, %v5784
        %v5810 = vmul.f32 %v5760, %v5788
        %v5811 = vmul.f32 %v5761, %v5792
        %v5812 = vmul.f32 %v5762, %v5796
        %v5813 = vmul.f32 %v5763, %v5784
        %v5814 = vmul.f32 %v5764, %v5788
        %v5815 = vmul.f32 %v5765, %v5792
        %v5816 = vmul.f32 %v5766, %v5796
        %v5817 = vmul.f32 %v5767, %v5784
        %v5818 = vmul.f32 %v5768, %v5788
        %v5819 = vmul.f32 %v5769, %v5792
        %v5820 = vmul.f32 %v5770, %v5796
        %v5821 = vmul.f32 %v5771, %v5784
        %v5822 = vmul.f32 %v5772, %v5788
        %v5823 = vmul.f32 %v5773, %v5792
        %v5824 = vmul.f32 %v5774, %v5796
        %v5825 = vmul.f32 %v5775, %v5784
        %v5826 = vmul.f32 %v5776, %v5788
        %v5827 = vmul.f32 %v5777, %v5792
        %v5828 = vmul.f32 %v5778, %v5796
        %v5829 = vld [vmem:[%s456] sm:$0xf]
        %v5831 = vlaneseq
        %v5832 = vshrl.u32 %v5831, 7
        %v5833 = vsub.s32 0, %v5832
        %v5834 = vrot.slane %v5829, %v5833
        %v5835 = vlaneseq
        %v5836 = vshrl.u32 %v5835, 7
        %v5837 = vsub.s32 1, %v5836
        %v5838 = vrot.slane %v5829, %v5837
        %v5839 = vlaneseq
        %v5840 = vshrl.u32 %v5839, 7
        %v5841 = vsub.s32 2, %v5840
        %v5842 = vrot.slane %v5829, %v5841
        %v5843 = vlaneseq
        %v5844 = vshrl.u32 %v5843, 7
        %v5845 = vsub.s32 3, %v5844
        %v5846 = vrot.slane %v5829, %v5845
        %v5851 = vadd.f32 %v5801, %v5834
        %v5852 = vadd.f32 %v5802, %v5838
        %v5853 = vadd.f32 %v5803, %v5842
        %v5854 = vadd.f32 %v5804, %v5846
        %v5855 = vadd.f32 %v5805, %v5834
        %v5856 = vadd.f32 %v5806, %v5838
        %v5857 = vadd.f32 %v5807, %v5842
        %v5858 = vadd.f32 %v5808, %v5846
        %v5859 = vadd.f32 %v5809, %v5834
        %v5860 = vadd.f32 %v5810, %v5838
        %v5861 = vadd.f32 %v5811, %v5842
        %v5862 = vadd.f32 %v5812, %v5846
        %v5863 = vadd.f32 %v5813, %v5834
        %v5864 = vadd.f32 %v5814, %v5838
        %v5865 = vadd.f32 %v5815, %v5842
        %v5866 = vadd.f32 %v5816, %v5846
        %v5867 = vadd.f32 %v5817, %v5834
        %v5868 = vadd.f32 %v5818, %v5838
        %v5869 = vadd.f32 %v5819, %v5842
        %v5870 = vadd.f32 %v5820, %v5846
        %v5871 = vadd.f32 %v5821, %v5834
        %v5872 = vadd.f32 %v5822, %v5838
        %v5873 = vadd.f32 %v5823, %v5842
        %v5874 = vadd.f32 %v5824, %v5846
        %v5875 = vadd.f32 %v5825, %v5834
        %v5876 = vadd.f32 %v5826, %v5838
        %v5877 = vadd.f32 %v5827, %v5842
        %v5878 = vadd.f32 %v5828, %v5846
        %v5879 = vld [vmem:[%s464] sm:$0xff]
        %v5880 = vld [vmem:[%s464 + $0x8] sm:$0xff]
        %v5881 = vld [vmem:[%s464 + $0x10] sm:$0xff]
        %v5882 = vld [vmem:[%s464 + $0x18] sm:$0xff]
        %v5883 = vld [vmem:[%s464 + $0x20] sm:$0xff]
        %v5884 = vld [vmem:[%s464 + $0x28] sm:$0xff]
        %v5885 = vld [vmem:[%s464 + $0x30] sm:$0xff]
        %v5886 = vld [vmem:[%s464 + $0x38] sm:$0xff]
        %v5887 = vld [vmem:[%s464 + $0x40] sm:$0xff]
        %v5888 = vld [vmem:[%s464 + $0x48] sm:$0xff]
        %v5889 = vld [vmem:[%s464 + $0x50] sm:$0xff]
        %v5890 = vld [vmem:[%s464 + $0x58] sm:$0xff]
        %v5891 = vld [vmem:[%s464 + $0x60] sm:$0xff]
        %v5892 = vld [vmem:[%s464 + $0x68] sm:$0xff]
        %v5893 = vld [vmem:[%s464 + $0x70] sm:$0xff]
        %v5894 = vld [vmem:[%s464 + $0x78] sm:$0xff]
        %v5895 = vld [vmem:[%s464 + $0x80] sm:$0xff]
        %v5896 = vld [vmem:[%s464 + $0x88] sm:$0xff]
        %v5897 = vld [vmem:[%s464 + $0x90] sm:$0xff]
        %v5898 = vld [vmem:[%s464 + $0x98] sm:$0xff]
        %v5899 = vld [vmem:[%s464 + $0xa0] sm:$0xff]
        %v5900 = vld [vmem:[%s464 + $0xa8] sm:$0xff]
        %v5901 = vld [vmem:[%s464 + $0xb0] sm:$0xff]
        %v5902 = vld [vmem:[%s464 + $0xb8] sm:$0xff]
        %v5903 = vld [vmem:[%s464 + $0xc0] sm:$0x1]
        %v5904 = vld [vmem:[%s464 + $0xc8] sm:$0x1]
        %v5905 = vld [vmem:[%s464 + $0xd0] sm:$0x1]
        %v5906 = vld [vmem:[%s464 + $0xd8] sm:$0x1]
        %v5907 = vadd.f32 %v5879, %v5851
        %v5908 = vadd.f32 %v5880, %v5852
        %v5909 = vadd.f32 %v5881, %v5853
        %v5910 = vadd.f32 %v5882, %v5854
        %v5911 = vadd.f32 %v5883, %v5855
        %v5912 = vadd.f32 %v5884, %v5856
        %v5913 = vadd.f32 %v5885, %v5857
        %v5914 = vadd.f32 %v5886, %v5858
        %v5915 = vadd.f32 %v5887, %v5859
        %v5916 = vadd.f32 %v5888, %v5860
        %v5917 = vadd.f32 %v5889, %v5861
        %v5918 = vadd.f32 %v5890, %v5862
        %v5919 = vadd.f32 %v5891, %v5863
        %v5920 = vadd.f32 %v5892, %v5864
        %v5921 = vadd.f32 %v5893, %v5865
        %v5922 = vadd.f32 %v5894, %v5866
        %v5923 = vadd.f32 %v5895, %v5867
        %v5924 = vadd.f32 %v5896, %v5868
        %v5925 = vadd.f32 %v5897, %v5869
        %v5926 = vadd.f32 %v5898, %v5870
        %v5927 = vadd.f32 %v5899, %v5871
        %v5928 = vadd.f32 %v5900, %v5872
        %v5929 = vadd.f32 %v5901, %v5873
        %v5930 = vadd.f32 %v5902, %v5874
        %v5931 = vadd.f32 %v5903, %v5875
        %v5932 = vadd.f32 %v5904, %v5876
        %v5933 = vadd.f32 %v5905, %v5877
        %v5934 = vadd.f32 %v5906, %v5878
        %5935 = vst [vmem:[%s508] sm:$0xff] %v5907
        %5936 = vst [vmem:[%s508 + $0x8] sm:$0xff] %v5908
        %5937 = vst [vmem:[%s508 + $0x10] sm:$0xff] %v5909
        %5938 = vst [vmem:[%s508 + $0x18] sm:$0xff] %v5910
        %5939 = vst [vmem:[%s508 + $0x20] sm:$0xff] %v5911
        %5940 = vst [vmem:[%s508 + $0x28] sm:$0xff] %v5912
        %5941 = vst [vmem:[%s508 + $0x30] sm:$0xff] %v5913
        %5942 = vst [vmem:[%s508 + $0x38] sm:$0xff] %v5914
        %5943 = vst [vmem:[%s508 + $0x40] sm:$0xff] %v5915
        %5944 = vst [vmem:[%s508 + $0x48] sm:$0xff] %v5916
        %5945 = vst [vmem:[%s508 + $0x50] sm:$0xff] %v5917
        %5946 = vst [vmem:[%s508 + $0x58] sm:$0xff] %v5918
        %5947 = vst [vmem:[%s508 + $0x60] sm:$0xff] %v5919
        %5948 = vst [vmem:[%s508 + $0x68] sm:$0xff] %v5920
        %5949 = vst [vmem:[%s508 + $0x70] sm:$0xff] %v5921
        %5950 = vst [vmem:[%s508 + $0x78] sm:$0xff] %v5922
        %5951 = vst [vmem:[%s508 + $0x80] sm:$0xff] %v5923
        %5952 = vst [vmem:[%s508 + $0x88] sm:$0xff] %v5924
        %5953 = vst [vmem:[%s508 + $0x90] sm:$0xff] %v5925
        %5954 = vst [vmem:[%s508 + $0x98] sm:$0xff] %v5926
        %5955 = vst [vmem:[%s508 + $0xa0] sm:$0xff] %v5927
        %5956 = vst [vmem:[%s508 + $0xa8] sm:$0xff] %v5928
        %5957 = vst [vmem:[%s508 + $0xb0] sm:$0xff] %v5929
        %5958 = vst [vmem:[%s508 + $0xb8] sm:$0xff] %v5930
        %5959 = vst [vmem:[%s508 + $0xc0] sm:$0x1] %v5931
        %5960 = vst [vmem:[%s508 + $0xc8] sm:$0x1] %v5932
        %5961 = vst [vmem:[%s508 + $0xd0] sm:$0x1] %v5933
        %5962 = vst [vmem:[%s508 + $0xd8] sm:$0x1] %v5934
        %s5963 = sand.u32 %s217, 1
        %s5964 = sand.u32 %s217, 1
        %s5965 = smul.addr %s5964, 224
        %s5966 = scalar_lea.vmem [#allocation11], %s5965
        // Predicated region
        $region100: #{se_conv_bn_add.1} parent=70 // pred_check
          %p5967 = pneg %p227
        $region101: #{se_conv_bn_add.1} parent=70 // pred_check_branch
          %5969 = sbr.rel (%p5967) target = $region103
        $region102: #{se_conv_bn_add.1} parent=70 // pred_region
          %s5970 = smul.u32 4, %s21
          %s5971 = smul.addr %s5970, 8
          %s5972 = scalar_lea.vmem %s8, %s5971
          // Predicated region
          $region104: #{se_conv_bn_add.1} parent=102 // pred_check
            _
          $region105: #{se_conv_bn_add.1} parent=102 // pred_check_branch
            %5974 = sbr.rel (0) target = $region107
          $region106: #{se_conv_bn_add.1} parent=102 // pred_region
            // Predicated region
            $region108: #{se_conv_bn_add.1} parent=106 // pred_check
              _
            $region109: #{se_conv_bn_add.1} parent=106 // pred_check_branch
              %5976 = sbr.rel (0) target = $region111
            $region110: #{se_conv_bn_add.1} parent=106 // pred_region
              loop: start=0, step=1, limit=1
              $region112: #{se_conv_bn_add.1} parent=110 // loop_pre_header
                _
              $region113: #{se_conv_bn_add.1} parent=110 // loop_header
                %s5978 = sphi 0, %s5982
                %p5979 = scmp.ge.s32.totalorder %s5978, 1
                %s5983 = sphi %s5966, %s5966
                %s5984 = sphi %s5972, %s5972
              $region114: #{se_conv_bn_add.1} parent=110 // loop_header_branch
                %5981 = sbr.rel (%p5979) target = $region118
              $region115: #{se_conv_bn_add.1} parent=110 // loop_body
                %v5985 = vld [vmem:[%s5983] sm:$0xff]
                %5986 = vst [vmem:[%s5984] sm:$0xff] %v5985
                %v5987 = vld [vmem:[%s5983 + $0x8] sm:$0xff]
                %5988 = vst [vmem:[%s5984 + $0x8] sm:$0xff] %v5987
                %v5989 = vld [vmem:[%s5983 + $0x10] sm:$0xff]
                %5990 = vst [vmem:[%s5984 + $0x10] sm:$0xff] %v5989
                %v5991 = vld [vmem:[%s5983 + $0x18] sm:$0xff]
                %5992 = vst [vmem:[%s5984 + $0x18] sm:$0xff] %v5991
                %v5993 = vld [vmem:[%s5983 + $0x20] sm:$0xff]
                %5994 = vst [vmem:[%s5984 + $0x60] sm:$0xff] %v5993
                %v5995 = vld [vmem:[%s5983 + $0x28] sm:$0xff]
                %5996 = vst [vmem:[%s5984 + $0x68] sm:$0xff] %v5995
                %v5997 = vld [vmem:[%s5983 + $0x30] sm:$0xff]
                %5998 = vst [vmem:[%s5984 + $0x70] sm:$0xff] %v5997
                %v5999 = vld [vmem:[%s5983 + $0x38] sm:$0xff]
                %6000 = vst [vmem:[%s5984 + $0x78] sm:$0xff] %v5999
                %v6001 = vld [vmem:[%s5983 + $0x40] sm:$0xff]
                %6002 = vst [vmem:[%s5984 + $0xc0] sm:$0xff] %v6001
                %v6003 = vld [vmem:[%s5983 + $0x48] sm:$0xff]
                %6004 = vst [vmem:[%s5984 + $0xc8] sm:$0xff] %v6003
                %v6005 = vld [vmem:[%s5983 + $0x50] sm:$0xff]
                %6006 = vst [vmem:[%s5984 + $0xd0] sm:$0xff] %v6005
                %v6007 = vld [vmem:[%s5983 + $0x58] sm:$0xff]
                %6008 = vst [vmem:[%s5984 + $0xd8] sm:$0xff] %v6007
                %v6009 = vld [vmem:[%s5983 + $0x60] sm:$0xff]
                %6010 = vst [vmem:[%s5984 + $0x120] sm:$0xff] %v6009
                %v6011 = vld [vmem:[%s5983 + $0x68] sm:$0xff]
                %6012 = vst [vmem:[%s5984 + $0x128] sm:$0xff] %v6011
                %v6013 = vld [vmem:[%s5983 + $0x70] sm:$0xff]
                %6014 = vst [vmem:[%s5984 + $0x130] sm:$0xff] %v6013
                %v6015 = vld [vmem:[%s5983 + $0x78] sm:$0xff]
                %6016 = vst [vmem:[%s5984 + $0x138] sm:$0xff] %v6015
                %v6017 = vld [vmem:[%s5983 + $0x80] sm:$0xff]
                %6018 = vst [vmem:[%s5984 + $0x180] sm:$0xff] %v6017
                %v6019 = vld [vmem:[%s5983 + $0x88] sm:$0xff]
                %6020 = vst [vmem:[%s5984 + $0x188] sm:$0xff] %v6019
                %v6021 = vld [vmem:[%s5983 + $0x90] sm:$0xff]
                %6022 = vst [vmem:[%s5984 + $0x190] sm:$0xff] %v6021
                %v6023 = vld [vmem:[%s5983 + $0x98] sm:$0xff]
                %6024 = vst [vmem:[%s5984 + $0x198] sm:$0xff] %v6023
                %v6025 = vld [vmem:[%s5983 + $0xa0] sm:$0xff]
                %6026 = vst [vmem:[%s5984 + $0x1e0] sm:$0xff] %v6025
                %v6027 = vld [vmem:[%s5983 + $0xa8] sm:$0xff]
                %6028 = vst [vmem:[%s5984 + $0x1e8] sm:$0xff] %v6027
                %v6029 = vld [vmem:[%s5983 + $0xb0] sm:$0xff]
                %6030 = vst [vmem:[%s5984 + $0x1f0] sm:$0xff] %v6029
                %v6031 = vld [vmem:[%s5983 + $0xb8] sm:$0xff]
                %6032 = vst [vmem:[%s5984 + $0x1f8] sm:$0xff] %v6031
                %v6033 = vld [vmem:[%s5983 + $0xc0] sm:$0xff]
                %6034 = vst [vmem:[%s5984 + $0x240] sm:$0xff] %v6033
                %v6035 = vld [vmem:[%s5983 + $0xc8] sm:$0xff]
                %6036 = vst [vmem:[%s5984 + $0x248] sm:$0xff] %v6035
                %v6037 = vld [vmem:[%s5983 + $0xd0] sm:$0xff]
                %6038 = vst [vmem:[%s5984 + $0x250] sm:$0xff] %v6037
                %v6039 = vld [vmem:[%s5983 + $0xd8] sm:$0xff]
                %6040 = vst [vmem:[%s5984 + $0x258] sm:$0xff] %v6039
              $region116: #{se_conv_bn_add.1} parent=110 // loop_footer
                %s5982 = sadd.s32 1, %s5978
              $region117: #{se_conv_bn_add.1} parent=110 // loop_footer_branch
                %5977 = sbr.rel target = $region113
              $region118: #{se_conv_bn_add.1} parent=110 // loop_exit
                _
            $region111: #{se_conv_bn_add.1} parent=106 // pred_fallthru
              _
            // Predicated region
            $region119: #{se_conv_bn_add.1} parent=106 // pred_check
              _
            $region120: #{se_conv_bn_add.1} parent=106 // pred_check_branch
              %6042 = sbr.rel target = $region122
            $region121: #{se_conv_bn_add.1} parent=106 // pred_region
              _
            $region122: #{se_conv_bn_add.1} parent=106 // pred_fallthru
              _
          $region107: #{se_conv_bn_add.1} parent=102 // pred_fallthru
            _
          %6043 = vnop
        $region103: #{se_conv_bn_add.1} parent=70 // pred_fallthru
          _
      $region71: #{se_conv_bn_add.1} parent=5 // pred_fallthru
        _
      %p6044 = scmp.le.s32.totalorder 2, %s16
      // Predicated region
      $region123: #{se_conv_bn_add.1} parent=5 // pred_check
        %p6045 = pneg %p6044
      $region124: #{se_conv_bn_add.1} parent=5 // pred_check_branch
        %6047 = sbr.rel (%p6045) target = $region126
      $region125: #{se_conv_bn_add.1} parent=5 // pred_region
        %s6048 = ssub.s32 %s16, 2
        // Predicated region
        $region127: #{se_conv_bn_add.1} parent=125 // pred_check
          %p6049 = pneg %p233
        $region128: #{se_conv_bn_add.1} parent=125 // pred_check_branch
          %6051 = sbr.rel (%p6049) target = $region130
        $region129: #{se_conv_bn_add.1} parent=125 // pred_region
          %s6052 = sand.u32 %s218, 1
          %s6053 = sand.u32 %s218, 1
          %s6054 = smul.addr %s6053, 224
          %s6055 = scalar_lea.vmem [#allocation11], %s6054
        $region130: #{se_conv_bn_add.1} parent=125 // pred_fallthru
          _
      $region126: #{se_conv_bn_add.1} parent=5 // pred_fallthru
        _
    $region6: #{se_conv_bn_add.1} parent=1 // loop_footer
      %s20 = sadd.s32 1, %s16
    $region7: #{se_conv_bn_add.1} parent=1 // loop_footer_branch
      %15 = sbr.rel target = $region3
    $region8: #{se_conv_bn_add.1} parent=1 // loop_exit
      _
    %6056 = vsyncpa [#allocation4], 1
    %s6057 = scalar_lea.sflag [#allocation4], 1
    %6058 = vsyncpa %s6057, 1
    %6059 = vsyncpa [#allocation6], 1

</llo_original>
